<compile_context>
chip_gen: v5e
topology: v5e:2x2
jax: 0.10.0
libtpu: 0.0.40
codegen_flags: <defaults>
</compile_context>

<pallas_src>
import jax
import jax.numpy as jnp
from jax.experimental import pallas as pl
from jax.experimental.pallas import tpu as pltpu


def _round_up(x, m):
    return (x + m - 1) // m * m


def events_compressor_forward(vet, w1, b1, w2, b2):
    """vet: (N, D, H, W) f32.  Returns (N, 3, D2, H, W) f32."""
    N, D, H, W = vet.shape
    HW = H * W
    D1 = (D + 2 * 2 - 5) // 5 + 1          # conv1 output depth
    D2 = (D1 - 2) // 2 + 1                 # conv2 output depth
    Dpa = _round_up(D + 4, 8)              # depth-padded input rows (8-aligned)
    M1 = _round_up(3 * D1, 8)              # conv1 activation rows (od1*3 + c)
    M2 = _round_up(3 * D2, 8)              # conv2 output rows (c*D2 + od2)
    f32 = jnp.float32

    # ---- depth-padded, lane-flattened input: rows 2..2+D hold the data -------
    xf = jnp.zeros((N, Dpa, HW), f32).at[:, 2:2 + D, :].set(vet.reshape(N, D, HW))

    # ---- conv1 block weights: w1blk[t, od1*3+c, od1*5+kd] = w1[c,0,kd,kh,kw] --
    # (conv1 depth stride == kernel == 5, so output-depth windows are disjoint
    #  5-row blocks of the padded depth axis)
    od1 = jnp.arange(D1)[:, None, None]
    kd1 = jnp.arange(5)[None, :, None]
    dpi = jnp.arange(Dpa)[None, None, :]
    S1 = (od1 * 5 + kd1 == dpi).astype(f32)                     # (D1, 5, Dpa)
    R1 = jnp.einsum('cKhw,oKd->hwocd', w1[:, 0], S1)            # (5,5,D1,3,Dpa)
    w1blk = jnp.zeros((25, M1, Dpa), f32).at[:, :3 * D1, :].set(
        R1.reshape(25, 3 * D1, Dpa))

    # ---- conv2 block weights: w2blk[t, c*D2+od2, d1*3+ci] = w2[c,ci,kd2,kh,kw]
    #      with d1 = 2*od2 + kd2 (no depth padding, stride 2, kernel 2)
    od2 = jnp.arange(D2)[:, None, None]
    kd2 = jnp.arange(2)[None, :, None]
    d1i = jnp.arange(D1)[None, None, :]
    S2 = (od2 * 2 + kd2 == d1i).astype(f32)                     # (D2, 2, D1)
    R2 = jnp.einsum('oiKhw,zKd->hwozdi', w2, S2)                # (5,5,3,D2,D1,3)
    w2blk = jnp.zeros((25, M2, M1), f32).at[:, :3 * D2, :3 * D1].set(
        R2.reshape(25, 3 * D2, 3 * D1))

    # ---- per-(kh,kw) spatial halo masks over the flattened H*W lane axis -----
    hh = jnp.arange(HW, dtype=jnp.int32) // W
    ww = jnp.arange(HW, dtype=jnp.int32) % W
    mask_rows = []
    for kh in range(5):
        for kw in range(5):
            mask_rows.append((hh + kh >= 2) & (hh + kh <= H + 1) &
                             (ww + kw >= 2) & (ww + kw <= W + 1))
    masks = jnp.stack(mask_rows).astype(f32)                    # (25, HW)

    # ---- bias rows (accumulator initializers), pre-broadcast to lane width ---
    b1rows = jnp.zeros((M1, HW), f32).at[:3 * D1, :].set(
        jnp.broadcast_to(jnp.tile(b1, D1)[:, None], (3 * D1, HW)))
    b2rows = jnp.zeros((M2, HW), f32).at[:3 * D2, :].set(
        jnp.broadcast_to(jnp.repeat(b2, D2)[:, None], (3 * D2, HW)))

    def kernel(x_ref, w1b_ref, w2b_ref, m_ref, b1r_ref, b2r_ref, o_ref):
        xv = x_ref[0]                                            # (Dpa, HW)

        # conv1 + bias: accumulate over the 25 spatial tap offsets.
        acc1 = b1r_ref[...]                                      # (M1, HW)
        for kh in range(5):
            for kw in range(5):
                t = kh * 5 + kw
                if kh == 2 and kw == 2:
                    slab = xv                                    # zero shift, all-ones mask
                else:
                    r = (-((kh - 2) * W + (kw - 2))) % HW
                    slab = pltpu.roll(xv, r, axis=1) * m_ref[t:t + 1, :]
                acc1 = acc1 + jnp.dot(w1b_ref[t], slab,
                                      preferred_element_type=jnp.float32)

        # LeakyReLU (negative_slope = 0.01); padded rows stay exactly zero.
        y1 = jnp.where(acc1 >= 0.0, acc1, 0.01 * acc1)           # (M1, HW)

        # conv2 + bias.
        acc2 = b2r_ref[...]                                      # (M2, HW)
        for kh in range(5):
            for kw in range(5):
                t = kh * 5 + kw
                if kh == 2 and kw == 2:
                    slab = y1
                else:
                    r = (-((kh - 2) * W + (kw - 2))) % HW
                    slab = pltpu.roll(y1, r, axis=1) * m_ref[t:t + 1, :]
                acc2 = acc2 + jnp.dot(w2b_ref[t], slab,
                                      preferred_element_type=jnp.float32)

        # Single contiguous, lane-dense output store per batch element.
        o_ref[0] = acc2[:3 * D2, :]

    out_flat = pl.pallas_call(
        kernel,
        out_shape=jax.ShapeDtypeStruct((N, 3 * D2, HW), f32),
        grid=(N,),
        in_specs=[
            pl.BlockSpec((1, Dpa, HW), lambda n: (n, 0, 0)),
            pl.BlockSpec((25, M1, Dpa), lambda n: (0, 0, 0)),
            pl.BlockSpec((25, M2, M1), lambda n: (0, 0, 0)),
            pl.BlockSpec((25, HW), lambda n: (0, 0)),
            pl.BlockSpec((M1, HW), lambda n: (0, 0)),
            pl.BlockSpec((M2, HW), lambda n: (0, 0)),
        ],
        out_specs=pl.BlockSpec((1, 3 * D2, HW), lambda n: (n, 0, 0)),
        compiler_params=pltpu.CompilerParams(
            dimension_semantics=("parallel",)),
    )(xf, w1blk, w2blk, masks, b1rows, b2rows)

    return out_flat.reshape(N, 3, D2, H, W)


# ------------------------------------------------------------------ reference
def events_compressor_ref(vet, w1, b1, w2, b2):
    lhs = vet[:, None]                                  # (N, 1, D, H, W)
    y = jax.lax.conv_general_dilated(
        lhs, w1, window_strides=(5, 1, 1),
        padding=[(2, 2), (2, 2), (2, 2)],
        dimension_numbers=("NCDHW", "OIDHW", "NCDHW"),
        precision=jax.lax.Precision.HIGHEST)
    y = y + b1[None, :, None, None, None]
    y = jnp.where(y >= 0, y, 0.01 * y)
    z = jax.lax.conv_general_dilated(
        y, w2, window_strides=(2, 1, 1),
        padding=[(0, 0), (2, 2), (2, 2)],
        dimension_numbers=("NCDHW", "OIDHW", "NCDHW"),
        precision=jax.lax.Precision.HIGHEST)
    z = z + b2[None, :, None, None, None]
    return z


# ------------------------------------------------------------------ main
if __name__ == "__main__":
    key = jax.random.PRNGKey(0)
    k_x, k_w1, k_b1, k_w2, k_b2 = jax.random.split(key, 5)

    # Small shapes consistent with the module: VET = (N, D, H, W)
    N, D, H, W = 2, 20, 16, 16
    vet = jax.random.normal(k_x, (N, D, H, W), dtype=jnp.float32)

    # Deterministic synthetic parameters (same shapes as the nn.Conv3d layers).
    w1 = 0.05 * jax.random.normal(k_w1, (3, 1, 5, 5, 5), dtype=jnp.float32)
    b1 = 0.05 * jax.random.normal(k_b1, (3,), dtype=jnp.float32)
    w2 = 0.05 * jax.random.normal(k_w2, (3, 3, 2, 5, 5), dtype=jnp.float32)
    b2 = 0.05 * jax.random.normal(k_b2, (3,), dtype=jnp.float32)

    out = jax.block_until_ready(events_compressor_forward(vet, w1, b1, w2, b2))
    ref = jax.block_until_ready(events_compressor_ref(vet, w1, b1, w2, b2))

    assert out.shape == ref.shape, (out.shape, ref.shape)
    # Loose-ish tolerance to cover MXU vs XLA-conv accumulation differences;
    # any structural bug (tap order, roll direction, mask, window) is orders larger.
    assert jnp.allclose(out, ref, atol=1e-2, rtol=1e-2), (
        "mismatch vs reference, max abs err = "
        + str(float(jnp.max(jnp.abs(out - ref)))))

    print("KERNEL_OK")
</pallas_src>

<mosaic_0001>
module attributes {stable_mosaic.version = 11 : i64} {
  func.func @kernel(%arg0: i32, %arg1: memref<1x24x256xf32, #tpu.memory_space<vmem>>, %arg2: memref<25x16x24xf32, #tpu.memory_space<vmem>>, %arg3: memref<25x8x16xf32, #tpu.memory_space<vmem>>, %arg4: memref<25x256xf32, #tpu.memory_space<vmem>>, %arg5: memref<16x256xf32, #tpu.memory_space<vmem>>, %arg6: memref<8x256xf32, #tpu.memory_space<vmem>>, %arg7: memref<1x6x256xf32, #tpu.memory_space<vmem>>) attributes {dimension_semantics = [#tpu.dimension_semantics<parallel>], iteration_bounds = array<i64: 2>, scalar_prefetch = 0 : i64, scratch_operands = 0 : i64, tpu.core_type = #tpu.core_type<tc>, window_params = [{transform_indices = @transform_0, window_bounds = array<i64: 1, 24, 256>}, {pipeline_mode = #tpu.pipeline_mode<synchronous>, transform_indices = @transform_1, window_bounds = array<i64: 25, 16, 24>}, {pipeline_mode = #tpu.pipeline_mode<synchronous>, transform_indices = @transform_2, window_bounds = array<i64: 25, 8, 16>}, {pipeline_mode = #tpu.pipeline_mode<synchronous>, transform_indices = @transform_3, window_bounds = array<i64: 25, 256>}, {pipeline_mode = #tpu.pipeline_mode<synchronous>, transform_indices = @transform_4, window_bounds = array<i64: 16, 256>}, {pipeline_mode = #tpu.pipeline_mode<synchronous>, transform_indices = @transform_5, window_bounds = array<i64: 8, 256>}, {transform_indices = @transform_6, window_bounds = array<i64: 1, 6, 256>}]} {
    %c0 = arith.constant 0 : index
    %c0_0 = arith.constant 0 : index
    %c0_1 = arith.constant 0 : index
    %0 = vector.load %arg1[%c0, %c0_0, %c0_1] : memref<1x24x256xf32, #tpu.memory_space<vmem>>, vector<1x24x256xf32>
    %1 = vector.shape_cast %0 : vector<1x24x256xf32> to vector<24x256xf32>
    %c0_2 = arith.constant 0 : index
    %c0_3 = arith.constant 0 : index
    %2 = vector.load %arg5[%c0_2, %c0_3] : memref<16x256xf32, #tpu.memory_space<vmem>>, vector<16x256xf32>
    %c34_i32 = arith.constant 34 : i32
    %3 = tpu.dynamic_rotate %1 by %c34_i32 dim 1 : vector<24x256xf32>, i32 -> vector<24x256xf32>
    %c0_4 = arith.constant 0 : index
    %c0_5 = arith.constant 0 : index
    %4 = vector.load %arg4[%c0_4, %c0_5] : memref<25x256xf32, #tpu.memory_space<vmem>>, vector<1x256xf32>
    %5 = vector.broadcast %4 : vector<1x256xf32> to vector<24x256xf32>
    %6 = arith.mulf %3, %5 : vector<24x256xf32>
    %c0_6 = arith.constant 0 : index
    %c0_7 = arith.constant 0 : index
    %c0_8 = arith.constant 0 : index
    %7 = vector.load %arg2[%c0_6, %c0_7, %c0_8] : memref<25x16x24xf32, #tpu.memory_space<vmem>>, vector<1x16x24xf32>
    %8 = vector.shape_cast %7 : vector<1x16x24xf32> to vector<16x24xf32>
    %cst = arith.constant dense<0.000000e+00> : vector<16x256xf32>
    %9 = tpu.matmul %8, %6, %cst {dimension_numbers = #tpu.dot_dimension_numbers<[1], [0], [0], [1], [0, 0, 1, 1], [], []>} : vector<16x24xf32>, vector<24x256xf32>, vector<16x256xf32> -> vector<16x256xf32>
    %10 = arith.addf %2, %9 : vector<16x256xf32>
    %c33_i32 = arith.constant 33 : i32
    %11 = tpu.dynamic_rotate %1 by %c33_i32 dim 1 : vector<24x256xf32>, i32 -> vector<24x256xf32>
    %c1 = arith.constant 1 : index
    %c0_9 = arith.constant 0 : index
    %12 = vector.load %arg4[%c1, %c0_9] : memref<25x256xf32, #tpu.memory_space<vmem>>, vector<1x256xf32>
    %13 = vector.broadcast %12 : vector<1x256xf32> to vector<24x256xf32>
    %14 = arith.mulf %11, %13 : vector<24x256xf32>
    %c1_10 = arith.constant 1 : index
    %c0_11 = arith.constant 0 : index
    %c0_12 = arith.constant 0 : index
    %15 = vector.load %arg2[%c1_10, %c0_11, %c0_12] : memref<25x16x24xf32, #tpu.memory_space<vmem>>, vector<1x16x24xf32>
    %16 = vector.shape_cast %15 : vector<1x16x24xf32> to vector<16x24xf32>
    %cst_13 = arith.constant dense<0.000000e+00> : vector<16x256xf32>
    %17 = tpu.matmul %16, %14, %cst_13 {dimension_numbers = #tpu.dot_dimension_numbers<[1], [0], [0], [1], [0, 0, 1, 1], [], []>} : vector<16x24xf32>, vector<24x256xf32>, vector<16x256xf32> -> vector<16x256xf32>
    %18 = arith.addf %10, %17 : vector<16x256xf32>
    %c32_i32 = arith.constant 32 : i32
    %19 = tpu.dynamic_rotate %1 by %c32_i32 dim 1 : vector<24x256xf32>, i32 -> vector<24x256xf32>
    %c2 = arith.constant 2 : index
    %c0_14 = arith.constant 0 : index
    %20 = vector.load %arg4[%c2, %c0_14] : memref<25x256xf32, #tpu.memory_space<vmem>>, vector<1x256xf32>
    %21 = vector.broadcast %20 : vector<1x256xf32> to vector<24x256xf32>
    %22 = arith.mulf %19, %21 : vector<24x256xf32>
    %c2_15 = arith.constant 2 : index
    %c0_16 = arith.constant 0 : index
    %c0_17 = arith.constant 0 : index
    %23 = vector.load %arg2[%c2_15, %c0_16, %c0_17] : memref<25x16x24xf32, #tpu.memory_space<vmem>>, vector<1x16x24xf32>
    %24 = vector.shape_cast %23 : vector<1x16x24xf32> to vector<16x24xf32>
    %cst_18 = arith.constant dense<0.000000e+00> : vector<16x256xf32>
    %25 = tpu.matmul %24, %22, %cst_18 {dimension_numbers = #tpu.dot_dimension_numbers<[1], [0], [0], [1], [0, 0, 1, 1], [], []>} : vector<16x24xf32>, vector<24x256xf32>, vector<16x256xf32> -> vector<16x256xf32>
    %26 = arith.addf %18, %25 : vector<16x256xf32>
    %c31_i32 = arith.constant 31 : i32
    %27 = tpu.dynamic_rotate %1 by %c31_i32 dim 1 : vector<24x256xf32>, i32 -> vector<24x256xf32>
    %c3 = arith.constant 3 : index
    %c0_19 = arith.constant 0 : index
    %28 = vector.load %arg4[%c3, %c0_19] : memref<25x256xf32, #tpu.memory_space<vmem>>, vector<1x256xf32>
    %29 = vector.broadcast %28 : vector<1x256xf32> to vector<24x256xf32>
    %30 = arith.mulf %27, %29 : vector<24x256xf32>
    %c3_20 = arith.constant 3 : index
    %c0_21 = arith.constant 0 : index
    %c0_22 = arith.constant 0 : index
    %31 = vector.load %arg2[%c3_20, %c0_21, %c0_22] : memref<25x16x24xf32, #tpu.memory_space<vmem>>, vector<1x16x24xf32>
    %32 = vector.shape_cast %31 : vector<1x16x24xf32> to vector<16x24xf32>
    %cst_23 = arith.constant dense<0.000000e+00> : vector<16x256xf32>
    %33 = tpu.matmul %32, %30, %cst_23 {dimension_numbers = #tpu.dot_dimension_numbers<[1], [0], [0], [1], [0, 0, 1, 1], [], []>} : vector<16x24xf32>, vector<24x256xf32>, vector<16x256xf32> -> vector<16x256xf32>
    %34 = arith.addf %26, %33 : vector<16x256xf32>
    %c30_i32 = arith.constant 30 : i32
    %35 = tpu.dynamic_rotate %1 by %c30_i32 dim 1 : vector<24x256xf32>, i32 -> vector<24x256xf32>
    %c4 = arith.constant 4 : index
    %c0_24 = arith.constant 0 : index
    %36 = vector.load %arg4[%c4, %c0_24] : memref<25x256xf32, #tpu.memory_space<vmem>>, vector<1x256xf32>
    %37 = vector.broadcast %36 : vector<1x256xf32> to vector<24x256xf32>
    %38 = arith.mulf %35, %37 : vector<24x256xf32>
    %c4_25 = arith.constant 4 : index
    %c0_26 = arith.constant 0 : index
    %c0_27 = arith.constant 0 : index
    %39 = vector.load %arg2[%c4_25, %c0_26, %c0_27] : memref<25x16x24xf32, #tpu.memory_space<vmem>>, vector<1x16x24xf32>
    %40 = vector.shape_cast %39 : vector<1x16x24xf32> to vector<16x24xf32>
    %cst_28 = arith.constant dense<0.000000e+00> : vector<16x256xf32>
    %41 = tpu.matmul %40, %38, %cst_28 {dimension_numbers = #tpu.dot_dimension_numbers<[1], [0], [0], [1], [0, 0, 1, 1], [], []>} : vector<16x24xf32>, vector<24x256xf32>, vector<16x256xf32> -> vector<16x256xf32>
    %42 = arith.addf %34, %41 : vector<16x256xf32>
    %c18_i32 = arith.constant 18 : i32
    %43 = tpu.dynamic_rotate %1 by %c18_i32 dim 1 : vector<24x256xf32>, i32 -> vector<24x256xf32>
    %c5 = arith.constant 5 : index
    %c0_29 = arith.constant 0 : index
    %44 = vector.load %arg4[%c5, %c0_29] : memref<25x256xf32, #tpu.memory_space<vmem>>, vector<1x256xf32>
    %45 = vector.broadcast %44 : vector<1x256xf32> to vector<24x256xf32>
    %46 = arith.mulf %43, %45 : vector<24x256xf32>
    %c5_30 = arith.constant 5 : index
    %c0_31 = arith.constant 0 : index
    %c0_32 = arith.constant 0 : index
    %47 = vector.load %arg2[%c5_30, %c0_31, %c0_32] : memref<25x16x24xf32, #tpu.memory_space<vmem>>, vector<1x16x24xf32>
    %48 = vector.shape_cast %47 : vector<1x16x24xf32> to vector<16x24xf32>
    %cst_33 = arith.constant dense<0.000000e+00> : vector<16x256xf32>
    %49 = tpu.matmul %48, %46, %cst_33 {dimension_numbers = #tpu.dot_dimension_numbers<[1], [0], [0], [1], [0, 0, 1, 1], [], []>} : vector<16x24xf32>, vector<24x256xf32>, vector<16x256xf32> -> vector<16x256xf32>
    %50 = arith.addf %42, %49 : vector<16x256xf32>
    %c17_i32 = arith.constant 17 : i32
    %51 = tpu.dynamic_rotate %1 by %c17_i32 dim 1 : vector<24x256xf32>, i32 -> vector<24x256xf32>
    %c6 = arith.constant 6 : index
    %c0_34 = arith.constant 0 : index
    %52 = vector.load %arg4[%c6, %c0_34] : memref<25x256xf32, #tpu.memory_space<vmem>>, vector<1x256xf32>
    %53 = vector.broadcast %52 : vector<1x256xf32> to vector<24x256xf32>
    %54 = arith.mulf %51, %53 : vector<24x256xf32>
    %c6_35 = arith.constant 6 : index
    %c0_36 = arith.constant 0 : index
    %c0_37 = arith.constant 0 : index
    %55 = vector.load %arg2[%c6_35, %c0_36, %c0_37] : memref<25x16x24xf32, #tpu.memory_space<vmem>>, vector<1x16x24xf32>
    %56 = vector.shape_cast %55 : vector<1x16x24xf32> to vector<16x24xf32>
    %cst_38 = arith.constant dense<0.000000e+00> : vector<16x256xf32>
    %57 = tpu.matmul %56, %54, %cst_38 {dimension_numbers = #tpu.dot_dimension_numbers<[1], [0], [0], [1], [0, 0, 1, 1], [], []>} : vector<16x24xf32>, vector<24x256xf32>, vector<16x256xf32> -> vector<16x256xf32>
    %58 = arith.addf %50, %57 : vector<16x256xf32>
    %c16_i32 = arith.constant 16 : i32
    %59 = tpu.dynamic_rotate %1 by %c16_i32 dim 1 : vector<24x256xf32>, i32 -> vector<24x256xf32>
    %c7 = arith.constant 7 : index
    %c0_39 = arith.constant 0 : index
    %60 = vector.load %arg4[%c7, %c0_39] : memref<25x256xf32, #tpu.memory_space<vmem>>, vector<1x256xf32>
    %61 = vector.broadcast %60 : vector<1x256xf32> to vector<24x256xf32>
    %62 = arith.mulf %59, %61 : vector<24x256xf32>
    %c7_40 = arith.constant 7 : index
    %c0_41 = arith.constant 0 : index
    %c0_42 = arith.constant 0 : index
    %63 = vector.load %arg2[%c7_40, %c0_41, %c0_42] : memref<25x16x24xf32, #tpu.memory_space<vmem>>, vector<1x16x24xf32>
    %64 = vector.shape_cast %63 : vector<1x16x24xf32> to vector<16x24xf32>
    %cst_43 = arith.constant dense<0.000000e+00> : vector<16x256xf32>
    %65 = tpu.matmul %64, %62, %cst_43 {dimension_numbers = #tpu.dot_dimension_numbers<[1], [0], [0], [1], [0, 0, 1, 1], [], []>} : vector<16x24xf32>, vector<24x256xf32>, vector<16x256xf32> -> vector<16x256xf32>
    %66 = arith.addf %58, %65 : vector<16x256xf32>
    %c15_i32 = arith.constant 15 : i32
    %67 = tpu.dynamic_rotate %1 by %c15_i32 dim 1 : vector<24x256xf32>, i32 -> vector<24x256xf32>
    %c8 = arith.constant 8 : index
    %c0_44 = arith.constant 0 : index
    %68 = vector.load %arg4[%c8, %c0_44] : memref<25x256xf32, #tpu.memory_space<vmem>>, vector<1x256xf32>
    %69 = vector.broadcast %68 : vector<1x256xf32> to vector<24x256xf32>
    %70 = arith.mulf %67, %69 : vector<24x256xf32>
    %c8_45 = arith.constant 8 : index
    %c0_46 = arith.constant 0 : index
    %c0_47 = arith.constant 0 : index
    %71 = vector.load %arg2[%c8_45, %c0_46, %c0_47] : memref<25x16x24xf32, #tpu.memory_space<vmem>>, vector<1x16x24xf32>
    %72 = vector.shape_cast %71 : vector<1x16x24xf32> to vector<16x24xf32>
    %cst_48 = arith.constant dense<0.000000e+00> : vector<16x256xf32>
    %73 = tpu.matmul %72, %70, %cst_48 {dimension_numbers = #tpu.dot_dimension_numbers<[1], [0], [0], [1], [0, 0, 1, 1], [], []>} : vector<16x24xf32>, vector<24x256xf32>, vector<16x256xf32> -> vector<16x256xf32>
    %74 = arith.addf %66, %73 : vector<16x256xf32>
    %c14_i32 = arith.constant 14 : i32
    %75 = tpu.dynamic_rotate %1 by %c14_i32 dim 1 : vector<24x256xf32>, i32 -> vector<24x256xf32>
    %c9 = arith.constant 9 : index
    %c0_49 = arith.constant 0 : index
    %76 = vector.load %arg4[%c9, %c0_49] : memref<25x256xf32, #tpu.memory_space<vmem>>, vector<1x256xf32>
    %77 = vector.broadcast %76 : vector<1x256xf32> to vector<24x256xf32>
    %78 = arith.mulf %75, %77 : vector<24x256xf32>
    %c9_50 = arith.constant 9 : index
    %c0_51 = arith.constant 0 : index
    %c0_52 = arith.constant 0 : index
    %79 = vector.load %arg2[%c9_50, %c0_51, %c0_52] : memref<25x16x24xf32, #tpu.memory_space<vmem>>, vector<1x16x24xf32>
    %80 = vector.shape_cast %79 : vector<1x16x24xf32> to vector<16x24xf32>
    %cst_53 = arith.constant dense<0.000000e+00> : vector<16x256xf32>
    %81 = tpu.matmul %80, %78, %cst_53 {dimension_numbers = #tpu.dot_dimension_numbers<[1], [0], [0], [1], [0, 0, 1, 1], [], []>} : vector<16x24xf32>, vector<24x256xf32>, vector<16x256xf32> -> vector<16x256xf32>
    %82 = arith.addf %74, %81 : vector<16x256xf32>
    %c2_i32 = arith.constant 2 : i32
    %83 = tpu.dynamic_rotate %1 by %c2_i32 dim 1 : vector<24x256xf32>, i32 -> vector<24x256xf32>
    %c10 = arith.constant 10 : index
    %c0_54 = arith.constant 0 : index
    %84 = vector.load %arg4[%c10, %c0_54] : memref<25x256xf32, #tpu.memory_space<vmem>>, vector<1x256xf32>
    %85 = vector.broadcast %84 : vector<1x256xf32> to vector<24x256xf32>
    %86 = arith.mulf %83, %85 : vector<24x256xf32>
    %c10_55 = arith.constant 10 : index
    %c0_56 = arith.constant 0 : index
    %c0_57 = arith.constant 0 : index
    %87 = vector.load %arg2[%c10_55, %c0_56, %c0_57] : memref<25x16x24xf32, #tpu.memory_space<vmem>>, vector<1x16x24xf32>
    %88 = vector.shape_cast %87 : vector<1x16x24xf32> to vector<16x24xf32>
    %cst_58 = arith.constant dense<0.000000e+00> : vector<16x256xf32>
    %89 = tpu.matmul %88, %86, %cst_58 {dimension_numbers = #tpu.dot_dimension_numbers<[1], [0], [0], [1], [0, 0, 1, 1], [], []>} : vector<16x24xf32>, vector<24x256xf32>, vector<16x256xf32> -> vector<16x256xf32>
    %90 = arith.addf %82, %89 : vector<16x256xf32>
    %c1_i32 = arith.constant 1 : i32
    %91 = tpu.dynamic_rotate %1 by %c1_i32 dim 1 : vector<24x256xf32>, i32 -> vector<24x256xf32>
    %c11 = arith.constant 11 : index
    %c0_59 = arith.constant 0 : index
    %92 = vector.load %arg4[%c11, %c0_59] : memref<25x256xf32, #tpu.memory_space<vmem>>, vector<1x256xf32>
    %93 = vector.broadcast %92 : vector<1x256xf32> to vector<24x256xf32>
    %94 = arith.mulf %91, %93 : vector<24x256xf32>
    %c11_60 = arith.constant 11 : index
    %c0_61 = arith.constant 0 : index
    %c0_62 = arith.constant 0 : index
    %95 = vector.load %arg2[%c11_60, %c0_61, %c0_62] : memref<25x16x24xf32, #tpu.memory_space<vmem>>, vector<1x16x24xf32>
    %96 = vector.shape_cast %95 : vector<1x16x24xf32> to vector<16x24xf32>
    %cst_63 = arith.constant dense<0.000000e+00> : vector<16x256xf32>
    %97 = tpu.matmul %96, %94, %cst_63 {dimension_numbers = #tpu.dot_dimension_numbers<[1], [0], [0], [1], [0, 0, 1, 1], [], []>} : vector<16x24xf32>, vector<24x256xf32>, vector<16x256xf32> -> vector<16x256xf32>
    %98 = arith.addf %90, %97 : vector<16x256xf32>
    %c12 = arith.constant 12 : index
    %c0_64 = arith.constant 0 : index
    %c0_65 = arith.constant 0 : index
    %99 = vector.load %arg2[%c12, %c0_64, %c0_65] : memref<25x16x24xf32, #tpu.memory_space<vmem>>, vector<1x16x24xf32>
    %100 = vector.shape_cast %99 : vector<1x16x24xf32> to vector<16x24xf32>
    %cst_66 = arith.constant dense<0.000000e+00> : vector<16x256xf32>
    %101 = tpu.matmul %100, %1, %cst_66 {dimension_numbers = #tpu.dot_dimension_numbers<[1], [0], [0], [1], [0, 0, 1, 1], [], []>} : vector<16x24xf32>, vector<24x256xf32>, vector<16x256xf32> -> vector<16x256xf32>
    %102 = arith.addf %98, %101 : vector<16x256xf32>
    %c255_i32 = arith.constant 255 : i32
    %103 = tpu.dynamic_rotate %1 by %c255_i32 dim 1 : vector<24x256xf32>, i32 -> vector<24x256xf32>
    %c13 = arith.constant 13 : index
    %c0_67 = arith.constant 0 : index
    %104 = vector.load %arg4[%c13, %c0_67] : memref<25x256xf32, #tpu.memory_space<vmem>>, vector<1x256xf32>
    %105 = vector.broadcast %104 : vector<1x256xf32> to vector<24x256xf32>
    %106 = arith.mulf %103, %105 : vector<24x256xf32>
    %c13_68 = arith.constant 13 : index
    %c0_69 = arith.constant 0 : index
    %c0_70 = arith.constant 0 : index
    %107 = vector.load %arg2[%c13_68, %c0_69, %c0_70] : memref<25x16x24xf32, #tpu.memory_space<vmem>>, vector<1x16x24xf32>
    %108 = vector.shape_cast %107 : vector<1x16x24xf32> to vector<16x24xf32>
    %cst_71 = arith.constant dense<0.000000e+00> : vector<16x256xf32>
    %109 = tpu.matmul %108, %106, %cst_71 {dimension_numbers = #tpu.dot_dimension_numbers<[1], [0], [0], [1], [0, 0, 1, 1], [], []>} : vector<16x24xf32>, vector<24x256xf32>, vector<16x256xf32> -> vector<16x256xf32>
    %110 = arith.addf %102, %109 : vector<16x256xf32>
    %c254_i32 = arith.constant 254 : i32
    %111 = tpu.dynamic_rotate %1 by %c254_i32 dim 1 : vector<24x256xf32>, i32 -> vector<24x256xf32>
    %c14 = arith.constant 14 : index
    %c0_72 = arith.constant 0 : index
    %112 = vector.load %arg4[%c14, %c0_72] : memref<25x256xf32, #tpu.memory_space<vmem>>, vector<1x256xf32>
    %113 = vector.broadcast %112 : vector<1x256xf32> to vector<24x256xf32>
    %114 = arith.mulf %111, %113 : vector<24x256xf32>
    %c14_73 = arith.constant 14 : index
    %c0_74 = arith.constant 0 : index
    %c0_75 = arith.constant 0 : index
    %115 = vector.load %arg2[%c14_73, %c0_74, %c0_75] : memref<25x16x24xf32, #tpu.memory_space<vmem>>, vector<1x16x24xf32>
    %116 = vector.shape_cast %115 : vector<1x16x24xf32> to vector<16x24xf32>
    %cst_76 = arith.constant dense<0.000000e+00> : vector<16x256xf32>
    %117 = tpu.matmul %116, %114, %cst_76 {dimension_numbers = #tpu.dot_dimension_numbers<[1], [0], [0], [1], [0, 0, 1, 1], [], []>} : vector<16x24xf32>, vector<24x256xf32>, vector<16x256xf32> -> vector<16x256xf32>
    %118 = arith.addf %110, %117 : vector<16x256xf32>
    %c242_i32 = arith.constant 242 : i32
    %119 = tpu.dynamic_rotate %1 by %c242_i32 dim 1 : vector<24x256xf32>, i32 -> vector<24x256xf32>
    %c15 = arith.constant 15 : index
    %c0_77 = arith.constant 0 : index
    %120 = vector.load %arg4[%c15, %c0_77] : memref<25x256xf32, #tpu.memory_space<vmem>>, vector<1x256xf32>
    %121 = vector.broadcast %120 : vector<1x256xf32> to vector<24x256xf32>
    %122 = arith.mulf %119, %121 : vector<24x256xf32>
    %c15_78 = arith.constant 15 : index
    %c0_79 = arith.constant 0 : index
    %c0_80 = arith.constant 0 : index
    %123 = vector.load %arg2[%c15_78, %c0_79, %c0_80] : memref<25x16x24xf32, #tpu.memory_space<vmem>>, vector<1x16x24xf32>
    %124 = vector.shape_cast %123 : vector<1x16x24xf32> to vector<16x24xf32>
    %cst_81 = arith.constant dense<0.000000e+00> : vector<16x256xf32>
    %125 = tpu.matmul %124, %122, %cst_81 {dimension_numbers = #tpu.dot_dimension_numbers<[1], [0], [0], [1], [0, 0, 1, 1], [], []>} : vector<16x24xf32>, vector<24x256xf32>, vector<16x256xf32> -> vector<16x256xf32>
    %126 = arith.addf %118, %125 : vector<16x256xf32>
    %c241_i32 = arith.constant 241 : i32
    %127 = tpu.dynamic_rotate %1 by %c241_i32 dim 1 : vector<24x256xf32>, i32 -> vector<24x256xf32>
    %c16 = arith.constant 16 : index
    %c0_82 = arith.constant 0 : index
    %128 = vector.load %arg4[%c16, %c0_82] : memref<25x256xf32, #tpu.memory_space<vmem>>, vector<1x256xf32>
    %129 = vector.broadcast %128 : vector<1x256xf32> to vector<24x256xf32>
    %130 = arith.mulf %127, %129 : vector<24x256xf32>
    %c16_83 = arith.constant 16 : index
    %c0_84 = arith.constant 0 : index
    %c0_85 = arith.constant 0 : index
    %131 = vector.load %arg2[%c16_83, %c0_84, %c0_85] : memref<25x16x24xf32, #tpu.memory_space<vmem>>, vector<1x16x24xf32>
    %132 = vector.shape_cast %131 : vector<1x16x24xf32> to vector<16x24xf32>
    %cst_86 = arith.constant dense<0.000000e+00> : vector<16x256xf32>
    %133 = tpu.matmul %132, %130, %cst_86 {dimension_numbers = #tpu.dot_dimension_numbers<[1], [0], [0], [1], [0, 0, 1, 1], [], []>} : vector<16x24xf32>, vector<24x256xf32>, vector<16x256xf32> -> vector<16x256xf32>
    %134 = arith.addf %126, %133 : vector<16x256xf32>
    %c240_i32 = arith.constant 240 : i32
    %135 = tpu.dynamic_rotate %1 by %c240_i32 dim 1 : vector<24x256xf32>, i32 -> vector<24x256xf32>
    %c17 = arith.constant 17 : index
    %c0_87 = arith.constant 0 : index
    %136 = vector.load %arg4[%c17, %c0_87] : memref<25x256xf32, #tpu.memory_space<vmem>>, vector<1x256xf32>
    %137 = vector.broadcast %136 : vector<1x256xf32> to vector<24x256xf32>
    %138 = arith.mulf %135, %137 : vector<24x256xf32>
    %c17_88 = arith.constant 17 : index
    %c0_89 = arith.constant 0 : index
    %c0_90 = arith.constant 0 : index
    %139 = vector.load %arg2[%c17_88, %c0_89, %c0_90] : memref<25x16x24xf32, #tpu.memory_space<vmem>>, vector<1x16x24xf32>
    %140 = vector.shape_cast %139 : vector<1x16x24xf32> to vector<16x24xf32>
    %cst_91 = arith.constant dense<0.000000e+00> : vector<16x256xf32>
    %141 = tpu.matmul %140, %138, %cst_91 {dimension_numbers = #tpu.dot_dimension_numbers<[1], [0], [0], [1], [0, 0, 1, 1], [], []>} : vector<16x24xf32>, vector<24x256xf32>, vector<16x256xf32> -> vector<16x256xf32>
    %142 = arith.addf %134, %141 : vector<16x256xf32>
    %c239_i32 = arith.constant 239 : i32
    %143 = tpu.dynamic_rotate %1 by %c239_i32 dim 1 : vector<24x256xf32>, i32 -> vector<24x256xf32>
    %c18 = arith.constant 18 : index
    %c0_92 = arith.constant 0 : index
    %144 = vector.load %arg4[%c18, %c0_92] : memref<25x256xf32, #tpu.memory_space<vmem>>, vector<1x256xf32>
    %145 = vector.broadcast %144 : vector<1x256xf32> to vector<24x256xf32>
    %146 = arith.mulf %143, %145 : vector<24x256xf32>
    %c18_93 = arith.constant 18 : index
    %c0_94 = arith.constant 0 : index
    %c0_95 = arith.constant 0 : index
    %147 = vector.load %arg2[%c18_93, %c0_94, %c0_95] : memref<25x16x24xf32, #tpu.memory_space<vmem>>, vector<1x16x24xf32>
    %148 = vector.shape_cast %147 : vector<1x16x24xf32> to vector<16x24xf32>
    %cst_96 = arith.constant dense<0.000000e+00> : vector<16x256xf32>
    %149 = tpu.matmul %148, %146, %cst_96 {dimension_numbers = #tpu.dot_dimension_numbers<[1], [0], [0], [1], [0, 0, 1, 1], [], []>} : vector<16x24xf32>, vector<24x256xf32>, vector<16x256xf32> -> vector<16x256xf32>
    %150 = arith.addf %142, %149 : vector<16x256xf32>
    %c238_i32 = arith.constant 238 : i32
    %151 = tpu.dynamic_rotate %1 by %c238_i32 dim 1 : vector<24x256xf32>, i32 -> vector<24x256xf32>
    %c19 = arith.constant 19 : index
    %c0_97 = arith.constant 0 : index
    %152 = vector.load %arg4[%c19, %c0_97] : memref<25x256xf32, #tpu.memory_space<vmem>>, vector<1x256xf32>
    %153 = vector.broadcast %152 : vector<1x256xf32> to vector<24x256xf32>
    %154 = arith.mulf %151, %153 : vector<24x256xf32>
    %c19_98 = arith.constant 19 : index
    %c0_99 = arith.constant 0 : index
    %c0_100 = arith.constant 0 : index
    %155 = vector.load %arg2[%c19_98, %c0_99, %c0_100] : memref<25x16x24xf32, #tpu.memory_space<vmem>>, vector<1x16x24xf32>
    %156 = vector.shape_cast %155 : vector<1x16x24xf32> to vector<16x24xf32>
    %cst_101 = arith.constant dense<0.000000e+00> : vector<16x256xf32>
    %157 = tpu.matmul %156, %154, %cst_101 {dimension_numbers = #tpu.dot_dimension_numbers<[1], [0], [0], [1], [0, 0, 1, 1], [], []>} : vector<16x24xf32>, vector<24x256xf32>, vector<16x256xf32> -> vector<16x256xf32>
    %158 = arith.addf %150, %157 : vector<16x256xf32>
    %c226_i32 = arith.constant 226 : i32
    %159 = tpu.dynamic_rotate %1 by %c226_i32 dim 1 : vector<24x256xf32>, i32 -> vector<24x256xf32>
    %c20 = arith.constant 20 : index
    %c0_102 = arith.constant 0 : index
    %160 = vector.load %arg4[%c20, %c0_102] : memref<25x256xf32, #tpu.memory_space<vmem>>, vector<1x256xf32>
    %161 = vector.broadcast %160 : vector<1x256xf32> to vector<24x256xf32>
    %162 = arith.mulf %159, %161 : vector<24x256xf32>
    %c20_103 = arith.constant 20 : index
    %c0_104 = arith.constant 0 : index
    %c0_105 = arith.constant 0 : index
    %163 = vector.load %arg2[%c20_103, %c0_104, %c0_105] : memref<25x16x24xf32, #tpu.memory_space<vmem>>, vector<1x16x24xf32>
    %164 = vector.shape_cast %163 : vector<1x16x24xf32> to vector<16x24xf32>
    %cst_106 = arith.constant dense<0.000000e+00> : vector<16x256xf32>
    %165 = tpu.matmul %164, %162, %cst_106 {dimension_numbers = #tpu.dot_dimension_numbers<[1], [0], [0], [1], [0, 0, 1, 1], [], []>} : vector<16x24xf32>, vector<24x256xf32>, vector<16x256xf32> -> vector<16x256xf32>
    %166 = arith.addf %158, %165 : vector<16x256xf32>
    %c225_i32 = arith.constant 225 : i32
    %167 = tpu.dynamic_rotate %1 by %c225_i32 dim 1 : vector<24x256xf32>, i32 -> vector<24x256xf32>
    %c21 = arith.constant 21 : index
    %c0_107 = arith.constant 0 : index
    %168 = vector.load %arg4[%c21, %c0_107] : memref<25x256xf32, #tpu.memory_space<vmem>>, vector<1x256xf32>
    %169 = vector.broadcast %168 : vector<1x256xf32> to vector<24x256xf32>
    %170 = arith.mulf %167, %169 : vector<24x256xf32>
    %c21_108 = arith.constant 21 : index
    %c0_109 = arith.constant 0 : index
    %c0_110 = arith.constant 0 : index
    %171 = vector.load %arg2[%c21_108, %c0_109, %c0_110] : memref<25x16x24xf32, #tpu.memory_space<vmem>>, vector<1x16x24xf32>
    %172 = vector.shape_cast %171 : vector<1x16x24xf32> to vector<16x24xf32>
    %cst_111 = arith.constant dense<0.000000e+00> : vector<16x256xf32>
    %173 = tpu.matmul %172, %170, %cst_111 {dimension_numbers = #tpu.dot_dimension_numbers<[1], [0], [0], [1], [0, 0, 1, 1], [], []>} : vector<16x24xf32>, vector<24x256xf32>, vector<16x256xf32> -> vector<16x256xf32>
    %174 = arith.addf %166, %173 : vector<16x256xf32>
    %c224_i32 = arith.constant 224 : i32
    %175 = tpu.dynamic_rotate %1 by %c224_i32 dim 1 : vector<24x256xf32>, i32 -> vector<24x256xf32>
    %c22 = arith.constant 22 : index
    %c0_112 = arith.constant 0 : index
    %176 = vector.load %arg4[%c22, %c0_112] : memref<25x256xf32, #tpu.memory_space<vmem>>, vector<1x256xf32>
    %177 = vector.broadcast %176 : vector<1x256xf32> to vector<24x256xf32>
    %178 = arith.mulf %175, %177 : vector<24x256xf32>
    %c22_113 = arith.constant 22 : index
    %c0_114 = arith.constant 0 : index
    %c0_115 = arith.constant 0 : index
    %179 = vector.load %arg2[%c22_113, %c0_114, %c0_115] : memref<25x16x24xf32, #tpu.memory_space<vmem>>, vector<1x16x24xf32>
    %180 = vector.shape_cast %179 : vector<1x16x24xf32> to vector<16x24xf32>
    %cst_116 = arith.constant dense<0.000000e+00> : vector<16x256xf32>
    %181 = tpu.matmul %180, %178, %cst_116 {dimension_numbers = #tpu.dot_dimension_numbers<[1], [0], [0], [1], [0, 0, 1, 1], [], []>} : vector<16x24xf32>, vector<24x256xf32>, vector<16x256xf32> -> vector<16x256xf32>
    %182 = arith.addf %174, %181 : vector<16x256xf32>
    %c223_i32 = arith.constant 223 : i32
    %183 = tpu.dynamic_rotate %1 by %c223_i32 dim 1 : vector<24x256xf32>, i32 -> vector<24x256xf32>
    %c23 = arith.constant 23 : index
    %c0_117 = arith.constant 0 : index
    %184 = vector.load %arg4[%c23, %c0_117] : memref<25x256xf32, #tpu.memory_space<vmem>>, vector<1x256xf32>
    %185 = vector.broadcast %184 : vector<1x256xf32> to vector<24x256xf32>
    %186 = arith.mulf %183, %185 : vector<24x256xf32>
    %c23_118 = arith.constant 23 : index
    %c0_119 = arith.constant 0 : index
    %c0_120 = arith.constant 0 : index
    %187 = vector.load %arg2[%c23_118, %c0_119, %c0_120] : memref<25x16x24xf32, #tpu.memory_space<vmem>>, vector<1x16x24xf32>
    %188 = vector.shape_cast %187 : vector<1x16x24xf32> to vector<16x24xf32>
    %cst_121 = arith.constant dense<0.000000e+00> : vector<16x256xf32>
    %189 = tpu.matmul %188, %186, %cst_121 {dimension_numbers = #tpu.dot_dimension_numbers<[1], [0], [0], [1], [0, 0, 1, 1], [], []>} : vector<16x24xf32>, vector<24x256xf32>, vector<16x256xf32> -> vector<16x256xf32>
    %190 = arith.addf %182, %189 : vector<16x256xf32>
    %c222_i32 = arith.constant 222 : i32
    %191 = tpu.dynamic_rotate %1 by %c222_i32 dim 1 : vector<24x256xf32>, i32 -> vector<24x256xf32>
    %c24 = arith.constant 24 : index
    %c0_122 = arith.constant 0 : index
    %192 = vector.load %arg4[%c24, %c0_122] : memref<25x256xf32, #tpu.memory_space<vmem>>, vector<1x256xf32>
    %193 = vector.broadcast %192 : vector<1x256xf32> to vector<24x256xf32>
    %194 = arith.mulf %191, %193 : vector<24x256xf32>
    %c24_123 = arith.constant 24 : index
    %c0_124 = arith.constant 0 : index
    %c0_125 = arith.constant 0 : index
    %195 = vector.load %arg2[%c24_123, %c0_124, %c0_125] : memref<25x16x24xf32, #tpu.memory_space<vmem>>, vector<1x16x24xf32>
    %196 = vector.shape_cast %195 : vector<1x16x24xf32> to vector<16x24xf32>
    %cst_126 = arith.constant dense<0.000000e+00> : vector<16x256xf32>
    %197 = tpu.matmul %196, %194, %cst_126 {dimension_numbers = #tpu.dot_dimension_numbers<[1], [0], [0], [1], [0, 0, 1, 1], [], []>} : vector<16x24xf32>, vector<24x256xf32>, vector<16x256xf32> -> vector<16x256xf32>
    %198 = arith.addf %190, %197 : vector<16x256xf32>
    %cst_127 = arith.constant 0.000000e+00 : f32
    %199 = vector.broadcast %cst_127 : f32 to vector<16x256xf32>
    %200 = arith.cmpf oge, %198, %199 : vector<16x256xf32>
    %cst_128 = arith.constant 0.00999999977 : f32
    %201 = vector.broadcast %cst_128 : f32 to vector<16x256xf32>
    %202 = arith.mulf %201, %198 : vector<16x256xf32>
    %203 = arith.select %200, %198, %202 : vector<16x256xi1>, vector<16x256xf32>
    %c0_129 = arith.constant 0 : index
    %c0_130 = arith.constant 0 : index
    %204 = vector.load %arg6[%c0_129, %c0_130] : memref<8x256xf32, #tpu.memory_space<vmem>>, vector<8x256xf32>
    %c34_i32_131 = arith.constant 34 : i32
    %205 = tpu.dynamic_rotate %203 by %c34_i32_131 dim 1 : vector<16x256xf32>, i32 -> vector<16x256xf32>
    %c0_132 = arith.constant 0 : index
    %c0_133 = arith.constant 0 : index
    %206 = vector.load %arg4[%c0_132, %c0_133] : memref<25x256xf32, #tpu.memory_space<vmem>>, vector<1x256xf32>
    %207 = vector.broadcast %206 : vector<1x256xf32> to vector<16x256xf32>
    %208 = arith.mulf %205, %207 : vector<16x256xf32>
    %c0_134 = arith.constant 0 : index
    %c0_135 = arith.constant 0 : index
    %c0_136 = arith.constant 0 : index
    %209 = vector.load %arg3[%c0_134, %c0_135, %c0_136] : memref<25x8x16xf32, #tpu.memory_space<vmem>>, vector<1x8x16xf32>
    %210 = vector.shape_cast %209 : vector<1x8x16xf32> to vector<8x16xf32>
    %cst_137 = arith.constant dense<0.000000e+00> : vector<8x256xf32>
    %211 = tpu.matmul %210, %208, %cst_137 {dimension_numbers = #tpu.dot_dimension_numbers<[1], [0], [0], [1], [0, 0, 1, 1], [], []>} : vector<8x16xf32>, vector<16x256xf32>, vector<8x256xf32> -> vector<8x256xf32>
    %212 = arith.addf %204, %211 : vector<8x256xf32>
    %c33_i32_138 = arith.constant 33 : i32
    %213 = tpu.dynamic_rotate %203 by %c33_i32_138 dim 1 : vector<16x256xf32>, i32 -> vector<16x256xf32>
    %c1_139 = arith.constant 1 : index
    %c0_140 = arith.constant 0 : index
    %214 = vector.load %arg4[%c1_139, %c0_140] : memref<25x256xf32, #tpu.memory_space<vmem>>, vector<1x256xf32>
    %215 = vector.broadcast %214 : vector<1x256xf32> to vector<16x256xf32>
    %216 = arith.mulf %213, %215 : vector<16x256xf32>
    %c1_141 = arith.constant 1 : index
    %c0_142 = arith.constant 0 : index
    %c0_143 = arith.constant 0 : index
    %217 = vector.load %arg3[%c1_141, %c0_142, %c0_143] : memref<25x8x16xf32, #tpu.memory_space<vmem>>, vector<1x8x16xf32>
    %218 = vector.shape_cast %217 : vector<1x8x16xf32> to vector<8x16xf32>
    %cst_144 = arith.constant dense<0.000000e+00> : vector<8x256xf32>
    %219 = tpu.matmul %218, %216, %cst_144 {dimension_numbers = #tpu.dot_dimension_numbers<[1], [0], [0], [1], [0, 0, 1, 1], [], []>} : vector<8x16xf32>, vector<16x256xf32>, vector<8x256xf32> -> vector<8x256xf32>
    %220 = arith.addf %212, %219 : vector<8x256xf32>
    %c32_i32_145 = arith.constant 32 : i32
    %221 = tpu.dynamic_rotate %203 by %c32_i32_145 dim 1 : vector<16x256xf32>, i32 -> vector<16x256xf32>
    %c2_146 = arith.constant 2 : index
    %c0_147 = arith.constant 0 : index
    %222 = vector.load %arg4[%c2_146, %c0_147] : memref<25x256xf32, #tpu.memory_space<vmem>>, vector<1x256xf32>
    %223 = vector.broadcast %222 : vector<1x256xf32> to vector<16x256xf32>
    %224 = arith.mulf %221, %223 : vector<16x256xf32>
    %c2_148 = arith.constant 2 : index
    %c0_149 = arith.constant 0 : index
    %c0_150 = arith.constant 0 : index
    %225 = vector.load %arg3[%c2_148, %c0_149, %c0_150] : memref<25x8x16xf32, #tpu.memory_space<vmem>>, vector<1x8x16xf32>
    %226 = vector.shape_cast %225 : vector<1x8x16xf32> to vector<8x16xf32>
    %cst_151 = arith.constant dense<0.000000e+00> : vector<8x256xf32>
    %227 = tpu.matmul %226, %224, %cst_151 {dimension_numbers = #tpu.dot_dimension_numbers<[1], [0], [0], [1], [0, 0, 1, 1], [], []>} : vector<8x16xf32>, vector<16x256xf32>, vector<8x256xf32> -> vector<8x256xf32>
    %228 = arith.addf %220, %227 : vector<8x256xf32>
    %c31_i32_152 = arith.constant 31 : i32
    %229 = tpu.dynamic_rotate %203 by %c31_i32_152 dim 1 : vector<16x256xf32>, i32 -> vector<16x256xf32>
    %c3_153 = arith.constant 3 : index
    %c0_154 = arith.constant 0 : index
    %230 = vector.load %arg4[%c3_153, %c0_154] : memref<25x256xf32, #tpu.memory_space<vmem>>, vector<1x256xf32>
    %231 = vector.broadcast %230 : vector<1x256xf32> to vector<16x256xf32>
    %232 = arith.mulf %229, %231 : vector<16x256xf32>
    %c3_155 = arith.constant 3 : index
    %c0_156 = arith.constant 0 : index
    %c0_157 = arith.constant 0 : index
    %233 = vector.load %arg3[%c3_155, %c0_156, %c0_157] : memref<25x8x16xf32, #tpu.memory_space<vmem>>, vector<1x8x16xf32>
    %234 = vector.shape_cast %233 : vector<1x8x16xf32> to vector<8x16xf32>
    %cst_158 = arith.constant dense<0.000000e+00> : vector<8x256xf32>
    %235 = tpu.matmul %234, %232, %cst_158 {dimension_numbers = #tpu.dot_dimension_numbers<[1], [0], [0], [1], [0, 0, 1, 1], [], []>} : vector<8x16xf32>, vector<16x256xf32>, vector<8x256xf32> -> vector<8x256xf32>
    %236 = arith.addf %228, %235 : vector<8x256xf32>
    %c30_i32_159 = arith.constant 30 : i32
    %237 = tpu.dynamic_rotate %203 by %c30_i32_159 dim 1 : vector<16x256xf32>, i32 -> vector<16x256xf32>
    %c4_160 = arith.constant 4 : index
    %c0_161 = arith.constant 0 : index
    %238 = vector.load %arg4[%c4_160, %c0_161] : memref<25x256xf32, #tpu.memory_space<vmem>>, vector<1x256xf32>
    %239 = vector.broadcast %238 : vector<1x256xf32> to vector<16x256xf32>
    %240 = arith.mulf %237, %239 : vector<16x256xf32>
    %c4_162 = arith.constant 4 : index
    %c0_163 = arith.constant 0 : index
    %c0_164 = arith.constant 0 : index
    %241 = vector.load %arg3[%c4_162, %c0_163, %c0_164] : memref<25x8x16xf32, #tpu.memory_space<vmem>>, vector<1x8x16xf32>
    %242 = vector.shape_cast %241 : vector<1x8x16xf32> to vector<8x16xf32>
    %cst_165 = arith.constant dense<0.000000e+00> : vector<8x256xf32>
    %243 = tpu.matmul %242, %240, %cst_165 {dimension_numbers = #tpu.dot_dimension_numbers<[1], [0], [0], [1], [0, 0, 1, 1], [], []>} : vector<8x16xf32>, vector<16x256xf32>, vector<8x256xf32> -> vector<8x256xf32>
    %244 = arith.addf %236, %243 : vector<8x256xf32>
    %c18_i32_166 = arith.constant 18 : i32
    %245 = tpu.dynamic_rotate %203 by %c18_i32_166 dim 1 : vector<16x256xf32>, i32 -> vector<16x256xf32>
    %c5_167 = arith.constant 5 : index
    %c0_168 = arith.constant 0 : index
    %246 = vector.load %arg4[%c5_167, %c0_168] : memref<25x256xf32, #tpu.memory_space<vmem>>, vector<1x256xf32>
    %247 = vector.broadcast %246 : vector<1x256xf32> to vector<16x256xf32>
    %248 = arith.mulf %245, %247 : vector<16x256xf32>
    %c5_169 = arith.constant 5 : index
    %c0_170 = arith.constant 0 : index
    %c0_171 = arith.constant 0 : index
    %249 = vector.load %arg3[%c5_169, %c0_170, %c0_171] : memref<25x8x16xf32, #tpu.memory_space<vmem>>, vector<1x8x16xf32>
    %250 = vector.shape_cast %249 : vector<1x8x16xf32> to vector<8x16xf32>
    %cst_172 = arith.constant dense<0.000000e+00> : vector<8x256xf32>
    %251 = tpu.matmul %250, %248, %cst_172 {dimension_numbers = #tpu.dot_dimension_numbers<[1], [0], [0], [1], [0, 0, 1, 1], [], []>} : vector<8x16xf32>, vector<16x256xf32>, vector<8x256xf32> -> vector<8x256xf32>
    %252 = arith.addf %244, %251 : vector<8x256xf32>
    %c17_i32_173 = arith.constant 17 : i32
    %253 = tpu.dynamic_rotate %203 by %c17_i32_173 dim 1 : vector<16x256xf32>, i32 -> vector<16x256xf32>
    %c6_174 = arith.constant 6 : index
    %c0_175 = arith.constant 0 : index
    %254 = vector.load %arg4[%c6_174, %c0_175] : memref<25x256xf32, #tpu.memory_space<vmem>>, vector<1x256xf32>
    %255 = vector.broadcast %254 : vector<1x256xf32> to vector<16x256xf32>
    %256 = arith.mulf %253, %255 : vector<16x256xf32>
    %c6_176 = arith.constant 6 : index
    %c0_177 = arith.constant 0 : index
    %c0_178 = arith.constant 0 : index
    %257 = vector.load %arg3[%c6_176, %c0_177, %c0_178] : memref<25x8x16xf32, #tpu.memory_space<vmem>>, vector<1x8x16xf32>
    %258 = vector.shape_cast %257 : vector<1x8x16xf32> to vector<8x16xf32>
    %cst_179 = arith.constant dense<0.000000e+00> : vector<8x256xf32>
    %259 = tpu.matmul %258, %256, %cst_179 {dimension_numbers = #tpu.dot_dimension_numbers<[1], [0], [0], [1], [0, 0, 1, 1], [], []>} : vector<8x16xf32>, vector<16x256xf32>, vector<8x256xf32> -> vector<8x256xf32>
    %260 = arith.addf %252, %259 : vector<8x256xf32>
    %c16_i32_180 = arith.constant 16 : i32
    %261 = tpu.dynamic_rotate %203 by %c16_i32_180 dim 1 : vector<16x256xf32>, i32 -> vector<16x256xf32>
    %c7_181 = arith.constant 7 : index
    %c0_182 = arith.constant 0 : index
    %262 = vector.load %arg4[%c7_181, %c0_182] : memref<25x256xf32, #tpu.memory_space<vmem>>, vector<1x256xf32>
    %263 = vector.broadcast %262 : vector<1x256xf32> to vector<16x256xf32>
    %264 = arith.mulf %261, %263 : vector<16x256xf32>
    %c7_183 = arith.constant 7 : index
    %c0_184 = arith.constant 0 : index
    %c0_185 = arith.constant 0 : index
    %265 = vector.load %arg3[%c7_183, %c0_184, %c0_185] : memref<25x8x16xf32, #tpu.memory_space<vmem>>, vector<1x8x16xf32>
    %266 = vector.shape_cast %265 : vector<1x8x16xf32> to vector<8x16xf32>
    %cst_186 = arith.constant dense<0.000000e+00> : vector<8x256xf32>
    %267 = tpu.matmul %266, %264, %cst_186 {dimension_numbers = #tpu.dot_dimension_numbers<[1], [0], [0], [1], [0, 0, 1, 1], [], []>} : vector<8x16xf32>, vector<16x256xf32>, vector<8x256xf32> -> vector<8x256xf32>
    %268 = arith.addf %260, %267 : vector<8x256xf32>
    %c15_i32_187 = arith.constant 15 : i32
    %269 = tpu.dynamic_rotate %203 by %c15_i32_187 dim 1 : vector<16x256xf32>, i32 -> vector<16x256xf32>
    %c8_188 = arith.constant 8 : index
    %c0_189 = arith.constant 0 : index
    %270 = vector.load %arg4[%c8_188, %c0_189] : memref<25x256xf32, #tpu.memory_space<vmem>>, vector<1x256xf32>
    %271 = vector.broadcast %270 : vector<1x256xf32> to vector<16x256xf32>
    %272 = arith.mulf %269, %271 : vector<16x256xf32>
    %c8_190 = arith.constant 8 : index
    %c0_191 = arith.constant 0 : index
    %c0_192 = arith.constant 0 : index
    %273 = vector.load %arg3[%c8_190, %c0_191, %c0_192] : memref<25x8x16xf32, #tpu.memory_space<vmem>>, vector<1x8x16xf32>
    %274 = vector.shape_cast %273 : vector<1x8x16xf32> to vector<8x16xf32>
    %cst_193 = arith.constant dense<0.000000e+00> : vector<8x256xf32>
    %275 = tpu.matmul %274, %272, %cst_193 {dimension_numbers = #tpu.dot_dimension_numbers<[1], [0], [0], [1], [0, 0, 1, 1], [], []>} : vector<8x16xf32>, vector<16x256xf32>, vector<8x256xf32> -> vector<8x256xf32>
    %276 = arith.addf %268, %275 : vector<8x256xf32>
    %c14_i32_194 = arith.constant 14 : i32
    %277 = tpu.dynamic_rotate %203 by %c14_i32_194 dim 1 : vector<16x256xf32>, i32 -> vector<16x256xf32>
    %c9_195 = arith.constant 9 : index
    %c0_196 = arith.constant 0 : index
    %278 = vector.load %arg4[%c9_195, %c0_196] : memref<25x256xf32, #tpu.memory_space<vmem>>, vector<1x256xf32>
    %279 = vector.broadcast %278 : vector<1x256xf32> to vector<16x256xf32>
    %280 = arith.mulf %277, %279 : vector<16x256xf32>
    %c9_197 = arith.constant 9 : index
    %c0_198 = arith.constant 0 : index
    %c0_199 = arith.constant 0 : index
    %281 = vector.load %arg3[%c9_197, %c0_198, %c0_199] : memref<25x8x16xf32, #tpu.memory_space<vmem>>, vector<1x8x16xf32>
    %282 = vector.shape_cast %281 : vector<1x8x16xf32> to vector<8x16xf32>
    %cst_200 = arith.constant dense<0.000000e+00> : vector<8x256xf32>
    %283 = tpu.matmul %282, %280, %cst_200 {dimension_numbers = #tpu.dot_dimension_numbers<[1], [0], [0], [1], [0, 0, 1, 1], [], []>} : vector<8x16xf32>, vector<16x256xf32>, vector<8x256xf32> -> vector<8x256xf32>
    %284 = arith.addf %276, %283 : vector<8x256xf32>
    %c2_i32_201 = arith.constant 2 : i32
    %285 = tpu.dynamic_rotate %203 by %c2_i32_201 dim 1 : vector<16x256xf32>, i32 -> vector<16x256xf32>
    %c10_202 = arith.constant 10 : index
    %c0_203 = arith.constant 0 : index
    %286 = vector.load %arg4[%c10_202, %c0_203] : memref<25x256xf32, #tpu.memory_space<vmem>>, vector<1x256xf32>
    %287 = vector.broadcast %286 : vector<1x256xf32> to vector<16x256xf32>
    %288 = arith.mulf %285, %287 : vector<16x256xf32>
    %c10_204 = arith.constant 10 : index
    %c0_205 = arith.constant 0 : index
    %c0_206 = arith.constant 0 : index
    %289 = vector.load %arg3[%c10_204, %c0_205, %c0_206] : memref<25x8x16xf32, #tpu.memory_space<vmem>>, vector<1x8x16xf32>
    %290 = vector.shape_cast %289 : vector<1x8x16xf32> to vector<8x16xf32>
    %cst_207 = arith.constant dense<0.000000e+00> : vector<8x256xf32>
    %291 = tpu.matmul %290, %288, %cst_207 {dimension_numbers = #tpu.dot_dimension_numbers<[1], [0], [0], [1], [0, 0, 1, 1], [], []>} : vector<8x16xf32>, vector<16x256xf32>, vector<8x256xf32> -> vector<8x256xf32>
    %292 = arith.addf %284, %291 : vector<8x256xf32>
    %c1_i32_208 = arith.constant 1 : i32
    %293 = tpu.dynamic_rotate %203 by %c1_i32_208 dim 1 : vector<16x256xf32>, i32 -> vector<16x256xf32>
    %c11_209 = arith.constant 11 : index
    %c0_210 = arith.constant 0 : index
    %294 = vector.load %arg4[%c11_209, %c0_210] : memref<25x256xf32, #tpu.memory_space<vmem>>, vector<1x256xf32>
    %295 = vector.broadcast %294 : vector<1x256xf32> to vector<16x256xf32>
    %296 = arith.mulf %293, %295 : vector<16x256xf32>
    %c11_211 = arith.constant 11 : index
    %c0_212 = arith.constant 0 : index
    %c0_213 = arith.constant 0 : index
    %297 = vector.load %arg3[%c11_211, %c0_212, %c0_213] : memref<25x8x16xf32, #tpu.memory_space<vmem>>, vector<1x8x16xf32>
    %298 = vector.shape_cast %297 : vector<1x8x16xf32> to vector<8x16xf32>
    %cst_214 = arith.constant dense<0.000000e+00> : vector<8x256xf32>
    %299 = tpu.matmul %298, %296, %cst_214 {dimension_numbers = #tpu.dot_dimension_numbers<[1], [0], [0], [1], [0, 0, 1, 1], [], []>} : vector<8x16xf32>, vector<16x256xf32>, vector<8x256xf32> -> vector<8x256xf32>
    %300 = arith.addf %292, %299 : vector<8x256xf32>
    %c12_215 = arith.constant 12 : index
    %c0_216 = arith.constant 0 : index
    %c0_217 = arith.constant 0 : index
    %301 = vector.load %arg3[%c12_215, %c0_216, %c0_217] : memref<25x8x16xf32, #tpu.memory_space<vmem>>, vector<1x8x16xf32>
    %302 = vector.shape_cast %301 : vector<1x8x16xf32> to vector<8x16xf32>
    %cst_218 = arith.constant dense<0.000000e+00> : vector<8x256xf32>
    %303 = tpu.matmul %302, %203, %cst_218 {dimension_numbers = #tpu.dot_dimension_numbers<[1], [0], [0], [1], [0, 0, 1, 1], [], []>} : vector<8x16xf32>, vector<16x256xf32>, vector<8x256xf32> -> vector<8x256xf32>
    %304 = arith.addf %300, %303 : vector<8x256xf32>
    %c255_i32_219 = arith.constant 255 : i32
    %305 = tpu.dynamic_rotate %203 by %c255_i32_219 dim 1 : vector<16x256xf32>, i32 -> vector<16x256xf32>
    %c13_220 = arith.constant 13 : index
    %c0_221 = arith.constant 0 : index
    %306 = vector.load %arg4[%c13_220, %c0_221] : memref<25x256xf32, #tpu.memory_space<vmem>>, vector<1x256xf32>
    %307 = vector.broadcast %306 : vector<1x256xf32> to vector<16x256xf32>
    %308 = arith.mulf %305, %307 : vector<16x256xf32>
    %c13_222 = arith.constant 13 : index
    %c0_223 = arith.constant 0 : index
    %c0_224 = arith.constant 0 : index
    %309 = vector.load %arg3[%c13_222, %c0_223, %c0_224] : memref<25x8x16xf32, #tpu.memory_space<vmem>>, vector<1x8x16xf32>
    %310 = vector.shape_cast %309 : vector<1x8x16xf32> to vector<8x16xf32>
    %cst_225 = arith.constant dense<0.000000e+00> : vector<8x256xf32>
    %311 = tpu.matmul %310, %308, %cst_225 {dimension_numbers = #tpu.dot_dimension_numbers<[1], [0], [0], [1], [0, 0, 1, 1], [], []>} : vector<8x16xf32>, vector<16x256xf32>, vector<8x256xf32> -> vector<8x256xf32>
    %312 = arith.addf %304, %311 : vector<8x256xf32>
    %c254_i32_226 = arith.constant 254 : i32
    %313 = tpu.dynamic_rotate %203 by %c254_i32_226 dim 1 : vector<16x256xf32>, i32 -> vector<16x256xf32>
    %c14_227 = arith.constant 14 : index
    %c0_228 = arith.constant 0 : index
    %314 = vector.load %arg4[%c14_227, %c0_228] : memref<25x256xf32, #tpu.memory_space<vmem>>, vector<1x256xf32>
    %315 = vector.broadcast %314 : vector<1x256xf32> to vector<16x256xf32>
    %316 = arith.mulf %313, %315 : vector<16x256xf32>
    %c14_229 = arith.constant 14 : index
    %c0_230 = arith.constant 0 : index
    %c0_231 = arith.constant 0 : index
    %317 = vector.load %arg3[%c14_229, %c0_230, %c0_231] : memref<25x8x16xf32, #tpu.memory_space<vmem>>, vector<1x8x16xf32>
    %318 = vector.shape_cast %317 : vector<1x8x16xf32> to vector<8x16xf32>
    %cst_232 = arith.constant dense<0.000000e+00> : vector<8x256xf32>
    %319 = tpu.matmul %318, %316, %cst_232 {dimension_numbers = #tpu.dot_dimension_numbers<[1], [0], [0], [1], [0, 0, 1, 1], [], []>} : vector<8x16xf32>, vector<16x256xf32>, vector<8x256xf32> -> vector<8x256xf32>
    %320 = arith.addf %312, %319 : vector<8x256xf32>
    %c242_i32_233 = arith.constant 242 : i32
    %321 = tpu.dynamic_rotate %203 by %c242_i32_233 dim 1 : vector<16x256xf32>, i32 -> vector<16x256xf32>
    %c15_234 = arith.constant 15 : index
    %c0_235 = arith.constant 0 : index
    %322 = vector.load %arg4[%c15_234, %c0_235] : memref<25x256xf32, #tpu.memory_space<vmem>>, vector<1x256xf32>
    %323 = vector.broadcast %322 : vector<1x256xf32> to vector<16x256xf32>
    %324 = arith.mulf %321, %323 : vector<16x256xf32>
    %c15_236 = arith.constant 15 : index
    %c0_237 = arith.constant 0 : index
    %c0_238 = arith.constant 0 : index
    %325 = vector.load %arg3[%c15_236, %c0_237, %c0_238] : memref<25x8x16xf32, #tpu.memory_space<vmem>>, vector<1x8x16xf32>
    %326 = vector.shape_cast %325 : vector<1x8x16xf32> to vector<8x16xf32>
    %cst_239 = arith.constant dense<0.000000e+00> : vector<8x256xf32>
    %327 = tpu.matmul %326, %324, %cst_239 {dimension_numbers = #tpu.dot_dimension_numbers<[1], [0], [0], [1], [0, 0, 1, 1], [], []>} : vector<8x16xf32>, vector<16x256xf32>, vector<8x256xf32> -> vector<8x256xf32>
    %328 = arith.addf %320, %327 : vector<8x256xf32>
    %c241_i32_240 = arith.constant 241 : i32
    %329 = tpu.dynamic_rotate %203 by %c241_i32_240 dim 1 : vector<16x256xf32>, i32 -> vector<16x256xf32>
    %c16_241 = arith.constant 16 : index
    %c0_242 = arith.constant 0 : index
    %330 = vector.load %arg4[%c16_241, %c0_242] : memref<25x256xf32, #tpu.memory_space<vmem>>, vector<1x256xf32>
    %331 = vector.broadcast %330 : vector<1x256xf32> to vector<16x256xf32>
    %332 = arith.mulf %329, %331 : vector<16x256xf32>
    %c16_243 = arith.constant 16 : index
    %c0_244 = arith.constant 0 : index
    %c0_245 = arith.constant 0 : index
    %333 = vector.load %arg3[%c16_243, %c0_244, %c0_245] : memref<25x8x16xf32, #tpu.memory_space<vmem>>, vector<1x8x16xf32>
    %334 = vector.shape_cast %333 : vector<1x8x16xf32> to vector<8x16xf32>
    %cst_246 = arith.constant dense<0.000000e+00> : vector<8x256xf32>
    %335 = tpu.matmul %334, %332, %cst_246 {dimension_numbers = #tpu.dot_dimension_numbers<[1], [0], [0], [1], [0, 0, 1, 1], [], []>} : vector<8x16xf32>, vector<16x256xf32>, vector<8x256xf32> -> vector<8x256xf32>
    %336 = arith.addf %328, %335 : vector<8x256xf32>
    %c240_i32_247 = arith.constant 240 : i32
    %337 = tpu.dynamic_rotate %203 by %c240_i32_247 dim 1 : vector<16x256xf32>, i32 -> vector<16x256xf32>
    %c17_248 = arith.constant 17 : index
    %c0_249 = arith.constant 0 : index
    %338 = vector.load %arg4[%c17_248, %c0_249] : memref<25x256xf32, #tpu.memory_space<vmem>>, vector<1x256xf32>
    %339 = vector.broadcast %338 : vector<1x256xf32> to vector<16x256xf32>
    %340 = arith.mulf %337, %339 : vector<16x256xf32>
    %c17_250 = arith.constant 17 : index
    %c0_251 = arith.constant 0 : index
    %c0_252 = arith.constant 0 : index
    %341 = vector.load %arg3[%c17_250, %c0_251, %c0_252] : memref<25x8x16xf32, #tpu.memory_space<vmem>>, vector<1x8x16xf32>
    %342 = vector.shape_cast %341 : vector<1x8x16xf32> to vector<8x16xf32>
    %cst_253 = arith.constant dense<0.000000e+00> : vector<8x256xf32>
    %343 = tpu.matmul %342, %340, %cst_253 {dimension_numbers = #tpu.dot_dimension_numbers<[1], [0], [0], [1], [0, 0, 1, 1], [], []>} : vector<8x16xf32>, vector<16x256xf32>, vector<8x256xf32> -> vector<8x256xf32>
    %344 = arith.addf %336, %343 : vector<8x256xf32>
    %c239_i32_254 = arith.constant 239 : i32
    %345 = tpu.dynamic_rotate %203 by %c239_i32_254 dim 1 : vector<16x256xf32>, i32 -> vector<16x256xf32>
    %c18_255 = arith.constant 18 : index
    %c0_256 = arith.constant 0 : index
    %346 = vector.load %arg4[%c18_255, %c0_256] : memref<25x256xf32, #tpu.memory_space<vmem>>, vector<1x256xf32>
    %347 = vector.broadcast %346 : vector<1x256xf32> to vector<16x256xf32>
    %348 = arith.mulf %345, %347 : vector<16x256xf32>
    %c18_257 = arith.constant 18 : index
    %c0_258 = arith.constant 0 : index
    %c0_259 = arith.constant 0 : index
    %349 = vector.load %arg3[%c18_257, %c0_258, %c0_259] : memref<25x8x16xf32, #tpu.memory_space<vmem>>, vector<1x8x16xf32>
    %350 = vector.shape_cast %349 : vector<1x8x16xf32> to vector<8x16xf32>
    %cst_260 = arith.constant dense<0.000000e+00> : vector<8x256xf32>
    %351 = tpu.matmul %350, %348, %cst_260 {dimension_numbers = #tpu.dot_dimension_numbers<[1], [0], [0], [1], [0, 0, 1, 1], [], []>} : vector<8x16xf32>, vector<16x256xf32>, vector<8x256xf32> -> vector<8x256xf32>
    %352 = arith.addf %344, %351 : vector<8x256xf32>
    %c238_i32_261 = arith.constant 238 : i32
    %353 = tpu.dynamic_rotate %203 by %c238_i32_261 dim 1 : vector<16x256xf32>, i32 -> vector<16x256xf32>
    %c19_262 = arith.constant 19 : index
    %c0_263 = arith.constant 0 : index
    %354 = vector.load %arg4[%c19_262, %c0_263] : memref<25x256xf32, #tpu.memory_space<vmem>>, vector<1x256xf32>
    %355 = vector.broadcast %354 : vector<1x256xf32> to vector<16x256xf32>
    %356 = arith.mulf %353, %355 : vector<16x256xf32>
    %c19_264 = arith.constant 19 : index
    %c0_265 = arith.constant 0 : index
    %c0_266 = arith.constant 0 : index
    %357 = vector.load %arg3[%c19_264, %c0_265, %c0_266] : memref<25x8x16xf32, #tpu.memory_space<vmem>>, vector<1x8x16xf32>
    %358 = vector.shape_cast %357 : vector<1x8x16xf32> to vector<8x16xf32>
    %cst_267 = arith.constant dense<0.000000e+00> : vector<8x256xf32>
    %359 = tpu.matmul %358, %356, %cst_267 {dimension_numbers = #tpu.dot_dimension_numbers<[1], [0], [0], [1], [0, 0, 1, 1], [], []>} : vector<8x16xf32>, vector<16x256xf32>, vector<8x256xf32> -> vector<8x256xf32>
    %360 = arith.addf %352, %359 : vector<8x256xf32>
    %c226_i32_268 = arith.constant 226 : i32
    %361 = tpu.dynamic_rotate %203 by %c226_i32_268 dim 1 : vector<16x256xf32>, i32 -> vector<16x256xf32>
    %c20_269 = arith.constant 20 : index
    %c0_270 = arith.constant 0 : index
    %362 = vector.load %arg4[%c20_269, %c0_270] : memref<25x256xf32, #tpu.memory_space<vmem>>, vector<1x256xf32>
    %363 = vector.broadcast %362 : vector<1x256xf32> to vector<16x256xf32>
    %364 = arith.mulf %361, %363 : vector<16x256xf32>
    %c20_271 = arith.constant 20 : index
    %c0_272 = arith.constant 0 : index
    %c0_273 = arith.constant 0 : index
    %365 = vector.load %arg3[%c20_271, %c0_272, %c0_273] : memref<25x8x16xf32, #tpu.memory_space<vmem>>, vector<1x8x16xf32>
    %366 = vector.shape_cast %365 : vector<1x8x16xf32> to vector<8x16xf32>
    %cst_274 = arith.constant dense<0.000000e+00> : vector<8x256xf32>
    %367 = tpu.matmul %366, %364, %cst_274 {dimension_numbers = #tpu.dot_dimension_numbers<[1], [0], [0], [1], [0, 0, 1, 1], [], []>} : vector<8x16xf32>, vector<16x256xf32>, vector<8x256xf32> -> vector<8x256xf32>
    %368 = arith.addf %360, %367 : vector<8x256xf32>
    %c225_i32_275 = arith.constant 225 : i32
    %369 = tpu.dynamic_rotate %203 by %c225_i32_275 dim 1 : vector<16x256xf32>, i32 -> vector<16x256xf32>
    %c21_276 = arith.constant 21 : index
    %c0_277 = arith.constant 0 : index
    %370 = vector.load %arg4[%c21_276, %c0_277] : memref<25x256xf32, #tpu.memory_space<vmem>>, vector<1x256xf32>
    %371 = vector.broadcast %370 : vector<1x256xf32> to vector<16x256xf32>
    %372 = arith.mulf %369, %371 : vector<16x256xf32>
    %c21_278 = arith.constant 21 : index
    %c0_279 = arith.constant 0 : index
    %c0_280 = arith.constant 0 : index
    %373 = vector.load %arg3[%c21_278, %c0_279, %c0_280] : memref<25x8x16xf32, #tpu.memory_space<vmem>>, vector<1x8x16xf32>
    %374 = vector.shape_cast %373 : vector<1x8x16xf32> to vector<8x16xf32>
    %cst_281 = arith.constant dense<0.000000e+00> : vector<8x256xf32>
    %375 = tpu.matmul %374, %372, %cst_281 {dimension_numbers = #tpu.dot_dimension_numbers<[1], [0], [0], [1], [0, 0, 1, 1], [], []>} : vector<8x16xf32>, vector<16x256xf32>, vector<8x256xf32> -> vector<8x256xf32>
    %376 = arith.addf %368, %375 : vector<8x256xf32>
    %c224_i32_282 = arith.constant 224 : i32
    %377 = tpu.dynamic_rotate %203 by %c224_i32_282 dim 1 : vector<16x256xf32>, i32 -> vector<16x256xf32>
    %c22_283 = arith.constant 22 : index
    %c0_284 = arith.constant 0 : index
    %378 = vector.load %arg4[%c22_283, %c0_284] : memref<25x256xf32, #tpu.memory_space<vmem>>, vector<1x256xf32>
    %379 = vector.broadcast %378 : vector<1x256xf32> to vector<16x256xf32>
    %380 = arith.mulf %377, %379 : vector<16x256xf32>
    %c22_285 = arith.constant 22 : index
    %c0_286 = arith.constant 0 : index
    %c0_287 = arith.constant 0 : index
    %381 = vector.load %arg3[%c22_285, %c0_286, %c0_287] : memref<25x8x16xf32, #tpu.memory_space<vmem>>, vector<1x8x16xf32>
    %382 = vector.shape_cast %381 : vector<1x8x16xf32> to vector<8x16xf32>
    %cst_288 = arith.constant dense<0.000000e+00> : vector<8x256xf32>
    %383 = tpu.matmul %382, %380, %cst_288 {dimension_numbers = #tpu.dot_dimension_numbers<[1], [0], [0], [1], [0, 0, 1, 1], [], []>} : vector<8x16xf32>, vector<16x256xf32>, vector<8x256xf32> -> vector<8x256xf32>
    %384 = arith.addf %376, %383 : vector<8x256xf32>
    %c223_i32_289 = arith.constant 223 : i32
    %385 = tpu.dynamic_rotate %203 by %c223_i32_289 dim 1 : vector<16x256xf32>, i32 -> vector<16x256xf32>
    %c23_290 = arith.constant 23 : index
    %c0_291 = arith.constant 0 : index
    %386 = vector.load %arg4[%c23_290, %c0_291] : memref<25x256xf32, #tpu.memory_space<vmem>>, vector<1x256xf32>
    %387 = vector.broadcast %386 : vector<1x256xf32> to vector<16x256xf32>
    %388 = arith.mulf %385, %387 : vector<16x256xf32>
    %c23_292 = arith.constant 23 : index
    %c0_293 = arith.constant 0 : index
    %c0_294 = arith.constant 0 : index
    %389 = vector.load %arg3[%c23_292, %c0_293, %c0_294] : memref<25x8x16xf32, #tpu.memory_space<vmem>>, vector<1x8x16xf32>
    %390 = vector.shape_cast %389 : vector<1x8x16xf32> to vector<8x16xf32>
    %cst_295 = arith.constant dense<0.000000e+00> : vector<8x256xf32>
    %391 = tpu.matmul %390, %388, %cst_295 {dimension_numbers = #tpu.dot_dimension_numbers<[1], [0], [0], [1], [0, 0, 1, 1], [], []>} : vector<8x16xf32>, vector<16x256xf32>, vector<8x256xf32> -> vector<8x256xf32>
    %392 = arith.addf %384, %391 : vector<8x256xf32>
    %c222_i32_296 = arith.constant 222 : i32
    %393 = tpu.dynamic_rotate %203 by %c222_i32_296 dim 1 : vector<16x256xf32>, i32 -> vector<16x256xf32>
    %c24_297 = arith.constant 24 : index
    %c0_298 = arith.constant 0 : index
    %394 = vector.load %arg4[%c24_297, %c0_298] : memref<25x256xf32, #tpu.memory_space<vmem>>, vector<1x256xf32>
    %395 = vector.broadcast %394 : vector<1x256xf32> to vector<16x256xf32>
    %396 = arith.mulf %393, %395 : vector<16x256xf32>
    %c24_299 = arith.constant 24 : index
    %c0_300 = arith.constant 0 : index
    %c0_301 = arith.constant 0 : index
    %397 = vector.load %arg3[%c24_299, %c0_300, %c0_301] : memref<25x8x16xf32, #tpu.memory_space<vmem>>, vector<1x8x16xf32>
    %398 = vector.shape_cast %397 : vector<1x8x16xf32> to vector<8x16xf32>
    %cst_302 = arith.constant dense<0.000000e+00> : vector<8x256xf32>
    %399 = tpu.matmul %398, %396, %cst_302 {dimension_numbers = #tpu.dot_dimension_numbers<[1], [0], [0], [1], [0, 0, 1, 1], [], []>} : vector<8x16xf32>, vector<16x256xf32>, vector<8x256xf32> -> vector<8x256xf32>
    %400 = arith.addf %392, %399 : vector<8x256xf32>
    %401 = vector.extract_strided_slice %400 {offsets = [0, 0], sizes = [6, 256], strides = [1, 1]} : vector<8x256xf32> to vector<6x256xf32>
    %c0_303 = arith.constant 0 : index
    %c0_304 = arith.constant 0 : index
    %c0_305 = arith.constant 0 : index
    %402 = vector.load %arg7[%c0_303, %c0_304, %c0_305] : memref<1x6x256xf32, #tpu.memory_space<vmem>>, vector<1x6x256xf32>
    %403 = vector.shape_cast %402 : vector<1x6x256xf32> to vector<6x256xf32>
    %404 = vector.shape_cast %401 : vector<6x256xf32> to vector<1x6x256xf32>
    tpu.vector_store %arg7[%c0_303, %c0_304, %c0_305], %404 {strides = array<i32>} : memref<1x6x256xf32, #tpu.memory_space<vmem>>, vector<1x6x256xf32>,
    return
  }
  func.func @transform_0(%arg0: i32) -> (i32, i32, i32) {
    %c0_i32 = arith.constant 0 : i32
    %c0_i32_0 = arith.constant 0 : i32
    %c0_i32_1 = arith.constant 0 : i32
    return %arg0, %c0_i32, %c0_i32_0 : i32, i32, i32
  }
  func.func @transform_1(%arg0: i32) -> (i32, i32, i32) {
    %c0_i32 = arith.constant 0 : i32
    %c0_i32_0 = arith.constant 0 : i32
    %c0_i32_1 = arith.constant 0 : i32
    %c0_i32_2 = arith.constant 0 : i32
    return %c0_i32, %c0_i32_0, %c0_i32_1 : i32, i32, i32
  }
  func.func @transform_2(%arg0: i32) -> (i32, i32, i32) {
    %c0_i32 = arith.constant 0 : i32
    %c0_i32_0 = arith.constant 0 : i32
    %c0_i32_1 = arith.constant 0 : i32
    %c0_i32_2 = arith.constant 0 : i32
    return %c0_i32, %c0_i32_0, %c0_i32_1 : i32, i32, i32
  }
  func.func @transform_3(%arg0: i32) -> (i32, i32) {
    %c0_i32 = arith.constant 0 : i32
    %c0_i32_0 = arith.constant 0 : i32
    %c0_i32_1 = arith.constant 0 : i32
    return %c0_i32, %c0_i32_0 : i32, i32
  }
  func.func @transform_4(%arg0: i32) -> (i32, i32) {
    %c0_i32 = arith.constant 0 : i32
    %c0_i32_0 = arith.constant 0 : i32
    %c0_i32_1 = arith.constant 0 : i32
    return %c0_i32, %c0_i32_0 : i32, i32
  }
  func.func @transform_5(%arg0: i32) -> (i32, i32) {
    %c0_i32 = arith.constant 0 : i32
    %c0_i32_0 = arith.constant 0 : i32
    %c0_i32_1 = arith.constant 0 : i32
    return %c0_i32, %c0_i32_0 : i32, i32
  }
  func.func @transform_6(%arg0: i32) -> (i32, i32, i32) {
    %c0_i32 = arith.constant 0 : i32
    %c0_i32_0 = arith.constant 0 : i32
    %c0_i32_1 = arith.constant 0 : i32
    return %arg0, %c0_i32, %c0_i32_0 : i32, i32, i32
  }
}

</mosaic_0001>

<llo_original>
// kernel: tpu_custom_call.1
$region0: #{tpu_custom_call.1}
  #allocation0 [shape = 'u32[]', space=smem, size = 0x4, offset = 0x4, fixed_abs, tag = 'smem constant byte address 0x4 - core index']
  #allocation1 [shape = 'u32[72,128]{1,0:T(1,128)}', space=vmem, size = 0x9000, scoped, tag = 'internal scratch']
  %s0 = inlined_call_operand.vmem [shape: f32[2,24,256], index: 0, kind: input, shape index: {}]
  %s1 = inlined_call_operand.vmem [shape: f32[25,16,24], index: 1, kind: input, shape index: {}]
  %s2 = inlined_call_operand.vmem [shape: f32[25,8,16], index: 2, kind: input, shape index: {}]
  %s3 = inlined_call_operand.vmem [shape: f32[25,256], index: 3, kind: input, shape index: {}]
  %s4 = inlined_call_operand.vmem [shape: f32[16,256], index: 4, kind: input, shape index: {}]
  %s5 = inlined_call_operand.vmem [shape: f32[8,256], index: 5, kind: input, shape index: {}]
  %s6 = inlined_call_operand.vmem [shape: f32[2,6,256], index: 6, kind: output, shape index: {}]
  %s7 = sld [smem:[#allocation0]]
  $region57: #{tpu_custom_call.1} parent=0
    _
  %s9 = ssub.s32 1, %s7
  %s10 = scalar_select 0, %s9, %s7
  loop: start=0, step=1, limit=4
  $region2: #{tpu_custom_call.1} parent=0 // loop_pre_header
    _
  $region3: #{tpu_custom_call.1} parent=0 // loop_header
    %s12 = sphi 0, %s16
    %p13 = scmp.ge.s32.totalorder %s12, 4
    %s22 = sphi 0, %s24
    %s25 = sphi 0, %s22
    %s26 = sphi 0, %s25
    %s42 = sphi 0, %s26
    %s46 = sphi 0, %s46
    %s48 = sphi 0, %s46
    %s49 = sphi 0, %s48
    %s63 = sphi 0, %s49
    %s67 = sphi 0, %s67
    %s69 = sphi 0, %s67
    %s70 = sphi 0, %s69
    %s84 = sphi 0, %s70
    %s88 = sphi 0, %s88
    %s90 = sphi 0, %s88
    %s91 = sphi 0, %s90
    %s105 = sphi 0, %s91
    %s109 = sphi 0, %s109
    %s111 = sphi 0, %s109
    %s112 = sphi 0, %s111
    %s126 = sphi 0, %s112
    %s130 = sphi 0, %s130
    %s132 = sphi 0, %s130
    %s133 = sphi 0, %s132
    %s147 = sphi 0, %s133
    %s153 = sphi 0, %s155
    %s156 = sphi 0, %s153
    %s157 = sphi 0, %s156
    %s173 = sphi 0, %s157
  $region4: #{tpu_custom_call.1} parent=0 // loop_header_branch
    %15 = sbr.rel (%p13) target = $region8
  $region5: #{tpu_custom_call.1} parent=0 // loop_body
    %s17 = ssub.s32 %s12, 1
    %s18 = ssub.s32 %s12, 2
    %s19 = sadd.s32 %s12, 1
    %s20 = ssub.s32 %s12, %s19
    %p21 = scmp.eq.s32.totalorder %s20, 0
    %s23 = sadd.s32 %s22, 1
    %s24 = scalar_select %p21, %s22, %s23
    %p27 = pneg %p21
    %p28 = scmp.eq.s32.totalorder %s12, 1
    %p29 = por %p27, %p28
    %p30 = scmp.ne.s32.totalorder %s22, %s25
    %p31 = scmp.eq.s32.totalorder %s12, 0
    %p32 = por %p30, %p31
    %p33 = scmp.ne.s32.totalorder %s22, %s25
    %p34 = scmp.eq.s32.totalorder %s17, 1
    %p35 = por %p33, %p34
    %p36 = scmp.ne.s32.totalorder %s25, %s26
    %p37 = scmp.eq.s32.totalorder %s17, 0
    %p38 = por %p36, %p37
    %p39 = scmp.ne.s32.totalorder %s25, %s26
    %p40 = scmp.eq.s32.totalorder %s18, 1
    %p41 = por %p39, %p40
    %p43 = scmp.ne.s32.totalorder %s26, %s42
    %p44 = scmp.eq.s32.totalorder %s18, 0
    %p45 = por %p43, %p44
    %s47 = sadd.s32 %s46, 1
    %p50 = scmp.eq.s32.totalorder %s12, 1
    %p51 = scmp.ne.s32.totalorder %s46, %s48
    %p52 = scmp.eq.s32.totalorder %s12, 0
    %p53 = por %p51, %p52
    %p54 = scmp.ne.s32.totalorder %s46, %s48
    %p55 = scmp.eq.s32.totalorder %s17, 1
    %p56 = por %p54, %p55
    %p57 = scmp.ne.s32.totalorder %s48, %s49
    %p58 = scmp.eq.s32.totalorder %s17, 0
    %p59 = por %p57, %p58
    %p60 = scmp.ne.s32.totalorder %s48, %s49
    %p61 = scmp.eq.s32.totalorder %s18, 1
    %p62 = por %p60, %p61
    %p64 = scmp.ne.s32.totalorder %s49, %s63
    %p65 = scmp.eq.s32.totalorder %s18, 0
    %p66 = por %p64, %p65
    %s68 = sadd.s32 %s67, 1
    %p71 = scmp.eq.s32.totalorder %s12, 1
    %p72 = scmp.ne.s32.totalorder %s67, %s69
    %p73 = scmp.eq.s32.totalorder %s12, 0
    %p74 = por %p72, %p73
    %p75 = scmp.ne.s32.totalorder %s67, %s69
    %p76 = scmp.eq.s32.totalorder %s17, 1
    %p77 = por %p75, %p76
    %p78 = scmp.ne.s32.totalorder %s69, %s70
    %p79 = scmp.eq.s32.totalorder %s17, 0
    %p80 = por %p78, %p79
    %p81 = scmp.ne.s32.totalorder %s69, %s70
    %p82 = scmp.eq.s32.totalorder %s18, 1
    %p83 = por %p81, %p82
    %p85 = scmp.ne.s32.totalorder %s70, %s84
    %p86 = scmp.eq.s32.totalorder %s18, 0
    %p87 = por %p85, %p86
    %s89 = sadd.s32 %s88, 1
    %p92 = scmp.eq.s32.totalorder %s12, 1
    %p93 = scmp.ne.s32.totalorder %s88, %s90
    %p94 = scmp.eq.s32.totalorder %s12, 0
    %p95 = por %p93, %p94
    %p96 = scmp.ne.s32.totalorder %s88, %s90
    %p97 = scmp.eq.s32.totalorder %s17, 1
    %p98 = por %p96, %p97
    %p99 = scmp.ne.s32.totalorder %s90, %s91
    %p100 = scmp.eq.s32.totalorder %s17, 0
    %p101 = por %p99, %p100
    %p102 = scmp.ne.s32.totalorder %s90, %s91
    %p103 = scmp.eq.s32.totalorder %s18, 1
    %p104 = por %p102, %p103
    %p106 = scmp.ne.s32.totalorder %s91, %s105
    %p107 = scmp.eq.s32.totalorder %s18, 0
    %p108 = por %p106, %p107
    %s110 = sadd.s32 %s109, 1
    %p113 = scmp.eq.s32.totalorder %s12, 1
    %p114 = scmp.ne.s32.totalorder %s109, %s111
    %p115 = scmp.eq.s32.totalorder %s12, 0
    %p116 = por %p114, %p115
    %p117 = scmp.ne.s32.totalorder %s109, %s111
    %p118 = scmp.eq.s32.totalorder %s17, 1
    %p119 = por %p117, %p118
    %p120 = scmp.ne.s32.totalorder %s111, %s112
    %p121 = scmp.eq.s32.totalorder %s17, 0
    %p122 = por %p120, %p121
    %p123 = scmp.ne.s32.totalorder %s111, %s112
    %p124 = scmp.eq.s32.totalorder %s18, 1
    %p125 = por %p123, %p124
    %p127 = scmp.ne.s32.totalorder %s112, %s126
    %p128 = scmp.eq.s32.totalorder %s18, 0
    %p129 = por %p127, %p128
    %s131 = sadd.s32 %s130, 1
    %p134 = scmp.eq.s32.totalorder %s12, 1
    %p135 = scmp.ne.s32.totalorder %s130, %s132
    %p136 = scmp.eq.s32.totalorder %s12, 0
    %p137 = por %p135, %p136
    %p138 = scmp.ne.s32.totalorder %s130, %s132
    %p139 = scmp.eq.s32.totalorder %s17, 1
    %p140 = por %p138, %p139
    %p141 = scmp.ne.s32.totalorder %s132, %s133
    %p142 = scmp.eq.s32.totalorder %s17, 0
    %p143 = por %p141, %p142
    %p144 = scmp.ne.s32.totalorder %s132, %s133
    %p145 = scmp.eq.s32.totalorder %s18, 1
    %p146 = por %p144, %p145
    %p148 = scmp.ne.s32.totalorder %s133, %s147
    %p149 = scmp.eq.s32.totalorder %s18, 0
    %p150 = por %p148, %p149
    %s151 = ssub.s32 %s12, %s19
    %p152 = scmp.eq.s32.totalorder %s151, 0
    %s154 = sadd.s32 %s153, 1
    %s155 = scalar_select %p152, %s153, %s154
    %p158 = pneg %p152
    %p159 = scmp.eq.s32.totalorder %s12, 1
    %p160 = por %p158, %p159
    %p161 = scmp.ne.s32.totalorder %s153, %s156
    %p162 = scmp.eq.s32.totalorder %s12, 0
    %p163 = por %p161, %p162
    %p164 = scmp.ne.s32.totalorder %s153, %s156
    %p165 = scmp.eq.s32.totalorder %s17, 1
    %p166 = por %p164, %p165
    %p167 = scmp.ne.s32.totalorder %s156, %s157
    %p168 = scmp.eq.s32.totalorder %s17, 0
    %p169 = por %p167, %p168
    %p170 = scmp.ne.s32.totalorder %s156, %s157
    %p171 = scmp.eq.s32.totalorder %s18, 1
    %p172 = por %p170, %p171
    %p174 = scmp.ne.s32.totalorder %s157, %s173
    %p175 = scmp.eq.s32.totalorder %s18, 0
    %p176 = por %p174, %p175
    %p177 = scmp.le.s32.totalorder 1, %s12
    %p178 = scmp.lt.s32.totalorder %s12, 3
    %p179 = pnand %p177, %p178
    %p180 = pneg %p179
    // Predicated region
    $region9: #{tpu_custom_call.1} parent=5 // pred_check
      _
    $region10: #{tpu_custom_call.1} parent=5 // pred_check_branch
      %182 = sbr.rel (%p179) target = $region12
    $region11: #{tpu_custom_call.1} parent=5 // pred_region
      %s183 = ssub.s32 %s12, 1
      // Predicated region
      $region13: #{tpu_custom_call.1} parent=11 // pred_check
        %p184 = pneg %p59
      $region14: #{tpu_custom_call.1} parent=11 // pred_check_branch
        %186 = sbr.rel (%p184) target = $region16
      $region15: #{tpu_custom_call.1} parent=11 // pred_region
        _
      $region16: #{tpu_custom_call.1} parent=11 // pred_fallthru
        _
      // Predicated region
      $region17: #{tpu_custom_call.1} parent=11 // pred_check
        %p187 = pneg %p80
      $region18: #{tpu_custom_call.1} parent=11 // pred_check_branch
        %189 = sbr.rel (%p187) target = $region20
      $region19: #{tpu_custom_call.1} parent=11 // pred_region
        _
      $region20: #{tpu_custom_call.1} parent=11 // pred_fallthru
        _
      // Predicated region
      $region21: #{tpu_custom_call.1} parent=11 // pred_check
        %p190 = pneg %p101
      $region22: #{tpu_custom_call.1} parent=11 // pred_check_branch
        %192 = sbr.rel (%p190) target = $region24
      $region23: #{tpu_custom_call.1} parent=11 // pred_region
        _
      $region24: #{tpu_custom_call.1} parent=11 // pred_fallthru
        _
      // Predicated region
      $region25: #{tpu_custom_call.1} parent=11 // pred_check
        %p193 = pneg %p122
      $region26: #{tpu_custom_call.1} parent=11 // pred_check_branch
        %195 = sbr.rel (%p193) target = $region28
      $region27: #{tpu_custom_call.1} parent=11 // pred_region
        _
      $region28: #{tpu_custom_call.1} parent=11 // pred_fallthru
        _
      // Predicated region
      $region29: #{tpu_custom_call.1} parent=11 // pred_check
        %p196 = pneg %p143
      $region30: #{tpu_custom_call.1} parent=11 // pred_check_branch
        %198 = sbr.rel (%p196) target = $region32
      $region31: #{tpu_custom_call.1} parent=11 // pred_region
        _
      $region32: #{tpu_custom_call.1} parent=11 // pred_fallthru
        _
    $region12: #{tpu_custom_call.1} parent=5 // pred_fallthru
      _
    %p199 = scmp.lt.s32.totalorder %s12, 2
    // Predicated region
    $region33: #{tpu_custom_call.1} parent=5 // pred_check
      %p200 = pneg %p199
    $region34: #{tpu_custom_call.1} parent=5 // pred_check_branch
      %202 = sbr.rel (%p200) target = $region36
    $region35: #{tpu_custom_call.1} parent=5 // pred_region
      // Predicated region
      $region37: #{tpu_custom_call.1} parent=35 // pred_check
        %p203 = pneg %p32
      $region38: #{tpu_custom_call.1} parent=35 // pred_check_branch
        %205 = sbr.rel (%p203) target = $region40
      $region39: #{tpu_custom_call.1} parent=35 // pred_region
        %p206 = scmp.lt.s32.totalorder %s12, 1
        %s207 = scalar_select %p206, %s12, 1
        %s208 = smul.addr %s207, 6
        %s209 = smul.addr %s208, 8
        %s210 = scalar_lea.vmem %s0, %s209
      $region40: #{tpu_custom_call.1} parent=35 // pred_fallthru
        _
    $region36: #{tpu_custom_call.1} parent=5 // pred_fallthru
      _
    %p211 = scmp.le.s32.totalorder 1, %s12
    %p212 = scmp.lt.s32.totalorder %s12, 3
    %p213 = pnand %p211, %p212
    %p214 = pneg %p213
    // Predicated region
    $region41: #{tpu_custom_call.1} parent=5 // pred_check
      _
    $region42: #{tpu_custom_call.1} parent=5 // pred_check_branch
      %216 = sbr.rel (%p213) target = $region44
    $region43: #{tpu_custom_call.1} parent=5 // pred_region
      %s217 = ssub.s32 %s12, 1
      %p218 = scmp.lt.s32.totalorder %s17, 1
      %s219 = scalar_select %p218, %s17, 1
      %s220 = smul.addr %s219, 6
      %s221 = smul.addr %s220, 8
      %s222 = scalar_lea.vmem %s0, %s221
      %p223 = pneg %p38
      %p224 = pneg %p35
      %p225 = pneg %p59
      %p226 = pneg %p56
      %p227 = pneg %p80
      %p228 = pneg %p77
      %p229 = pneg %p101
      %p230 = pneg %p98
      %p231 = pneg %p122
      %p232 = pneg %p119
      %p233 = pneg %p143
      %p234 = pneg %p140
      %p235 = pneg %p169
      %p236 = pneg %p166
      %p237 = scmp.lt.s32.totalorder %s17, 1
      %s238 = scalar_select %p237, %s17, 1
      %s239 = smul.addr %s238, 2
      %s240 = smul.addr %s239, 8
      %s241 = scalar_lea.vmem %s6, %s240
      %p242 = scmp.lt.s32.totalorder %s17, 1
      %s243 = scalar_select %p242, %s17, 1
      %s244 = smul.addr %s243, 6
      %s245 = smul.addr %s244, 8
      %s246 = scalar_lea.vmem %s0, %s245
      %p247 = scmp.lt.s32.totalorder %s17, 1
      %s248 = scalar_select %p247, %s17, 1
      %s249 = smul.addr %s248, 2
      %s250 = smul.addr %s249, 8
      %s251 = scalar_lea.vmem %s6, %s250
      %v252 = vld [vmem:[%s246] sm:$0xff]
      %v253 = vld [vmem:[%s246 + $0x8] sm:$0xff]
      %v254 = vld [vmem:[%s246 + $0x10] sm:$0xff]
      %v255 = vld [vmem:[%s246 + $0x18] sm:$0xff]
      %v256 = vld [vmem:[%s246 + $0x20] sm:$0xff]
      %v257 = vld [vmem:[%s246 + $0x28] sm:$0xff]
      %v258 = vld [vmem:[%s4] sm:$0xff]
      %v259 = vld [vmem:[%s4 + $0x8] sm:$0xff]
      %v260 = vld [vmem:[%s4 + $0x10] sm:$0xff]
      %v261 = vld [vmem:[%s4 + $0x18] sm:$0xff]
      %262 = vrot.lane.b32.xlu0 %v252, 34
      %v263 = vpop.permute.xlu0 %262
      %264 = vrot.lane.b32.xlu0 %v254, 34
      %v265 = vpop.permute.xlu0 %264
      %266 = vrot.lane.b32.xlu0 %v256, 34
      %v267 = vpop.permute.xlu0 %266
      %268 = vrot.lane.b32.xlu0 %v253, 34
      %v269 = vpop.permute.xlu0 %268
      %270 = vrot.lane.b32.xlu0 %v255, 34
      %v271 = vpop.permute.xlu0 %270
      %272 = vrot.lane.b32.xlu0 %v257, 34
      %v273 = vpop.permute.xlu0 %272
      %v274 = vlaneseq
      %v275 = vand.u32 %v274, 127
      %vm276 = vcmp.lt.s32.totalorder %v275, 34
      %v277 = vsel %vm276, %v263, %v269
      %v278 = vsel %vm276, %v265, %v271
      %v279 = vsel %vm276, %v267, %v273
      %v280 = vsel %vm276, %v269, %v263
      %v281 = vsel %vm276, %v271, %v265
      %v282 = vsel %vm276, %v273, %v267
      %v283 = vld [vmem:[%s3] ss:$8 sm:$0x3]
      %v285 = vperm.slane %v283, 0
      %v286 = vperm.slane %v283, 1
      %v289 = vmul.f32 %v280, %v285
      %v290 = vmul.f32 %v277, %v286
      %v291 = vmul.f32 %v281, %v285
      %v292 = vmul.f32 %v278, %v286
      %v293 = vmul.f32 %v282, %v285
      %v294 = vmul.f32 %v279, %v286
      %v295 = vld [vmem:[%s1] sm:$0xff]
      %v296 = vld [vmem:[%s1 + $0x8] sm:$0xff]
      %vm297 = vcmask 195584
      %v299 = vsel %vm297, %v295, 0
      %v302 = vsel %vm297, %v296, 0
      %304 = vmatpush.msra.mxu0 0.0
      %305 = vmatpush.msra.mxu0 0.0
      %306 = vmatpush.msra.mxu0 0.0
      %307 = vmatpush.msra.mxu0 0.0
      %308 = vmatpush.msra.mxu0 0.0
      %309 = vmatpush.msra.mxu0 0.0
      %310 = vmatpush.msra.mxu0 0.0
      %311 = vmatpush.msra.mxu0 0.0
      %312 = vmatpush.msra.mxu0 0.0
      %313 = vmatpush.msra.mxu0 0.0
      %314 = vmatpush.msra.mxu0 0.0
      %315 = vmatpush.msra.mxu0 0.0
      %316 = vmatpush.msra.mxu0 0.0
      %317 = vmatpush.msra.mxu0 %v293
      %318 = vmatpush.msra.mxu0 %v291
      %319 = vmatpush.msra.mxu0 %v289
      %320 = vmatmul.f32.gmra.mxu0 %v299
      %v321 = vpop.f32.mrf.mxu0
      %v322 = vadd.f32 0.0, %v321
      %323 = vmatmul.f32.gmra.mxu0 %v302
      %v324 = vpop.f32.mrf.mxu0
      %v325 = vadd.f32 0.0, %v324
      %326 = vdwg.mxu0
      %327 = vmatpush.msra.mxu0 0.0
      %328 = vmatpush.msra.mxu0 0.0
      %329 = vmatpush.msra.mxu0 0.0
      %330 = vmatpush.msra.mxu0 0.0
      %331 = vmatpush.msra.mxu0 0.0
      %332 = vmatpush.msra.mxu0 0.0
      %333 = vmatpush.msra.mxu0 0.0
      %334 = vmatpush.msra.mxu0 0.0
      %335 = vmatpush.msra.mxu0 0.0
      %336 = vmatpush.msra.mxu0 0.0
      %337 = vmatpush.msra.mxu0 0.0
      %338 = vmatpush.msra.mxu0 0.0
      %339 = vmatpush.msra.mxu0 0.0
      %340 = vmatpush.msra.mxu0 %v294
      %341 = vmatpush.msra.mxu0 %v292
      %342 = vmatpush.msra.mxu0 %v290
      %343 = vmatmul.f32.gmra.mxu0 %v299
      %v344 = vpop.f32.mrf.mxu0
      %v345 = vadd.f32 0.0, %v344
      %346 = vmatmul.f32.gmra.mxu0 %v302
      %v347 = vpop.f32.mrf.mxu0
      %v348 = vadd.f32 0.0, %v347
      %349 = vdwg.mxu0
      %v350 = vadd.f32 %v258, %v322
      %v351 = vadd.f32 %v259, %v345
      %v352 = vadd.f32 %v260, %v325
      %v353 = vadd.f32 %v261, %v348
      %354 = vrot.lane.b32.xlu0 %v252, 33
      %v355 = vpop.permute.xlu0 %354
      %356 = vrot.lane.b32.xlu0 %v254, 33
      %v357 = vpop.permute.xlu0 %356
      %358 = vrot.lane.b32.xlu0 %v256, 33
      %v359 = vpop.permute.xlu0 %358
      %360 = vrot.lane.b32.xlu0 %v253, 33
      %v361 = vpop.permute.xlu0 %360
      %362 = vrot.lane.b32.xlu0 %v255, 33
      %v363 = vpop.permute.xlu0 %362
      %364 = vrot.lane.b32.xlu0 %v257, 33
      %v365 = vpop.permute.xlu0 %364
      %vm366 = vcmp.lt.s32.totalorder %v275, 33
      %v367 = vsel %vm366, %v355, %v361
      %v368 = vsel %vm366, %v357, %v363
      %v369 = vsel %vm366, %v359, %v365
      %v370 = vsel %vm366, %v361, %v355
      %v371 = vsel %vm366, %v363, %v357
      %v372 = vsel %vm366, %v365, %v359
      %s373 = scalar_lea.vmem %s3, 1
      %v374 = vld [vmem:[%s373] ss:$8 sm:$0x3]
      %v376 = vperm.slane %v374, 0
      %v377 = vperm.slane %v374, 1
      %v380 = vmul.f32 %v370, %v376
      %v381 = vmul.f32 %v367, %v377
      %v382 = vmul.f32 %v371, %v376
      %v383 = vmul.f32 %v368, %v377
      %v384 = vmul.f32 %v372, %v376
      %v385 = vmul.f32 %v369, %v377
      %s386 = scalar_lea.vmem %s1, 16
      %v387 = vld [vmem:[%s386] sm:$0xff]
      %v388 = vld [vmem:[%s386 + $0x8] sm:$0xff]
      %v390 = vsel %vm297, %v387, 0
      %v393 = vsel %vm297, %v388, 0
      %395 = vmatpush.msra.mxu0 0.0
      %396 = vmatpush.msra.mxu0 0.0
      %397 = vmatpush.msra.mxu0 0.0
      %398 = vmatpush.msra.mxu0 0.0
      %399 = vmatpush.msra.mxu0 0.0
      %400 = vmatpush.msra.mxu0 0.0
      %401 = vmatpush.msra.mxu0 0.0
      %402 = vmatpush.msra.mxu0 0.0
      %403 = vmatpush.msra.mxu0 0.0
      %404 = vmatpush.msra.mxu0 0.0
      %405 = vmatpush.msra.mxu0 0.0
      %406 = vmatpush.msra.mxu0 0.0
      %407 = vmatpush.msra.mxu0 0.0
      %408 = vmatpush.msra.mxu0 %v384
      %409 = vmatpush.msra.mxu0 %v382
      %410 = vmatpush.msra.mxu0 %v380
      %411 = vmatmul.f32.gmra.mxu0 %v390
      %v412 = vpop.f32.mrf.mxu0
      %v413 = vadd.f32 0.0, %v412
      %414 = vmatmul.f32.gmra.mxu0 %v393
      %v415 = vpop.f32.mrf.mxu0
      %v416 = vadd.f32 0.0, %v415
      %417 = vdwg.mxu0
      %418 = vmatpush.msra.mxu0 0.0
      %419 = vmatpush.msra.mxu0 0.0
      %420 = vmatpush.msra.mxu0 0.0
      %421 = vmatpush.msra.mxu0 0.0
      %422 = vmatpush.msra.mxu0 0.0
      %423 = vmatpush.msra.mxu0 0.0
      %424 = vmatpush.msra.mxu0 0.0
      %425 = vmatpush.msra.mxu0 0.0
      %426 = vmatpush.msra.mxu0 0.0
      %427 = vmatpush.msra.mxu0 0.0
      %428 = vmatpush.msra.mxu0 0.0
      %429 = vmatpush.msra.mxu0 0.0
      %430 = vmatpush.msra.mxu0 0.0
      %431 = vmatpush.msra.mxu0 %v385
      %432 = vmatpush.msra.mxu0 %v383
      %433 = vmatpush.msra.mxu0 %v381
      %434 = vmatmul.f32.gmra.mxu0 %v390
      %v435 = vpop.f32.mrf.mxu0
      %v436 = vadd.f32 0.0, %v435
      %437 = vmatmul.f32.gmra.mxu0 %v393
      %v438 = vpop.f32.mrf.mxu0
      %v439 = vadd.f32 0.0, %v438
      %440 = vdwg.mxu0
      %v441 = vadd.f32 %v350, %v413
      %v442 = vadd.f32 %v351, %v436
      %v443 = vadd.f32 %v352, %v416
      %v444 = vadd.f32 %v353, %v439
      %445 = vrot.lane.b32.xlu0 %v252, 32
      %v446 = vpop.permute.xlu0 %445
      %447 = vrot.lane.b32.xlu0 %v254, 32
      %v448 = vpop.permute.xlu0 %447
      %449 = vrot.lane.b32.xlu0 %v256, 32
      %v450 = vpop.permute.xlu0 %449
      %451 = vrot.lane.b32.xlu0 %v253, 32
      %v452 = vpop.permute.xlu0 %451
      %453 = vrot.lane.b32.xlu0 %v255, 32
      %v454 = vpop.permute.xlu0 %453
      %455 = vrot.lane.b32.xlu0 %v257, 32
      %v456 = vpop.permute.xlu0 %455
      %vm457 = vcmp.lt.s32.totalorder %v275, 32
      %v458 = vsel %vm457, %v446, %v452
      %v459 = vsel %vm457, %v448, %v454
      %v460 = vsel %vm457, %v450, %v456
      %v461 = vsel %vm457, %v452, %v446
      %v462 = vsel %vm457, %v454, %v448
      %v463 = vsel %vm457, %v456, %v450
      %s464 = scalar_lea.vmem %s3, 2
      %v465 = vld [vmem:[%s464] ss:$8 sm:$0x3]
      %v467 = vperm.slane %v465, 0
      %v468 = vperm.slane %v465, 1
      %v471 = vmul.f32 %v461, %v467
      %v472 = vmul.f32 %v458, %v468
      %v473 = vmul.f32 %v462, %v467
      %v474 = vmul.f32 %v459, %v468
      %v475 = vmul.f32 %v463, %v467
      %v476 = vmul.f32 %v460, %v468
      %s477 = scalar_lea.vmem %s1, 32
      %v478 = vld [vmem:[%s477] sm:$0xff]
      %v479 = vld [vmem:[%s477 + $0x8] sm:$0xff]
      %v481 = vsel %vm297, %v478, 0
      %v484 = vsel %vm297, %v479, 0
      %486 = vmatpush.msra.mxu0 0.0
      %487 = vmatpush.msra.mxu0 0.0
      %488 = vmatpush.msra.mxu0 0.0
      %489 = vmatpush.msra.mxu0 0.0
      %490 = vmatpush.msra.mxu0 0.0
      %491 = vmatpush.msra.mxu0 0.0
      %492 = vmatpush.msra.mxu0 0.0
      %493 = vmatpush.msra.mxu0 0.0
      %494 = vmatpush.msra.mxu0 0.0
      %495 = vmatpush.msra.mxu0 0.0
      %496 = vmatpush.msra.mxu0 0.0
      %497 = vmatpush.msra.mxu0 0.0
      %498 = vmatpush.msra.mxu0 0.0
      %499 = vmatpush.msra.mxu0 %v475
      %500 = vmatpush.msra.mxu0 %v473
      %501 = vmatpush.msra.mxu0 %v471
      %502 = vmatmul.f32.gmra.mxu0 %v481
      %v503 = vpop.f32.mrf.mxu0
      %v504 = vadd.f32 0.0, %v503
      %505 = vmatmul.f32.gmra.mxu0 %v484
      %v506 = vpop.f32.mrf.mxu0
      %v507 = vadd.f32 0.0, %v506
      %508 = vdwg.mxu0
      %509 = vmatpush.msra.mxu0 0.0
      %510 = vmatpush.msra.mxu0 0.0
      %511 = vmatpush.msra.mxu0 0.0
      %512 = vmatpush.msra.mxu0 0.0
      %513 = vmatpush.msra.mxu0 0.0
      %514 = vmatpush.msra.mxu0 0.0
      %515 = vmatpush.msra.mxu0 0.0
      %516 = vmatpush.msra.mxu0 0.0
      %517 = vmatpush.msra.mxu0 0.0
      %518 = vmatpush.msra.mxu0 0.0
      %519 = vmatpush.msra.mxu0 0.0
      %520 = vmatpush.msra.mxu0 0.0
      %521 = vmatpush.msra.mxu0 0.0
      %522 = vmatpush.msra.mxu0 %v476
      %523 = vmatpush.msra.mxu0 %v474
      %524 = vmatpush.msra.mxu0 %v472
      %525 = vmatmul.f32.gmra.mxu0 %v481
      %v526 = vpop.f32.mrf.mxu0
      %v527 = vadd.f32 0.0, %v526
      %528 = vmatmul.f32.gmra.mxu0 %v484
      %v529 = vpop.f32.mrf.mxu0
      %v530 = vadd.f32 0.0, %v529
      %531 = vdwg.mxu0
      %v532 = vadd.f32 %v441, %v504
      %v533 = vadd.f32 %v442, %v527
      %v534 = vadd.f32 %v443, %v507
      %v535 = vadd.f32 %v444, %v530
      %536 = vrot.lane.b32.xlu0 %v252, 31
      %v537 = vpop.permute.xlu0 %536
      %538 = vrot.lane.b32.xlu0 %v254, 31
      %v539 = vpop.permute.xlu0 %538
      %540 = vrot.lane.b32.xlu0 %v256, 31
      %v541 = vpop.permute.xlu0 %540
      %542 = vrot.lane.b32.xlu0 %v253, 31
      %v543 = vpop.permute.xlu0 %542
      %544 = vrot.lane.b32.xlu0 %v255, 31
      %v545 = vpop.permute.xlu0 %544
      %546 = vrot.lane.b32.xlu0 %v257, 31
      %v547 = vpop.permute.xlu0 %546
      %vm548 = vcmp.lt.s32.totalorder %v275, 31
      %v549 = vsel %vm548, %v537, %v543
      %v550 = vsel %vm548, %v539, %v545
      %v551 = vsel %vm548, %v541, %v547
      %v552 = vsel %vm548, %v543, %v537
      %v553 = vsel %vm548, %v545, %v539
      %v554 = vsel %vm548, %v547, %v541
      %s555 = scalar_lea.vmem %s3, 3
      %v556 = vld [vmem:[%s555] ss:$8 sm:$0x3]
      %v558 = vperm.slane %v556, 0
      %v559 = vperm.slane %v556, 1
      %v562 = vmul.f32 %v552, %v558
      %v563 = vmul.f32 %v549, %v559
      %v564 = vmul.f32 %v553, %v558
      %v565 = vmul.f32 %v550, %v559
      %v566 = vmul.f32 %v554, %v558
      %v567 = vmul.f32 %v551, %v559
      %s568 = scalar_lea.vmem %s1, 48
      %v569 = vld [vmem:[%s568] sm:$0xff]
      %v570 = vld [vmem:[%s568 + $0x8] sm:$0xff]
      %v572 = vsel %vm297, %v569, 0
      %v575 = vsel %vm297, %v570, 0
      %577 = vmatpush.msra.mxu0 0.0
      %578 = vmatpush.msra.mxu0 0.0
      %579 = vmatpush.msra.mxu0 0.0
      %580 = vmatpush.msra.mxu0 0.0
      %581 = vmatpush.msra.mxu0 0.0
      %582 = vmatpush.msra.mxu0 0.0
      %583 = vmatpush.msra.mxu0 0.0
      %584 = vmatpush.msra.mxu0 0.0
      %585 = vmatpush.msra.mxu0 0.0
      %586 = vmatpush.msra.mxu0 0.0
      %587 = vmatpush.msra.mxu0 0.0
      %588 = vmatpush.msra.mxu0 0.0
      %589 = vmatpush.msra.mxu0 0.0
      %590 = vmatpush.msra.mxu0 %v566
      %591 = vmatpush.msra.mxu0 %v564
      %592 = vmatpush.msra.mxu0 %v562
      %593 = vmatmul.f32.gmra.mxu0 %v572
      %v594 = vpop.f32.mrf.mxu0
      %v595 = vadd.f32 0.0, %v594
      %596 = vmatmul.f32.gmra.mxu0 %v575
      %v597 = vpop.f32.mrf.mxu0
      %v598 = vadd.f32 0.0, %v597
      %599 = vdwg.mxu0
      %600 = vmatpush.msra.mxu0 0.0
      %601 = vmatpush.msra.mxu0 0.0
      %602 = vmatpush.msra.mxu0 0.0
      %603 = vmatpush.msra.mxu0 0.0
      %604 = vmatpush.msra.mxu0 0.0
      %605 = vmatpush.msra.mxu0 0.0
      %606 = vmatpush.msra.mxu0 0.0
      %607 = vmatpush.msra.mxu0 0.0
      %608 = vmatpush.msra.mxu0 0.0
      %609 = vmatpush.msra.mxu0 0.0
      %610 = vmatpush.msra.mxu0 0.0
      %611 = vmatpush.msra.mxu0 0.0
      %612 = vmatpush.msra.mxu0 0.0
      %613 = vmatpush.msra.mxu0 %v567
      %614 = vmatpush.msra.mxu0 %v565
      %615 = vmatpush.msra.mxu0 %v563
      %616 = vmatmul.f32.gmra.mxu0 %v572
      %v617 = vpop.f32.mrf.mxu0
      %v618 = vadd.f32 0.0, %v617
      %619 = vmatmul.f32.gmra.mxu0 %v575
      %v620 = vpop.f32.mrf.mxu0
      %v621 = vadd.f32 0.0, %v620
      %622 = vdwg.mxu0
      %v623 = vadd.f32 %v532, %v595
      %v624 = vadd.f32 %v533, %v618
      %v625 = vadd.f32 %v534, %v598
      %v626 = vadd.f32 %v535, %v621
      %627 = vrot.lane.b32.xlu0 %v252, 30
      %v628 = vpop.permute.xlu0 %627
      %629 = vrot.lane.b32.xlu0 %v254, 30
      %v630 = vpop.permute.xlu0 %629
      %631 = vrot.lane.b32.xlu0 %v256, 30
      %v632 = vpop.permute.xlu0 %631
      %633 = vrot.lane.b32.xlu0 %v253, 30
      %v634 = vpop.permute.xlu0 %633
      %635 = vrot.lane.b32.xlu0 %v255, 30
      %v636 = vpop.permute.xlu0 %635
      %637 = vrot.lane.b32.xlu0 %v257, 30
      %v638 = vpop.permute.xlu0 %637
      %vm639 = vcmp.lt.s32.totalorder %v275, 30
      %v640 = vsel %vm639, %v628, %v634
      %v641 = vsel %vm639, %v630, %v636
      %v642 = vsel %vm639, %v632, %v638
      %v643 = vsel %vm639, %v634, %v628
      %v644 = vsel %vm639, %v636, %v630
      %v645 = vsel %vm639, %v638, %v632
      %s646 = scalar_lea.vmem %s3, 4
      %v647 = vld [vmem:[%s646] ss:$8 sm:$0x3]
      %v649 = vperm.slane %v647, 0
      %v650 = vperm.slane %v647, 1
      %v653 = vmul.f32 %v643, %v649
      %v654 = vmul.f32 %v640, %v650
      %v655 = vmul.f32 %v644, %v649
      %v656 = vmul.f32 %v641, %v650
      %v657 = vmul.f32 %v645, %v649
      %v658 = vmul.f32 %v642, %v650
      %s659 = scalar_lea.vmem %s1, 64
      %v660 = vld [vmem:[%s659] sm:$0xff]
      %v661 = vld [vmem:[%s659 + $0x8] sm:$0xff]
      %v663 = vsel %vm297, %v660, 0
      %v666 = vsel %vm297, %v661, 0
      %668 = vmatpush.msra.mxu0 0.0
      %669 = vmatpush.msra.mxu0 0.0
      %670 = vmatpush.msra.mxu0 0.0
      %671 = vmatpush.msra.mxu0 0.0
      %672 = vmatpush.msra.mxu0 0.0
      %673 = vmatpush.msra.mxu0 0.0
      %674 = vmatpush.msra.mxu0 0.0
      %675 = vmatpush.msra.mxu0 0.0
      %676 = vmatpush.msra.mxu0 0.0
      %677 = vmatpush.msra.mxu0 0.0
      %678 = vmatpush.msra.mxu0 0.0
      %679 = vmatpush.msra.mxu0 0.0
      %680 = vmatpush.msra.mxu0 0.0
      %681 = vmatpush.msra.mxu0 %v657
      %682 = vmatpush.msra.mxu0 %v655
      %683 = vmatpush.msra.mxu0 %v653
      %684 = vmatmul.f32.gmra.mxu0 %v663
      %v685 = vpop.f32.mrf.mxu0
      %v686 = vadd.f32 0.0, %v685
      %687 = vmatmul.f32.gmra.mxu0 %v666
      %v688 = vpop.f32.mrf.mxu0
      %v689 = vadd.f32 0.0, %v688
      %690 = vdwg.mxu0
      %691 = vmatpush.msra.mxu0 0.0
      %692 = vmatpush.msra.mxu0 0.0
      %693 = vmatpush.msra.mxu0 0.0
      %694 = vmatpush.msra.mxu0 0.0
      %695 = vmatpush.msra.mxu0 0.0
      %696 = vmatpush.msra.mxu0 0.0
      %697 = vmatpush.msra.mxu0 0.0
      %698 = vmatpush.msra.mxu0 0.0
      %699 = vmatpush.msra.mxu0 0.0
      %700 = vmatpush.msra.mxu0 0.0
      %701 = vmatpush.msra.mxu0 0.0
      %702 = vmatpush.msra.mxu0 0.0
      %703 = vmatpush.msra.mxu0 0.0
      %704 = vmatpush.msra.mxu0 %v658
      %705 = vmatpush.msra.mxu0 %v656
      %706 = vmatpush.msra.mxu0 %v654
      %707 = vmatmul.f32.gmra.mxu0 %v663
      %v708 = vpop.f32.mrf.mxu0
      %v709 = vadd.f32 0.0, %v708
      %710 = vmatmul.f32.gmra.mxu0 %v666
      %v711 = vpop.f32.mrf.mxu0
      %v712 = vadd.f32 0.0, %v711
      %713 = vdwg.mxu0
      %v714 = vadd.f32 %v623, %v686
      %v715 = vadd.f32 %v624, %v709
      %v716 = vadd.f32 %v625, %v689
      %v717 = vadd.f32 %v626, %v712
      %718 = vrot.lane.b32.xlu0 %v252, 18
      %v719 = vpop.permute.xlu0 %718
      %720 = vrot.lane.b32.xlu0 %v254, 18
      %v721 = vpop.permute.xlu0 %720
      %722 = vrot.lane.b32.xlu0 %v256, 18
      %v723 = vpop.permute.xlu0 %722
      %724 = vrot.lane.b32.xlu0 %v253, 18
      %v725 = vpop.permute.xlu0 %724
      %726 = vrot.lane.b32.xlu0 %v255, 18
      %v727 = vpop.permute.xlu0 %726
      %728 = vrot.lane.b32.xlu0 %v257, 18
      %v729 = vpop.permute.xlu0 %728
      %vm730 = vcmp.lt.s32.totalorder %v275, 18
      %v731 = vsel %vm730, %v719, %v725
      %v732 = vsel %vm730, %v721, %v727
      %v733 = vsel %vm730, %v723, %v729
      %v734 = vsel %vm730, %v725, %v719
      %v735 = vsel %vm730, %v727, %v721
      %v736 = vsel %vm730, %v729, %v723
      %s737 = scalar_lea.vmem %s3, 5
      %v738 = vld [vmem:[%s737] ss:$8 sm:$0x3]
      %v740 = vperm.slane %v738, 0
      %v741 = vperm.slane %v738, 1
      %v744 = vmul.f32 %v734, %v740
      %v745 = vmul.f32 %v731, %v741
      %v746 = vmul.f32 %v735, %v740
      %v747 = vmul.f32 %v732, %v741
      %v748 = vmul.f32 %v736, %v740
      %v749 = vmul.f32 %v733, %v741
      %s750 = scalar_lea.vmem %s1, 80
      %v751 = vld [vmem:[%s750] sm:$0xff]
      %v752 = vld [vmem:[%s750 + $0x8] sm:$0xff]
      %v754 = vsel %vm297, %v751, 0
      %v757 = vsel %vm297, %v752, 0
      %759 = vmatpush.msra.mxu0 0.0
      %760 = vmatpush.msra.mxu0 0.0
      %761 = vmatpush.msra.mxu0 0.0
      %762 = vmatpush.msra.mxu0 0.0
      %763 = vmatpush.msra.mxu0 0.0
      %764 = vmatpush.msra.mxu0 0.0
      %765 = vmatpush.msra.mxu0 0.0
      %766 = vmatpush.msra.mxu0 0.0
      %767 = vmatpush.msra.mxu0 0.0
      %768 = vmatpush.msra.mxu0 0.0
      %769 = vmatpush.msra.mxu0 0.0
      %770 = vmatpush.msra.mxu0 0.0
      %771 = vmatpush.msra.mxu0 0.0
      %772 = vmatpush.msra.mxu0 %v748
      %773 = vmatpush.msra.mxu0 %v746
      %774 = vmatpush.msra.mxu0 %v744
      %775 = vmatmul.f32.gmra.mxu0 %v754
      %v776 = vpop.f32.mrf.mxu0
      %v777 = vadd.f32 0.0, %v776
      %778 = vmatmul.f32.gmra.mxu0 %v757
      %v779 = vpop.f32.mrf.mxu0
      %v780 = vadd.f32 0.0, %v779
      %781 = vdwg.mxu0
      %782 = vmatpush.msra.mxu0 0.0
      %783 = vmatpush.msra.mxu0 0.0
      %784 = vmatpush.msra.mxu0 0.0
      %785 = vmatpush.msra.mxu0 0.0
      %786 = vmatpush.msra.mxu0 0.0
      %787 = vmatpush.msra.mxu0 0.0
      %788 = vmatpush.msra.mxu0 0.0
      %789 = vmatpush.msra.mxu0 0.0
      %790 = vmatpush.msra.mxu0 0.0
      %791 = vmatpush.msra.mxu0 0.0
      %792 = vmatpush.msra.mxu0 0.0
      %793 = vmatpush.msra.mxu0 0.0
      %794 = vmatpush.msra.mxu0 0.0
      %795 = vmatpush.msra.mxu0 %v749
      %796 = vmatpush.msra.mxu0 %v747
      %797 = vmatpush.msra.mxu0 %v745
      %798 = vmatmul.f32.gmra.mxu0 %v754
      %v799 = vpop.f32.mrf.mxu0
      %v800 = vadd.f32 0.0, %v799
      %801 = vmatmul.f32.gmra.mxu0 %v757
      %v802 = vpop.f32.mrf.mxu0
      %v803 = vadd.f32 0.0, %v802
      %804 = vdwg.mxu0
      %v805 = vadd.f32 %v714, %v777
      %v806 = vadd.f32 %v715, %v800
      %v807 = vadd.f32 %v716, %v780
      %v808 = vadd.f32 %v717, %v803
      %809 = vrot.lane.b32.xlu0 %v252, 17
      %v810 = vpop.permute.xlu0 %809
      %811 = vrot.lane.b32.xlu0 %v254, 17
      %v812 = vpop.permute.xlu0 %811
      %813 = vrot.lane.b32.xlu0 %v256, 17
      %v814 = vpop.permute.xlu0 %813
      %815 = vrot.lane.b32.xlu0 %v253, 17
      %v816 = vpop.permute.xlu0 %815
      %817 = vrot.lane.b32.xlu0 %v255, 17
      %v818 = vpop.permute.xlu0 %817
      %819 = vrot.lane.b32.xlu0 %v257, 17
      %v820 = vpop.permute.xlu0 %819
      %vm821 = vcmp.lt.s32.totalorder %v275, 17
      %v822 = vsel %vm821, %v810, %v816
      %v823 = vsel %vm821, %v812, %v818
      %v824 = vsel %vm821, %v814, %v820
      %v825 = vsel %vm821, %v816, %v810
      %v826 = vsel %vm821, %v818, %v812
      %v827 = vsel %vm821, %v820, %v814
      %s828 = scalar_lea.vmem %s3, 6
      %v829 = vld [vmem:[%s828] ss:$8 sm:$0x3]
      %v831 = vperm.slane %v829, 0
      %v832 = vperm.slane %v829, 1
      %v835 = vmul.f32 %v825, %v831
      %v836 = vmul.f32 %v822, %v832
      %v837 = vmul.f32 %v826, %v831
      %v838 = vmul.f32 %v823, %v832
      %v839 = vmul.f32 %v827, %v831
      %v840 = vmul.f32 %v824, %v832
      %s841 = scalar_lea.vmem %s1, 96
      %v842 = vld [vmem:[%s841] sm:$0xff]
      %v843 = vld [vmem:[%s841 + $0x8] sm:$0xff]
      %v845 = vsel %vm297, %v842, 0
      %v848 = vsel %vm297, %v843, 0
      %850 = vmatpush.msra.mxu0 0.0
      %851 = vmatpush.msra.mxu0 0.0
      %852 = vmatpush.msra.mxu0 0.0
      %853 = vmatpush.msra.mxu0 0.0
      %854 = vmatpush.msra.mxu0 0.0
      %855 = vmatpush.msra.mxu0 0.0
      %856 = vmatpush.msra.mxu0 0.0
      %857 = vmatpush.msra.mxu0 0.0
      %858 = vmatpush.msra.mxu0 0.0
      %859 = vmatpush.msra.mxu0 0.0
      %860 = vmatpush.msra.mxu0 0.0
      %861 = vmatpush.msra.mxu0 0.0
      %862 = vmatpush.msra.mxu0 0.0
      %863 = vmatpush.msra.mxu0 %v839
      %864 = vmatpush.msra.mxu0 %v837
      %865 = vmatpush.msra.mxu0 %v835
      %866 = vmatmul.f32.gmra.mxu0 %v845
      %v867 = vpop.f32.mrf.mxu0
      %v868 = vadd.f32 0.0, %v867
      %869 = vmatmul.f32.gmra.mxu0 %v848
      %v870 = vpop.f32.mrf.mxu0
      %v871 = vadd.f32 0.0, %v870
      %872 = vdwg.mxu0
      %873 = vmatpush.msra.mxu0 0.0
      %874 = vmatpush.msra.mxu0 0.0
      %875 = vmatpush.msra.mxu0 0.0
      %876 = vmatpush.msra.mxu0 0.0
      %877 = vmatpush.msra.mxu0 0.0
      %878 = vmatpush.msra.mxu0 0.0
      %879 = vmatpush.msra.mxu0 0.0
      %880 = vmatpush.msra.mxu0 0.0
      %881 = vmatpush.msra.mxu0 0.0
      %882 = vmatpush.msra.mxu0 0.0
      %883 = vmatpush.msra.mxu0 0.0
      %884 = vmatpush.msra.mxu0 0.0
      %885 = vmatpush.msra.mxu0 0.0
      %886 = vmatpush.msra.mxu0 %v840
      %887 = vmatpush.msra.mxu0 %v838
      %888 = vmatpush.msra.mxu0 %v836
      %889 = vmatmul.f32.gmra.mxu0 %v845
      %v890 = vpop.f32.mrf.mxu0
      %v891 = vadd.f32 0.0, %v890
      %892 = vmatmul.f32.gmra.mxu0 %v848
      %v893 = vpop.f32.mrf.mxu0
      %v894 = vadd.f32 0.0, %v893
      %895 = vdwg.mxu0
      %v896 = vadd.f32 %v805, %v868
      %v897 = vadd.f32 %v806, %v891
      %v898 = vadd.f32 %v807, %v871
      %v899 = vadd.f32 %v808, %v894
      %900 = vrot.lane.b32.xlu0 %v252, 16
      %v901 = vpop.permute.xlu0 %900
      %902 = vrot.lane.b32.xlu0 %v254, 16
      %v903 = vpop.permute.xlu0 %902
      %904 = vrot.lane.b32.xlu0 %v256, 16
      %v905 = vpop.permute.xlu0 %904
      %906 = vrot.lane.b32.xlu0 %v253, 16
      %v907 = vpop.permute.xlu0 %906
      %908 = vrot.lane.b32.xlu0 %v255, 16
      %v909 = vpop.permute.xlu0 %908
      %910 = vrot.lane.b32.xlu0 %v257, 16
      %v911 = vpop.permute.xlu0 %910
      %vm912 = vcmp.lt.s32.totalorder %v275, 16
      %v913 = vsel %vm912, %v901, %v907
      %v914 = vsel %vm912, %v903, %v909
      %v915 = vsel %vm912, %v905, %v911
      %v916 = vsel %vm912, %v907, %v901
      %v917 = vsel %vm912, %v909, %v903
      %v918 = vsel %vm912, %v911, %v905
      %s919 = scalar_lea.vmem %s3, 7
      %v920 = vld [vmem:[%s919] ss:$8 sm:$0x3]
      %v922 = vperm.slane %v920, 0
      %v923 = vperm.slane %v920, 1
      %v926 = vmul.f32 %v916, %v922
      %v927 = vmul.f32 %v913, %v923
      %v928 = vmul.f32 %v917, %v922
      %v929 = vmul.f32 %v914, %v923
      %v930 = vmul.f32 %v918, %v922
      %v931 = vmul.f32 %v915, %v923
      %s932 = scalar_lea.vmem %s1, 112
      %v933 = vld [vmem:[%s932] sm:$0xff]
      %v934 = vld [vmem:[%s932 + $0x8] sm:$0xff]
      %v936 = vsel %vm297, %v933, 0
      %v939 = vsel %vm297, %v934, 0
      %941 = vmatpush.msra.mxu0 0.0
      %942 = vmatpush.msra.mxu0 0.0
      %943 = vmatpush.msra.mxu0 0.0
      %944 = vmatpush.msra.mxu0 0.0
      %945 = vmatpush.msra.mxu0 0.0
      %946 = vmatpush.msra.mxu0 0.0
      %947 = vmatpush.msra.mxu0 0.0
      %948 = vmatpush.msra.mxu0 0.0
      %949 = vmatpush.msra.mxu0 0.0
      %950 = vmatpush.msra.mxu0 0.0
      %951 = vmatpush.msra.mxu0 0.0
      %952 = vmatpush.msra.mxu0 0.0
      %953 = vmatpush.msra.mxu0 0.0
      %954 = vmatpush.msra.mxu0 %v930
      %955 = vmatpush.msra.mxu0 %v928
      %956 = vmatpush.msra.mxu0 %v926
      %957 = vmatmul.f32.gmra.mxu0 %v936
      %v958 = vpop.f32.mrf.mxu0
      %v959 = vadd.f32 0.0, %v958
      %960 = vmatmul.f32.gmra.mxu0 %v939
      %v961 = vpop.f32.mrf.mxu0
      %v962 = vadd.f32 0.0, %v961
      %963 = vdwg.mxu0
      %964 = vmatpush.msra.mxu0 0.0
      %965 = vmatpush.msra.mxu0 0.0
      %966 = vmatpush.msra.mxu0 0.0
      %967 = vmatpush.msra.mxu0 0.0
      %968 = vmatpush.msra.mxu0 0.0
      %969 = vmatpush.msra.mxu0 0.0
      %970 = vmatpush.msra.mxu0 0.0
      %971 = vmatpush.msra.mxu0 0.0
      %972 = vmatpush.msra.mxu0 0.0
      %973 = vmatpush.msra.mxu0 0.0
      %974 = vmatpush.msra.mxu0 0.0
      %975 = vmatpush.msra.mxu0 0.0
      %976 = vmatpush.msra.mxu0 0.0
      %977 = vmatpush.msra.mxu0 %v931
      %978 = vmatpush.msra.mxu0 %v929
      %979 = vmatpush.msra.mxu0 %v927
      %980 = vmatmul.f32.gmra.mxu0 %v936
      %v981 = vpop.f32.mrf.mxu0
      %v982 = vadd.f32 0.0, %v981
      %983 = vmatmul.f32.gmra.mxu0 %v939
      %v984 = vpop.f32.mrf.mxu0
      %v985 = vadd.f32 0.0, %v984
      %986 = vdwg.mxu0
      %v987 = vadd.f32 %v896, %v959
      %v988 = vadd.f32 %v897, %v982
      %v989 = vadd.f32 %v898, %v962
      %v990 = vadd.f32 %v899, %v985
      %991 = vrot.lane.b32.xlu0 %v252, 15
      %v992 = vpop.permute.xlu0 %991
      %993 = vrot.lane.b32.xlu0 %v254, 15
      %v994 = vpop.permute.xlu0 %993
      %995 = vrot.lane.b32.xlu0 %v256, 15
      %v996 = vpop.permute.xlu0 %995
      %997 = vrot.lane.b32.xlu0 %v253, 15
      %v998 = vpop.permute.xlu0 %997
      %999 = vrot.lane.b32.xlu0 %v255, 15
      %v1000 = vpop.permute.xlu0 %999
      %1001 = vrot.lane.b32.xlu0 %v257, 15
      %v1002 = vpop.permute.xlu0 %1001
      %vm1003 = vcmp.lt.s32.totalorder %v275, 15
      %v1004 = vsel %vm1003, %v992, %v998
      %v1005 = vsel %vm1003, %v994, %v1000
      %v1006 = vsel %vm1003, %v996, %v1002
      %v1007 = vsel %vm1003, %v998, %v992
      %v1008 = vsel %vm1003, %v1000, %v994
      %v1009 = vsel %vm1003, %v1002, %v996
      %s1010 = scalar_lea.vmem %s3, 16
      %v1011 = vld [vmem:[%s1010] ss:$8 sm:$0x3]
      %v1013 = vperm.slane %v1011, 0
      %v1014 = vperm.slane %v1011, 1
      %v1017 = vmul.f32 %v1007, %v1013
      %v1018 = vmul.f32 %v1004, %v1014
      %v1019 = vmul.f32 %v1008, %v1013
      %v1020 = vmul.f32 %v1005, %v1014
      %v1021 = vmul.f32 %v1009, %v1013
      %v1022 = vmul.f32 %v1006, %v1014
      %s1023 = scalar_lea.vmem %s1, 128
      %v1024 = vld [vmem:[%s1023] sm:$0xff]
      %v1025 = vld [vmem:[%s1023 + $0x8] sm:$0xff]
      %v1027 = vsel %vm297, %v1024, 0
      %v1030 = vsel %vm297, %v1025, 0
      %1032 = vmatpush.msra.mxu0 0.0
      %1033 = vmatpush.msra.mxu0 0.0
      %1034 = vmatpush.msra.mxu0 0.0
      %1035 = vmatpush.msra.mxu0 0.0
      %1036 = vmatpush.msra.mxu0 0.0
      %1037 = vmatpush.msra.mxu0 0.0
      %1038 = vmatpush.msra.mxu0 0.0
      %1039 = vmatpush.msra.mxu0 0.0
      %1040 = vmatpush.msra.mxu0 0.0
      %1041 = vmatpush.msra.mxu0 0.0
      %1042 = vmatpush.msra.mxu0 0.0
      %1043 = vmatpush.msra.mxu0 0.0
      %1044 = vmatpush.msra.mxu0 0.0
      %1045 = vmatpush.msra.mxu0 %v1021
      %1046 = vmatpush.msra.mxu0 %v1019
      %1047 = vmatpush.msra.mxu0 %v1017
      %1048 = vmatmul.f32.gmra.mxu0 %v1027
      %v1049 = vpop.f32.mrf.mxu0
      %v1050 = vadd.f32 0.0, %v1049
      %1051 = vmatmul.f32.gmra.mxu0 %v1030
      %v1052 = vpop.f32.mrf.mxu0
      %v1053 = vadd.f32 0.0, %v1052
      %1054 = vdwg.mxu0
      %1055 = vmatpush.msra.mxu0 0.0
      %1056 = vmatpush.msra.mxu0 0.0
      %1057 = vmatpush.msra.mxu0 0.0
      %1058 = vmatpush.msra.mxu0 0.0
      %1059 = vmatpush.msra.mxu0 0.0
      %1060 = vmatpush.msra.mxu0 0.0
      %1061 = vmatpush.msra.mxu0 0.0
      %1062 = vmatpush.msra.mxu0 0.0
      %1063 = vmatpush.msra.mxu0 0.0
      %1064 = vmatpush.msra.mxu0 0.0
      %1065 = vmatpush.msra.mxu0 0.0
      %1066 = vmatpush.msra.mxu0 0.0
      %1067 = vmatpush.msra.mxu0 0.0
      %1068 = vmatpush.msra.mxu0 %v1022
      %1069 = vmatpush.msra.mxu0 %v1020
      %1070 = vmatpush.msra.mxu0 %v1018
      %1071 = vmatmul.f32.gmra.mxu0 %v1027
      %v1072 = vpop.f32.mrf.mxu0
      %v1073 = vadd.f32 0.0, %v1072
      %1074 = vmatmul.f32.gmra.mxu0 %v1030
      %v1075 = vpop.f32.mrf.mxu0
      %v1076 = vadd.f32 0.0, %v1075
      %1077 = vdwg.mxu0
      %v1078 = vadd.f32 %v987, %v1050
      %v1079 = vadd.f32 %v988, %v1073
      %v1080 = vadd.f32 %v989, %v1053
      %v1081 = vadd.f32 %v990, %v1076
      %1082 = vrot.lane.b32.xlu0 %v252, 14
      %v1083 = vpop.permute.xlu0 %1082
      %1084 = vrot.lane.b32.xlu0 %v254, 14
      %v1085 = vpop.permute.xlu0 %1084
      %1086 = vrot.lane.b32.xlu0 %v256, 14
      %v1087 = vpop.permute.xlu0 %1086
      %1088 = vrot.lane.b32.xlu0 %v253, 14
      %v1089 = vpop.permute.xlu0 %1088
      %1090 = vrot.lane.b32.xlu0 %v255, 14
      %v1091 = vpop.permute.xlu0 %1090
      %1092 = vrot.lane.b32.xlu0 %v257, 14
      %v1093 = vpop.permute.xlu0 %1092
      %vm1094 = vcmp.lt.s32.totalorder %v275, 14
      %v1095 = vsel %vm1094, %v1083, %v1089
      %v1096 = vsel %vm1094, %v1085, %v1091
      %v1097 = vsel %vm1094, %v1087, %v1093
      %v1098 = vsel %vm1094, %v1089, %v1083
      %v1099 = vsel %vm1094, %v1091, %v1085
      %v1100 = vsel %vm1094, %v1093, %v1087
      %s1101 = scalar_lea.vmem %s3, 17
      %v1102 = vld [vmem:[%s1101] ss:$8 sm:$0x3]
      %v1104 = vperm.slane %v1102, 0
      %v1105 = vperm.slane %v1102, 1
      %v1108 = vmul.f32 %v1098, %v1104
      %v1109 = vmul.f32 %v1095, %v1105
      %v1110 = vmul.f32 %v1099, %v1104
      %v1111 = vmul.f32 %v1096, %v1105
      %v1112 = vmul.f32 %v1100, %v1104
      %v1113 = vmul.f32 %v1097, %v1105
      %s1114 = scalar_lea.vmem %s1, 144
      %v1115 = vld [vmem:[%s1114] sm:$0xff]
      %v1116 = vld [vmem:[%s1114 + $0x8] sm:$0xff]
      %v1118 = vsel %vm297, %v1115, 0
      %v1121 = vsel %vm297, %v1116, 0
      %1123 = vmatpush.msra.mxu0 0.0
      %1124 = vmatpush.msra.mxu0 0.0
      %1125 = vmatpush.msra.mxu0 0.0
      %1126 = vmatpush.msra.mxu0 0.0
      %1127 = vmatpush.msra.mxu0 0.0
      %1128 = vmatpush.msra.mxu0 0.0
      %1129 = vmatpush.msra.mxu0 0.0
      %1130 = vmatpush.msra.mxu0 0.0
      %1131 = vmatpush.msra.mxu0 0.0
      %1132 = vmatpush.msra.mxu0 0.0
      %1133 = vmatpush.msra.mxu0 0.0
      %1134 = vmatpush.msra.mxu0 0.0
      %1135 = vmatpush.msra.mxu0 0.0
      %1136 = vmatpush.msra.mxu0 %v1112
      %1137 = vmatpush.msra.mxu0 %v1110
      %1138 = vmatpush.msra.mxu0 %v1108
      %1139 = vmatmul.f32.gmra.mxu0 %v1118
      %v1140 = vpop.f32.mrf.mxu0
      %v1141 = vadd.f32 0.0, %v1140
      %1142 = vmatmul.f32.gmra.mxu0 %v1121
      %v1143 = vpop.f32.mrf.mxu0
      %v1144 = vadd.f32 0.0, %v1143
      %1145 = vdwg.mxu0
      %1146 = vmatpush.msra.mxu0 0.0
      %1147 = vmatpush.msra.mxu0 0.0
      %1148 = vmatpush.msra.mxu0 0.0
      %1149 = vmatpush.msra.mxu0 0.0
      %1150 = vmatpush.msra.mxu0 0.0
      %1151 = vmatpush.msra.mxu0 0.0
      %1152 = vmatpush.msra.mxu0 0.0
      %1153 = vmatpush.msra.mxu0 0.0
      %1154 = vmatpush.msra.mxu0 0.0
      %1155 = vmatpush.msra.mxu0 0.0
      %1156 = vmatpush.msra.mxu0 0.0
      %1157 = vmatpush.msra.mxu0 0.0
      %1158 = vmatpush.msra.mxu0 0.0
      %1159 = vmatpush.msra.mxu0 %v1113
      %1160 = vmatpush.msra.mxu0 %v1111
      %1161 = vmatpush.msra.mxu0 %v1109
      %1162 = vmatmul.f32.gmra.mxu0 %v1118
      %v1163 = vpop.f32.mrf.mxu0
      %v1164 = vadd.f32 0.0, %v1163
      %1165 = vmatmul.f32.gmra.mxu0 %v1121
      %v1166 = vpop.f32.mrf.mxu0
      %v1167 = vadd.f32 0.0, %v1166
      %1168 = vdwg.mxu0
      %v1169 = vadd.f32 %v1078, %v1141
      %v1170 = vadd.f32 %v1079, %v1164
      %v1171 = vadd.f32 %v1080, %v1144
      %v1172 = vadd.f32 %v1081, %v1167
      %1173 = vrot.lane.b32.xlu0 %v252, 2
      %v1174 = vpop.permute.xlu0 %1173
      %1175 = vrot.lane.b32.xlu0 %v254, 2
      %v1176 = vpop.permute.xlu0 %1175
      %1177 = vrot.lane.b32.xlu0 %v256, 2
      %v1178 = vpop.permute.xlu0 %1177
      %1179 = vrot.lane.b32.xlu0 %v253, 2
      %v1180 = vpop.permute.xlu0 %1179
      %1181 = vrot.lane.b32.xlu0 %v255, 2
      %v1182 = vpop.permute.xlu0 %1181
      %1183 = vrot.lane.b32.xlu0 %v257, 2
      %v1184 = vpop.permute.xlu0 %1183
      %vm1185 = vcmp.lt.s32.totalorder %v275, 2
      %v1186 = vsel %vm1185, %v1174, %v1180
      %v1187 = vsel %vm1185, %v1176, %v1182
      %v1188 = vsel %vm1185, %v1178, %v1184
      %v1189 = vsel %vm1185, %v1180, %v1174
      %v1190 = vsel %vm1185, %v1182, %v1176
      %v1191 = vsel %vm1185, %v1184, %v1178
      %s1192 = scalar_lea.vmem %s3, 18
      %v1193 = vld [vmem:[%s1192] ss:$8 sm:$0x3]
      %v1195 = vperm.slane %v1193, 0
      %v1196 = vperm.slane %v1193, 1
      %v1199 = vmul.f32 %v1189, %v1195
      %v1200 = vmul.f32 %v1186, %v1196
      %v1201 = vmul.f32 %v1190, %v1195
      %v1202 = vmul.f32 %v1187, %v1196
      %v1203 = vmul.f32 %v1191, %v1195
      %v1204 = vmul.f32 %v1188, %v1196
      %s1205 = scalar_lea.vmem %s1, 160
      %v1206 = vld [vmem:[%s1205] sm:$0xff]
      %v1207 = vld [vmem:[%s1205 + $0x8] sm:$0xff]
      %v1209 = vsel %vm297, %v1206, 0
      %v1212 = vsel %vm297, %v1207, 0
      %1214 = vmatpush.msra.mxu0 0.0
      %1215 = vmatpush.msra.mxu0 0.0
      %1216 = vmatpush.msra.mxu0 0.0
      %1217 = vmatpush.msra.mxu0 0.0
      %1218 = vmatpush.msra.mxu0 0.0
      %1219 = vmatpush.msra.mxu0 0.0
      %1220 = vmatpush.msra.mxu0 0.0
      %1221 = vmatpush.msra.mxu0 0.0
      %1222 = vmatpush.msra.mxu0 0.0
      %1223 = vmatpush.msra.mxu0 0.0
      %1224 = vmatpush.msra.mxu0 0.0
      %1225 = vmatpush.msra.mxu0 0.0
      %1226 = vmatpush.msra.mxu0 0.0
      %1227 = vmatpush.msra.mxu0 %v1203
      %1228 = vmatpush.msra.mxu0 %v1201
      %1229 = vmatpush.msra.mxu0 %v1199
      %1230 = vmatmul.f32.gmra.mxu0 %v1209
      %v1231 = vpop.f32.mrf.mxu0
      %v1232 = vadd.f32 0.0, %v1231
      %1233 = vmatmul.f32.gmra.mxu0 %v1212
      %v1234 = vpop.f32.mrf.mxu0
      %v1235 = vadd.f32 0.0, %v1234
      %1236 = vdwg.mxu0
      %1237 = vmatpush.msra.mxu0 0.0
      %1238 = vmatpush.msra.mxu0 0.0
      %1239 = vmatpush.msra.mxu0 0.0
      %1240 = vmatpush.msra.mxu0 0.0
      %1241 = vmatpush.msra.mxu0 0.0
      %1242 = vmatpush.msra.mxu0 0.0
      %1243 = vmatpush.msra.mxu0 0.0
      %1244 = vmatpush.msra.mxu0 0.0
      %1245 = vmatpush.msra.mxu0 0.0
      %1246 = vmatpush.msra.mxu0 0.0
      %1247 = vmatpush.msra.mxu0 0.0
      %1248 = vmatpush.msra.mxu0 0.0
      %1249 = vmatpush.msra.mxu0 0.0
      %1250 = vmatpush.msra.mxu0 %v1204
      %1251 = vmatpush.msra.mxu0 %v1202
      %1252 = vmatpush.msra.mxu0 %v1200
      %1253 = vmatmul.f32.gmra.mxu0 %v1209
      %v1254 = vpop.f32.mrf.mxu0
      %v1255 = vadd.f32 0.0, %v1254
      %1256 = vmatmul.f32.gmra.mxu0 %v1212
      %v1257 = vpop.f32.mrf.mxu0
      %v1258 = vadd.f32 0.0, %v1257
      %1259 = vdwg.mxu0
      %v1260 = vadd.f32 %v1169, %v1232
      %v1261 = vadd.f32 %v1170, %v1255
      %v1262 = vadd.f32 %v1171, %v1235
      %v1263 = vadd.f32 %v1172, %v1258
      %1264 = vrot.lane.b32.xlu0 %v252, 1
      %v1265 = vpop.permute.xlu0 %1264
      %1266 = vrot.lane.b32.xlu0 %v254, 1
      %v1267 = vpop.permute.xlu0 %1266
      %1268 = vrot.lane.b32.xlu0 %v256, 1
      %v1269 = vpop.permute.xlu0 %1268
      %1270 = vrot.lane.b32.xlu0 %v253, 1
      %v1271 = vpop.permute.xlu0 %1270
      %1272 = vrot.lane.b32.xlu0 %v255, 1
      %v1273 = vpop.permute.xlu0 %1272
      %1274 = vrot.lane.b32.xlu0 %v257, 1
      %v1275 = vpop.permute.xlu0 %1274
      %vm1276 = vcmp.lt.s32.totalorder %v275, 1
      %v1277 = vsel %vm1276, %v1265, %v1271
      %v1278 = vsel %vm1276, %v1267, %v1273
      %v1279 = vsel %vm1276, %v1269, %v1275
      %v1280 = vsel %vm1276, %v1271, %v1265
      %v1281 = vsel %vm1276, %v1273, %v1267
      %v1282 = vsel %vm1276, %v1275, %v1269
      %s1283 = scalar_lea.vmem %s3, 19
      %v1284 = vld [vmem:[%s1283] ss:$8 sm:$0x3]
      %v1286 = vperm.slane %v1284, 0
      %v1287 = vperm.slane %v1284, 1
      %v1290 = vmul.f32 %v1280, %v1286
      %v1291 = vmul.f32 %v1277, %v1287
      %v1292 = vmul.f32 %v1281, %v1286
      %v1293 = vmul.f32 %v1278, %v1287
      %v1294 = vmul.f32 %v1282, %v1286
      %v1295 = vmul.f32 %v1279, %v1287
      %s1296 = scalar_lea.vmem %s1, 176
      %v1297 = vld [vmem:[%s1296] sm:$0xff]
      %v1298 = vld [vmem:[%s1296 + $0x8] sm:$0xff]
      %v1300 = vsel %vm297, %v1297, 0
      %v1303 = vsel %vm297, %v1298, 0
      %1305 = vmatpush.msra.mxu0 0.0
      %1306 = vmatpush.msra.mxu0 0.0
      %1307 = vmatpush.msra.mxu0 0.0
      %1308 = vmatpush.msra.mxu0 0.0
      %1309 = vmatpush.msra.mxu0 0.0
      %1310 = vmatpush.msra.mxu0 0.0
      %1311 = vmatpush.msra.mxu0 0.0
      %1312 = vmatpush.msra.mxu0 0.0
      %1313 = vmatpush.msra.mxu0 0.0
      %1314 = vmatpush.msra.mxu0 0.0
      %1315 = vmatpush.msra.mxu0 0.0
      %1316 = vmatpush.msra.mxu0 0.0
      %1317 = vmatpush.msra.mxu0 0.0
      %1318 = vmatpush.msra.mxu0 %v1294
      %1319 = vmatpush.msra.mxu0 %v1292
      %1320 = vmatpush.msra.mxu0 %v1290
      %1321 = vmatmul.f32.gmra.mxu0 %v1300
      %v1322 = vpop.f32.mrf.mxu0
      %v1323 = vadd.f32 0.0, %v1322
      %1324 = vmatmul.f32.gmra.mxu0 %v1303
      %v1325 = vpop.f32.mrf.mxu0
      %v1326 = vadd.f32 0.0, %v1325
      %1327 = vdwg.mxu0
      %1328 = vmatpush.msra.mxu0 0.0
      %1329 = vmatpush.msra.mxu0 0.0
      %1330 = vmatpush.msra.mxu0 0.0
      %1331 = vmatpush.msra.mxu0 0.0
      %1332 = vmatpush.msra.mxu0 0.0
      %1333 = vmatpush.msra.mxu0 0.0
      %1334 = vmatpush.msra.mxu0 0.0
      %1335 = vmatpush.msra.mxu0 0.0
      %1336 = vmatpush.msra.mxu0 0.0
      %1337 = vmatpush.msra.mxu0 0.0
      %1338 = vmatpush.msra.mxu0 0.0
      %1339 = vmatpush.msra.mxu0 0.0
      %1340 = vmatpush.msra.mxu0 0.0
      %1341 = vmatpush.msra.mxu0 %v1295
      %1342 = vmatpush.msra.mxu0 %v1293
      %1343 = vmatpush.msra.mxu0 %v1291
      %1344 = vmatmul.f32.gmra.mxu0 %v1300
      %v1345 = vpop.f32.mrf.mxu0
      %v1346 = vadd.f32 0.0, %v1345
      %1347 = vmatmul.f32.gmra.mxu0 %v1303
      %v1348 = vpop.f32.mrf.mxu0
      %v1349 = vadd.f32 0.0, %v1348
      %1350 = vdwg.mxu0
      %v1351 = vadd.f32 %v1260, %v1323
      %v1352 = vadd.f32 %v1261, %v1346
      %v1353 = vadd.f32 %v1262, %v1326
      %v1354 = vadd.f32 %v1263, %v1349
      %s1355 = scalar_lea.vmem %s1, 192
      %v1356 = vld [vmem:[%s1355] sm:$0xff]
      %v1357 = vld [vmem:[%s1355 + $0x8] sm:$0xff]
      %v1359 = vsel %vm297, %v1356, 0
      %v1362 = vsel %vm297, %v1357, 0
      %1364 = vmatpush.msra.mxu0 0.0
      %1365 = vmatpush.msra.mxu0 0.0
      %1366 = vmatpush.msra.mxu0 0.0
      %1367 = vmatpush.msra.mxu0 0.0
      %1368 = vmatpush.msra.mxu0 0.0
      %1369 = vmatpush.msra.mxu0 0.0
      %1370 = vmatpush.msra.mxu0 0.0
      %1371 = vmatpush.msra.mxu0 0.0
      %1372 = vmatpush.msra.mxu0 0.0
      %1373 = vmatpush.msra.mxu0 0.0
      %1374 = vmatpush.msra.mxu0 0.0
      %1375 = vmatpush.msra.mxu0 0.0
      %1376 = vmatpush.msra.mxu0 0.0
      %1377 = vmatpush.msra.mxu0 %v256
      %1378 = vmatpush.msra.mxu0 %v254
      %1379 = vmatpush.msra.mxu0 %v252
      %1380 = vmatmul.f32.gmra.mxu0 %v1359
      %v1381 = vpop.f32.mrf.mxu0
      %v1382 = vadd.f32 0.0, %v1381
      %1383 = vmatmul.f32.gmra.mxu0 %v1362
      %v1384 = vpop.f32.mrf.mxu0
      %v1385 = vadd.f32 0.0, %v1384
      %1386 = vdwg.mxu0
      %1387 = vmatpush.msra.mxu0 0.0
      %1388 = vmatpush.msra.mxu0 0.0
      %1389 = vmatpush.msra.mxu0 0.0
      %1390 = vmatpush.msra.mxu0 0.0
      %1391 = vmatpush.msra.mxu0 0.0
      %1392 = vmatpush.msra.mxu0 0.0
      %1393 = vmatpush.msra.mxu0 0.0
      %1394 = vmatpush.msra.mxu0 0.0
      %1395 = vmatpush.msra.mxu0 0.0
      %1396 = vmatpush.msra.mxu0 0.0
      %1397 = vmatpush.msra.mxu0 0.0
      %1398 = vmatpush.msra.mxu0 0.0
      %1399 = vmatpush.msra.mxu0 0.0
      %1400 = vmatpush.msra.mxu0 %v257
      %1401 = vmatpush.msra.mxu0 %v255
      %1402 = vmatpush.msra.mxu0 %v253
      %1403 = vmatmul.f32.gmra.mxu0 %v1359
      %v1404 = vpop.f32.mrf.mxu0
      %v1405 = vadd.f32 0.0, %v1404
      %1406 = vmatmul.f32.gmra.mxu0 %v1362
      %v1407 = vpop.f32.mrf.mxu0
      %v1408 = vadd.f32 0.0, %v1407
      %1409 = vdwg.mxu0
      %v1410 = vadd.f32 %v1351, %v1382
      %v1411 = vadd.f32 %v1352, %v1405
      %v1412 = vadd.f32 %v1353, %v1385
      %v1413 = vadd.f32 %v1354, %v1408
      %1414 = vrot.lane.b32.xlu0 %v252, 127
      %v1415 = vpop.permute.xlu0 %1414
      %1416 = vrot.lane.b32.xlu0 %v254, 127
      %v1417 = vpop.permute.xlu0 %1416
      %1418 = vrot.lane.b32.xlu0 %v256, 127
      %v1419 = vpop.permute.xlu0 %1418
      %1420 = vrot.lane.b32.xlu0 %v253, 127
      %v1421 = vpop.permute.xlu0 %1420
      %1422 = vrot.lane.b32.xlu0 %v255, 127
      %v1423 = vpop.permute.xlu0 %1422
      %1424 = vrot.lane.b32.xlu0 %v257, 127
      %v1425 = vpop.permute.xlu0 %1424
      %vm1426 = vcmp.lt.s32.totalorder %v275, 127
      %v1427 = vsel %vm1426, %v1415, %v1421
      %v1428 = vsel %vm1426, %v1417, %v1423
      %v1429 = vsel %vm1426, %v1419, %v1425
      %v1430 = vsel %vm1426, %v1421, %v1415
      %v1431 = vsel %vm1426, %v1423, %v1417
      %v1432 = vsel %vm1426, %v1425, %v1419
      %s1433 = scalar_lea.vmem %s3, 21
      %v1434 = vld [vmem:[%s1433] ss:$8 sm:$0x3]
      %v1436 = vperm.slane %v1434, 0
      %v1437 = vperm.slane %v1434, 1
      %v1440 = vmul.f32 %v1427, %v1436
      %v1441 = vmul.f32 %v1430, %v1437
      %v1442 = vmul.f32 %v1428, %v1436
      %v1443 = vmul.f32 %v1431, %v1437
      %v1444 = vmul.f32 %v1429, %v1436
      %v1445 = vmul.f32 %v1432, %v1437
      %s1446 = scalar_lea.vmem %s1, 208
      %v1447 = vld [vmem:[%s1446] sm:$0xff]
      %v1448 = vld [vmem:[%s1446 + $0x8] sm:$0xff]
      %v1450 = vsel %vm297, %v1447, 0
      %v1453 = vsel %vm297, %v1448, 0
      %1455 = vmatpush.msra.mxu0 0.0
      %1456 = vmatpush.msra.mxu0 0.0
      %1457 = vmatpush.msra.mxu0 0.0
      %1458 = vmatpush.msra.mxu0 0.0
      %1459 = vmatpush.msra.mxu0 0.0
      %1460 = vmatpush.msra.mxu0 0.0
      %1461 = vmatpush.msra.mxu0 0.0
      %1462 = vmatpush.msra.mxu0 0.0
      %1463 = vmatpush.msra.mxu0 0.0
      %1464 = vmatpush.msra.mxu0 0.0
      %1465 = vmatpush.msra.mxu0 0.0
      %1466 = vmatpush.msra.mxu0 0.0
      %1467 = vmatpush.msra.mxu0 0.0
      %1468 = vmatpush.msra.mxu0 %v1444
      %1469 = vmatpush.msra.mxu0 %v1442
      %1470 = vmatpush.msra.mxu0 %v1440
      %1471 = vmatmul.f32.gmra.mxu0 %v1450
      %v1472 = vpop.f32.mrf.mxu0
      %v1473 = vadd.f32 0.0, %v1472
      %1474 = vmatmul.f32.gmra.mxu0 %v1453
      %v1475 = vpop.f32.mrf.mxu0
      %v1476 = vadd.f32 0.0, %v1475
      %1477 = vdwg.mxu0
      %1478 = vmatpush.msra.mxu0 0.0
      %1479 = vmatpush.msra.mxu0 0.0
      %1480 = vmatpush.msra.mxu0 0.0
      %1481 = vmatpush.msra.mxu0 0.0
      %1482 = vmatpush.msra.mxu0 0.0
      %1483 = vmatpush.msra.mxu0 0.0
      %1484 = vmatpush.msra.mxu0 0.0
      %1485 = vmatpush.msra.mxu0 0.0
      %1486 = vmatpush.msra.mxu0 0.0
      %1487 = vmatpush.msra.mxu0 0.0
      %1488 = vmatpush.msra.mxu0 0.0
      %1489 = vmatpush.msra.mxu0 0.0
      %1490 = vmatpush.msra.mxu0 0.0
      %1491 = vmatpush.msra.mxu0 %v1445
      %1492 = vmatpush.msra.mxu0 %v1443
      %1493 = vmatpush.msra.mxu0 %v1441
      %1494 = vmatmul.f32.gmra.mxu0 %v1450
      %v1495 = vpop.f32.mrf.mxu0
      %v1496 = vadd.f32 0.0, %v1495
      %1497 = vmatmul.f32.gmra.mxu0 %v1453
      %v1498 = vpop.f32.mrf.mxu0
      %v1499 = vadd.f32 0.0, %v1498
      %1500 = vdwg.mxu0
      %v1501 = vadd.f32 %v1410, %v1473
      %v1502 = vadd.f32 %v1411, %v1496
      %v1503 = vadd.f32 %v1412, %v1476
      %v1504 = vadd.f32 %v1413, %v1499
      %1505 = vrot.lane.b32.xlu0 %v252, 126
      %v1506 = vpop.permute.xlu0 %1505
      %1507 = vrot.lane.b32.xlu0 %v254, 126
      %v1508 = vpop.permute.xlu0 %1507
      %1509 = vrot.lane.b32.xlu0 %v256, 126
      %v1510 = vpop.permute.xlu0 %1509
      %1511 = vrot.lane.b32.xlu0 %v253, 126
      %v1512 = vpop.permute.xlu0 %1511
      %1513 = vrot.lane.b32.xlu0 %v255, 126
      %v1514 = vpop.permute.xlu0 %1513
      %1515 = vrot.lane.b32.xlu0 %v257, 126
      %v1516 = vpop.permute.xlu0 %1515
      %vm1517 = vcmp.lt.s32.totalorder %v275, 126
      %v1518 = vsel %vm1517, %v1506, %v1512
      %v1519 = vsel %vm1517, %v1508, %v1514
      %v1520 = vsel %vm1517, %v1510, %v1516
      %v1521 = vsel %vm1517, %v1512, %v1506
      %v1522 = vsel %vm1517, %v1514, %v1508
      %v1523 = vsel %vm1517, %v1516, %v1510
      %s1524 = scalar_lea.vmem %s3, 22
      %v1525 = vld [vmem:[%s1524] ss:$8 sm:$0x3]
      %v1527 = vperm.slane %v1525, 0
      %v1528 = vperm.slane %v1525, 1
      %v1531 = vmul.f32 %v1518, %v1527
      %v1532 = vmul.f32 %v1521, %v1528
      %v1533 = vmul.f32 %v1519, %v1527
      %v1534 = vmul.f32 %v1522, %v1528
      %v1535 = vmul.f32 %v1520, %v1527
      %v1536 = vmul.f32 %v1523, %v1528
      %s1537 = scalar_lea.vmem %s1, 224
      %v1538 = vld [vmem:[%s1537] sm:$0xff]
      %v1539 = vld [vmem:[%s1537 + $0x8] sm:$0xff]
      %v1541 = vsel %vm297, %v1538, 0
      %v1544 = vsel %vm297, %v1539, 0
      %1546 = vmatpush.msra.mxu0 0.0
      %1547 = vmatpush.msra.mxu0 0.0
      %1548 = vmatpush.msra.mxu0 0.0
      %1549 = vmatpush.msra.mxu0 0.0
      %1550 = vmatpush.msra.mxu0 0.0
      %1551 = vmatpush.msra.mxu0 0.0
      %1552 = vmatpush.msra.mxu0 0.0
      %1553 = vmatpush.msra.mxu0 0.0
      %1554 = vmatpush.msra.mxu0 0.0
      %1555 = vmatpush.msra.mxu0 0.0
      %1556 = vmatpush.msra.mxu0 0.0
      %1557 = vmatpush.msra.mxu0 0.0
      %1558 = vmatpush.msra.mxu0 0.0
      %1559 = vmatpush.msra.mxu0 %v1535
      %1560 = vmatpush.msra.mxu0 %v1533
      %1561 = vmatpush.msra.mxu0 %v1531
      %1562 = vmatmul.f32.gmra.mxu0 %v1541
      %v1563 = vpop.f32.mrf.mxu0
      %v1564 = vadd.f32 0.0, %v1563
      %1565 = vmatmul.f32.gmra.mxu0 %v1544
      %v1566 = vpop.f32.mrf.mxu0
      %v1567 = vadd.f32 0.0, %v1566
      %1568 = vdwg.mxu0
      %1569 = vmatpush.msra.mxu0 0.0
      %1570 = vmatpush.msra.mxu0 0.0
      %1571 = vmatpush.msra.mxu0 0.0
      %1572 = vmatpush.msra.mxu0 0.0
      %1573 = vmatpush.msra.mxu0 0.0
      %1574 = vmatpush.msra.mxu0 0.0
      %1575 = vmatpush.msra.mxu0 0.0
      %1576 = vmatpush.msra.mxu0 0.0
      %1577 = vmatpush.msra.mxu0 0.0
      %1578 = vmatpush.msra.mxu0 0.0
      %1579 = vmatpush.msra.mxu0 0.0
      %1580 = vmatpush.msra.mxu0 0.0
      %1581 = vmatpush.msra.mxu0 0.0
      %1582 = vmatpush.msra.mxu0 %v1536
      %1583 = vmatpush.msra.mxu0 %v1534
      %1584 = vmatpush.msra.mxu0 %v1532
      %1585 = vmatmul.f32.gmra.mxu0 %v1541
      %v1586 = vpop.f32.mrf.mxu0
      %v1587 = vadd.f32 0.0, %v1586
      %1588 = vmatmul.f32.gmra.mxu0 %v1544
      %v1589 = vpop.f32.mrf.mxu0
      %v1590 = vadd.f32 0.0, %v1589
      %1591 = vdwg.mxu0
      %v1592 = vadd.f32 %v1501, %v1564
      %v1593 = vadd.f32 %v1502, %v1587
      %v1594 = vadd.f32 %v1503, %v1567
      %v1595 = vadd.f32 %v1504, %v1590
      %1596 = vrot.lane.b32.xlu0 %v252, 114
      %v1597 = vpop.permute.xlu0 %1596
      %1598 = vrot.lane.b32.xlu0 %v254, 114
      %v1599 = vpop.permute.xlu0 %1598
      %1600 = vrot.lane.b32.xlu0 %v256, 114
      %v1601 = vpop.permute.xlu0 %1600
      %1602 = vrot.lane.b32.xlu0 %v253, 114
      %v1603 = vpop.permute.xlu0 %1602
      %1604 = vrot.lane.b32.xlu0 %v255, 114
      %v1605 = vpop.permute.xlu0 %1604
      %1606 = vrot.lane.b32.xlu0 %v257, 114
      %v1607 = vpop.permute.xlu0 %1606
      %vm1608 = vcmp.lt.s32.totalorder %v275, 114
      %v1609 = vsel %vm1608, %v1597, %v1603
      %v1610 = vsel %vm1608, %v1599, %v1605
      %v1611 = vsel %vm1608, %v1601, %v1607
      %v1612 = vsel %vm1608, %v1603, %v1597
      %v1613 = vsel %vm1608, %v1605, %v1599
      %v1614 = vsel %vm1608, %v1607, %v1601
      %s1615 = scalar_lea.vmem %s3, 23
      %v1616 = vld [vmem:[%s1615] ss:$8 sm:$0x3]
      %v1618 = vperm.slane %v1616, 0
      %v1619 = vperm.slane %v1616, 1
      %v1622 = vmul.f32 %v1609, %v1618
      %v1623 = vmul.f32 %v1612, %v1619
      %v1624 = vmul.f32 %v1610, %v1618
      %v1625 = vmul.f32 %v1613, %v1619
      %v1626 = vmul.f32 %v1611, %v1618
      %v1627 = vmul.f32 %v1614, %v1619
      %s1628 = scalar_lea.vmem %s1, 240
      %v1629 = vld [vmem:[%s1628] sm:$0xff]
      %v1630 = vld [vmem:[%s1628 + $0x8] sm:$0xff]
      %v1632 = vsel %vm297, %v1629, 0
      %v1635 = vsel %vm297, %v1630, 0
      %1637 = vmatpush.msra.mxu0 0.0
      %1638 = vmatpush.msra.mxu0 0.0
      %1639 = vmatpush.msra.mxu0 0.0
      %1640 = vmatpush.msra.mxu0 0.0
      %1641 = vmatpush.msra.mxu0 0.0
      %1642 = vmatpush.msra.mxu0 0.0
      %1643 = vmatpush.msra.mxu0 0.0
      %1644 = vmatpush.msra.mxu0 0.0
      %1645 = vmatpush.msra.mxu0 0.0
      %1646 = vmatpush.msra.mxu0 0.0
      %1647 = vmatpush.msra.mxu0 0.0
      %1648 = vmatpush.msra.mxu0 0.0
      %1649 = vmatpush.msra.mxu0 0.0
      %1650 = vmatpush.msra.mxu0 %v1626
      %1651 = vmatpush.msra.mxu0 %v1624
      %1652 = vmatpush.msra.mxu0 %v1622
      %1653 = vmatmul.f32.gmra.mxu0 %v1632
      %v1654 = vpop.f32.mrf.mxu0
      %v1655 = vadd.f32 0.0, %v1654
      %1656 = vmatmul.f32.gmra.mxu0 %v1635
      %v1657 = vpop.f32.mrf.mxu0
      %v1658 = vadd.f32 0.0, %v1657
      %1659 = vdwg.mxu0
      %1660 = vmatpush.msra.mxu0 0.0
      %1661 = vmatpush.msra.mxu0 0.0
      %1662 = vmatpush.msra.mxu0 0.0
      %1663 = vmatpush.msra.mxu0 0.0
      %1664 = vmatpush.msra.mxu0 0.0
      %1665 = vmatpush.msra.mxu0 0.0
      %1666 = vmatpush.msra.mxu0 0.0
      %1667 = vmatpush.msra.mxu0 0.0
      %1668 = vmatpush.msra.mxu0 0.0
      %1669 = vmatpush.msra.mxu0 0.0
      %1670 = vmatpush.msra.mxu0 0.0
      %1671 = vmatpush.msra.mxu0 0.0
      %1672 = vmatpush.msra.mxu0 0.0
      %1673 = vmatpush.msra.mxu0 %v1627
      %1674 = vmatpush.msra.mxu0 %v1625
      %1675 = vmatpush.msra.mxu0 %v1623
      %1676 = vmatmul.f32.gmra.mxu0 %v1632
      %v1677 = vpop.f32.mrf.mxu0
      %v1678 = vadd.f32 0.0, %v1677
      %1679 = vmatmul.f32.gmra.mxu0 %v1635
      %v1680 = vpop.f32.mrf.mxu0
      %v1681 = vadd.f32 0.0, %v1680
      %1682 = vdwg.mxu0
      %v1683 = vadd.f32 %v1592, %v1655
      %v1684 = vadd.f32 %v1593, %v1678
      %v1685 = vadd.f32 %v1594, %v1658
      %v1686 = vadd.f32 %v1595, %v1681
      %1687 = vrot.lane.b32.xlu0 %v252, 113
      %v1688 = vpop.permute.xlu0 %1687
      %1689 = vrot.lane.b32.xlu0 %v254, 113
      %v1690 = vpop.permute.xlu0 %1689
      %1691 = vrot.lane.b32.xlu0 %v256, 113
      %v1692 = vpop.permute.xlu0 %1691
      %1693 = vrot.lane.b32.xlu0 %v253, 113
      %v1694 = vpop.permute.xlu0 %1693
      %1695 = vrot.lane.b32.xlu0 %v255, 113
      %v1696 = vpop.permute.xlu0 %1695
      %1697 = vrot.lane.b32.xlu0 %v257, 113
      %v1698 = vpop.permute.xlu0 %1697
      %vm1699 = vcmp.lt.s32.totalorder %v275, 113
      %v1700 = vsel %vm1699, %v1688, %v1694
      %v1701 = vsel %vm1699, %v1690, %v1696
      %v1702 = vsel %vm1699, %v1692, %v1698
      %v1703 = vsel %vm1699, %v1694, %v1688
      %v1704 = vsel %vm1699, %v1696, %v1690
      %v1705 = vsel %vm1699, %v1698, %v1692
      %s1706 = scalar_lea.vmem %s3, 32
      %v1707 = vld [vmem:[%s1706] ss:$8 sm:$0x3]
      %v1709 = vperm.slane %v1707, 0
      %v1710 = vperm.slane %v1707, 1
      %v1713 = vmul.f32 %v1700, %v1709
      %v1714 = vmul.f32 %v1703, %v1710
      %v1715 = vmul.f32 %v1701, %v1709
      %v1716 = vmul.f32 %v1704, %v1710
      %v1717 = vmul.f32 %v1702, %v1709
      %v1718 = vmul.f32 %v1705, %v1710
      %s1719 = scalar_lea.vmem %s1, 256
      %v1720 = vld [vmem:[%s1719] sm:$0xff]
      %v1721 = vld [vmem:[%s1719 + $0x8] sm:$0xff]
      %v1723 = vsel %vm297, %v1720, 0
      %v1726 = vsel %vm297, %v1721, 0
      %1728 = vmatpush.msra.mxu0 0.0
      %1729 = vmatpush.msra.mxu0 0.0
      %1730 = vmatpush.msra.mxu0 0.0
      %1731 = vmatpush.msra.mxu0 0.0
      %1732 = vmatpush.msra.mxu0 0.0
      %1733 = vmatpush.msra.mxu0 0.0
      %1734 = vmatpush.msra.mxu0 0.0
      %1735 = vmatpush.msra.mxu0 0.0
      %1736 = vmatpush.msra.mxu0 0.0
      %1737 = vmatpush.msra.mxu0 0.0
      %1738 = vmatpush.msra.mxu0 0.0
      %1739 = vmatpush.msra.mxu0 0.0
      %1740 = vmatpush.msra.mxu0 0.0
      %1741 = vmatpush.msra.mxu0 %v1717
      %1742 = vmatpush.msra.mxu0 %v1715
      %1743 = vmatpush.msra.mxu0 %v1713
      %1744 = vmatmul.f32.gmra.mxu0 %v1723
      %v1745 = vpop.f32.mrf.mxu0
      %v1746 = vadd.f32 0.0, %v1745
      %1747 = vmatmul.f32.gmra.mxu0 %v1726
      %v1748 = vpop.f32.mrf.mxu0
      %v1749 = vadd.f32 0.0, %v1748
      %1750 = vdwg.mxu0
      %1751 = vmatpush.msra.mxu0 0.0
      %1752 = vmatpush.msra.mxu0 0.0
      %1753 = vmatpush.msra.mxu0 0.0
      %1754 = vmatpush.msra.mxu0 0.0
      %1755 = vmatpush.msra.mxu0 0.0
      %1756 = vmatpush.msra.mxu0 0.0
      %1757 = vmatpush.msra.mxu0 0.0
      %1758 = vmatpush.msra.mxu0 0.0
      %1759 = vmatpush.msra.mxu0 0.0
      %1760 = vmatpush.msra.mxu0 0.0
      %1761 = vmatpush.msra.mxu0 0.0
      %1762 = vmatpush.msra.mxu0 0.0
      %1763 = vmatpush.msra.mxu0 0.0
      %1764 = vmatpush.msra.mxu0 %v1718
      %1765 = vmatpush.msra.mxu0 %v1716
      %1766 = vmatpush.msra.mxu0 %v1714
      %1767 = vmatmul.f32.gmra.mxu0 %v1723
      %v1768 = vpop.f32.mrf.mxu0
      %v1769 = vadd.f32 0.0, %v1768
      %1770 = vmatmul.f32.gmra.mxu0 %v1726
      %v1771 = vpop.f32.mrf.mxu0
      %v1772 = vadd.f32 0.0, %v1771
      %1773 = vdwg.mxu0
      %v1774 = vadd.f32 %v1683, %v1746
      %v1775 = vadd.f32 %v1684, %v1769
      %v1776 = vadd.f32 %v1685, %v1749
      %v1777 = vadd.f32 %v1686, %v1772
      %1778 = vrot.lane.b32.xlu0 %v252, 112
      %v1779 = vpop.permute.xlu0 %1778
      %1780 = vrot.lane.b32.xlu0 %v254, 112
      %v1781 = vpop.permute.xlu0 %1780
      %1782 = vrot.lane.b32.xlu0 %v256, 112
      %v1783 = vpop.permute.xlu0 %1782
      %1784 = vrot.lane.b32.xlu0 %v253, 112
      %v1785 = vpop.permute.xlu0 %1784
      %1786 = vrot.lane.b32.xlu0 %v255, 112
      %v1787 = vpop.permute.xlu0 %1786
      %1788 = vrot.lane.b32.xlu0 %v257, 112
      %v1789 = vpop.permute.xlu0 %1788
      %vm1790 = vcmp.lt.s32.totalorder %v275, 112
      %v1791 = vsel %vm1790, %v1779, %v1785
      %v1792 = vsel %vm1790, %v1781, %v1787
      %v1793 = vsel %vm1790, %v1783, %v1789
      %v1794 = vsel %vm1790, %v1785, %v1779
      %v1795 = vsel %vm1790, %v1787, %v1781
      %v1796 = vsel %vm1790, %v1789, %v1783
      %s1797 = scalar_lea.vmem %s3, 33
      %v1798 = vld [vmem:[%s1797] ss:$8 sm:$0x3]
      %v1800 = vperm.slane %v1798, 0
      %v1801 = vperm.slane %v1798, 1
      %v1804 = vmul.f32 %v1791, %v1800
      %v1805 = vmul.f32 %v1794, %v1801
      %v1806 = vmul.f32 %v1792, %v1800
      %v1807 = vmul.f32 %v1795, %v1801
      %v1808 = vmul.f32 %v1793, %v1800
      %v1809 = vmul.f32 %v1796, %v1801
      %s1810 = scalar_lea.vmem %s1, 272
      %v1811 = vld [vmem:[%s1810] sm:$0xff]
      %v1812 = vld [vmem:[%s1810 + $0x8] sm:$0xff]
      %v1814 = vsel %vm297, %v1811, 0
      %v1817 = vsel %vm297, %v1812, 0
      %1819 = vmatpush.msra.mxu0 0.0
      %1820 = vmatpush.msra.mxu0 0.0
      %1821 = vmatpush.msra.mxu0 0.0
      %1822 = vmatpush.msra.mxu0 0.0
      %1823 = vmatpush.msra.mxu0 0.0
      %1824 = vmatpush.msra.mxu0 0.0
      %1825 = vmatpush.msra.mxu0 0.0
      %1826 = vmatpush.msra.mxu0 0.0
      %1827 = vmatpush.msra.mxu0 0.0
      %1828 = vmatpush.msra.mxu0 0.0
      %1829 = vmatpush.msra.mxu0 0.0
      %1830 = vmatpush.msra.mxu0 0.0
      %1831 = vmatpush.msra.mxu0 0.0
      %1832 = vmatpush.msra.mxu0 %v1808
      %1833 = vmatpush.msra.mxu0 %v1806
      %1834 = vmatpush.msra.mxu0 %v1804
      %1835 = vmatmul.f32.gmra.mxu0 %v1814
      %v1836 = vpop.f32.mrf.mxu0
      %v1837 = vadd.f32 0.0, %v1836
      %1838 = vmatmul.f32.gmra.mxu0 %v1817
      %v1839 = vpop.f32.mrf.mxu0
      %v1840 = vadd.f32 0.0, %v1839
      %1841 = vdwg.mxu0
      %1842 = vmatpush.msra.mxu0 0.0
      %1843 = vmatpush.msra.mxu0 0.0
      %1844 = vmatpush.msra.mxu0 0.0
      %1845 = vmatpush.msra.mxu0 0.0
      %1846 = vmatpush.msra.mxu0 0.0
      %1847 = vmatpush.msra.mxu0 0.0
      %1848 = vmatpush.msra.mxu0 0.0
      %1849 = vmatpush.msra.mxu0 0.0
      %1850 = vmatpush.msra.mxu0 0.0
      %1851 = vmatpush.msra.mxu0 0.0
      %1852 = vmatpush.msra.mxu0 0.0
      %1853 = vmatpush.msra.mxu0 0.0
      %1854 = vmatpush.msra.mxu0 0.0
      %1855 = vmatpush.msra.mxu0 %v1809
      %1856 = vmatpush.msra.mxu0 %v1807
      %1857 = vmatpush.msra.mxu0 %v1805
      %1858 = vmatmul.f32.gmra.mxu0 %v1814
      %v1859 = vpop.f32.mrf.mxu0
      %v1860 = vadd.f32 0.0, %v1859
      %1861 = vmatmul.f32.gmra.mxu0 %v1817
      %v1862 = vpop.f32.mrf.mxu0
      %v1863 = vadd.f32 0.0, %v1862
      %1864 = vdwg.mxu0
      %v1865 = vadd.f32 %v1774, %v1837
      %v1866 = vadd.f32 %v1775, %v1860
      %v1867 = vadd.f32 %v1776, %v1840
      %v1868 = vadd.f32 %v1777, %v1863
      %1869 = vrot.lane.b32.xlu0 %v252, 111
      %v1870 = vpop.permute.xlu0 %1869
      %1871 = vrot.lane.b32.xlu0 %v254, 111
      %v1872 = vpop.permute.xlu0 %1871
      %1873 = vrot.lane.b32.xlu0 %v256, 111
      %v1874 = vpop.permute.xlu0 %1873
      %1875 = vrot.lane.b32.xlu0 %v253, 111
      %v1876 = vpop.permute.xlu0 %1875
      %1877 = vrot.lane.b32.xlu0 %v255, 111
      %v1878 = vpop.permute.xlu0 %1877
      %1879 = vrot.lane.b32.xlu0 %v257, 111
      %v1880 = vpop.permute.xlu0 %1879
      %vm1881 = vcmp.lt.s32.totalorder %v275, 111
      %v1882 = vsel %vm1881, %v1870, %v1876
      %v1883 = vsel %vm1881, %v1872, %v1878
      %v1884 = vsel %vm1881, %v1874, %v1880
      %v1885 = vsel %vm1881, %v1876, %v1870
      %v1886 = vsel %vm1881, %v1878, %v1872
      %v1887 = vsel %vm1881, %v1880, %v1874
      %s1888 = scalar_lea.vmem %s3, 34
      %v1889 = vld [vmem:[%s1888] ss:$8 sm:$0x3]
      %v1891 = vperm.slane %v1889, 0
      %v1892 = vperm.slane %v1889, 1
      %v1895 = vmul.f32 %v1882, %v1891
      %v1896 = vmul.f32 %v1885, %v1892
      %v1897 = vmul.f32 %v1883, %v1891
      %v1898 = vmul.f32 %v1886, %v1892
      %v1899 = vmul.f32 %v1884, %v1891
      %v1900 = vmul.f32 %v1887, %v1892
      %s1901 = scalar_lea.vmem %s1, 288
      %v1902 = vld [vmem:[%s1901] sm:$0xff]
      %v1903 = vld [vmem:[%s1901 + $0x8] sm:$0xff]
      %v1905 = vsel %vm297, %v1902, 0
      %v1908 = vsel %vm297, %v1903, 0
      %1910 = vmatpush.msra.mxu0 0.0
      %1911 = vmatpush.msra.mxu0 0.0
      %1912 = vmatpush.msra.mxu0 0.0
      %1913 = vmatpush.msra.mxu0 0.0
      %1914 = vmatpush.msra.mxu0 0.0
      %1915 = vmatpush.msra.mxu0 0.0
      %1916 = vmatpush.msra.mxu0 0.0
      %1917 = vmatpush.msra.mxu0 0.0
      %1918 = vmatpush.msra.mxu0 0.0
      %1919 = vmatpush.msra.mxu0 0.0
      %1920 = vmatpush.msra.mxu0 0.0
      %1921 = vmatpush.msra.mxu0 0.0
      %1922 = vmatpush.msra.mxu0 0.0
      %1923 = vmatpush.msra.mxu0 %v1899
      %1924 = vmatpush.msra.mxu0 %v1897
      %1925 = vmatpush.msra.mxu0 %v1895
      %1926 = vmatmul.f32.gmra.mxu0 %v1905
      %v1927 = vpop.f32.mrf.mxu0
      %v1928 = vadd.f32 0.0, %v1927
      %1929 = vmatmul.f32.gmra.mxu0 %v1908
      %v1930 = vpop.f32.mrf.mxu0
      %v1931 = vadd.f32 0.0, %v1930
      %1932 = vdwg.mxu0
      %1933 = vmatpush.msra.mxu0 0.0
      %1934 = vmatpush.msra.mxu0 0.0
      %1935 = vmatpush.msra.mxu0 0.0
      %1936 = vmatpush.msra.mxu0 0.0
      %1937 = vmatpush.msra.mxu0 0.0
      %1938 = vmatpush.msra.mxu0 0.0
      %1939 = vmatpush.msra.mxu0 0.0
      %1940 = vmatpush.msra.mxu0 0.0
      %1941 = vmatpush.msra.mxu0 0.0
      %1942 = vmatpush.msra.mxu0 0.0
      %1943 = vmatpush.msra.mxu0 0.0
      %1944 = vmatpush.msra.mxu0 0.0
      %1945 = vmatpush.msra.mxu0 0.0
      %1946 = vmatpush.msra.mxu0 %v1900
      %1947 = vmatpush.msra.mxu0 %v1898
      %1948 = vmatpush.msra.mxu0 %v1896
      %1949 = vmatmul.f32.gmra.mxu0 %v1905
      %v1950 = vpop.f32.mrf.mxu0
      %v1951 = vadd.f32 0.0, %v1950
      %1952 = vmatmul.f32.gmra.mxu0 %v1908
      %v1953 = vpop.f32.mrf.mxu0
      %v1954 = vadd.f32 0.0, %v1953
      %1955 = vdwg.mxu0
      %v1956 = vadd.f32 %v1865, %v1928
      %v1957 = vadd.f32 %v1866, %v1951
      %v1958 = vadd.f32 %v1867, %v1931
      %v1959 = vadd.f32 %v1868, %v1954
      %1960 = vrot.lane.b32.xlu0 %v252, 110
      %v1961 = vpop.permute.xlu0 %1960
      %1962 = vrot.lane.b32.xlu0 %v254, 110
      %v1963 = vpop.permute.xlu0 %1962
      %1964 = vrot.lane.b32.xlu0 %v256, 110
      %v1965 = vpop.permute.xlu0 %1964
      %1966 = vrot.lane.b32.xlu0 %v253, 110
      %v1967 = vpop.permute.xlu0 %1966
      %1968 = vrot.lane.b32.xlu0 %v255, 110
      %v1969 = vpop.permute.xlu0 %1968
      %1970 = vrot.lane.b32.xlu0 %v257, 110
      %v1971 = vpop.permute.xlu0 %1970
      %vm1972 = vcmp.lt.s32.totalorder %v275, 110
      %v1973 = vsel %vm1972, %v1961, %v1967
      %v1974 = vsel %vm1972, %v1963, %v1969
      %v1975 = vsel %vm1972, %v1965, %v1971
      %v1976 = vsel %vm1972, %v1967, %v1961
      %v1977 = vsel %vm1972, %v1969, %v1963
      %v1978 = vsel %vm1972, %v1971, %v1965
      %s1979 = scalar_lea.vmem %s3, 35
      %v1980 = vld [vmem:[%s1979] ss:$8 sm:$0x3]
      %v1982 = vperm.slane %v1980, 0
      %v1983 = vperm.slane %v1980, 1
      %v1986 = vmul.f32 %v1973, %v1982
      %v1987 = vmul.f32 %v1976, %v1983
      %v1988 = vmul.f32 %v1974, %v1982
      %v1989 = vmul.f32 %v1977, %v1983
      %v1990 = vmul.f32 %v1975, %v1982
      %v1991 = vmul.f32 %v1978, %v1983
      %s1992 = scalar_lea.vmem %s1, 304
      %v1993 = vld [vmem:[%s1992] sm:$0xff]
      %v1994 = vld [vmem:[%s1992 + $0x8] sm:$0xff]
      %v1996 = vsel %vm297, %v1993, 0
      %v1999 = vsel %vm297, %v1994, 0
      %2001 = vmatpush.msra.mxu0 0.0
      %2002 = vmatpush.msra.mxu0 0.0
      %2003 = vmatpush.msra.mxu0 0.0
      %2004 = vmatpush.msra.mxu0 0.0
      %2005 = vmatpush.msra.mxu0 0.0
      %2006 = vmatpush.msra.mxu0 0.0
      %2007 = vmatpush.msra.mxu0 0.0
      %2008 = vmatpush.msra.mxu0 0.0
      %2009 = vmatpush.msra.mxu0 0.0
      %2010 = vmatpush.msra.mxu0 0.0
      %2011 = vmatpush.msra.mxu0 0.0
      %2012 = vmatpush.msra.mxu0 0.0
      %2013 = vmatpush.msra.mxu0 0.0
      %2014 = vmatpush.msra.mxu0 %v1990
      %2015 = vmatpush.msra.mxu0 %v1988
      %2016 = vmatpush.msra.mxu0 %v1986
      %2017 = vmatmul.f32.gmra.mxu0 %v1996
      %v2018 = vpop.f32.mrf.mxu0
      %v2019 = vadd.f32 0.0, %v2018
      %2020 = vmatmul.f32.gmra.mxu0 %v1999
      %v2021 = vpop.f32.mrf.mxu0
      %v2022 = vadd.f32 0.0, %v2021
      %2023 = vdwg.mxu0
      %2024 = vmatpush.msra.mxu0 0.0
      %2025 = vmatpush.msra.mxu0 0.0
      %2026 = vmatpush.msra.mxu0 0.0
      %2027 = vmatpush.msra.mxu0 0.0
      %2028 = vmatpush.msra.mxu0 0.0
      %2029 = vmatpush.msra.mxu0 0.0
      %2030 = vmatpush.msra.mxu0 0.0
      %2031 = vmatpush.msra.mxu0 0.0
      %2032 = vmatpush.msra.mxu0 0.0
      %2033 = vmatpush.msra.mxu0 0.0
      %2034 = vmatpush.msra.mxu0 0.0
      %2035 = vmatpush.msra.mxu0 0.0
      %2036 = vmatpush.msra.mxu0 0.0
      %2037 = vmatpush.msra.mxu0 %v1991
      %2038 = vmatpush.msra.mxu0 %v1989
      %2039 = vmatpush.msra.mxu0 %v1987
      %2040 = vmatmul.f32.gmra.mxu0 %v1996
      %v2041 = vpop.f32.mrf.mxu0
      %v2042 = vadd.f32 0.0, %v2041
      %2043 = vmatmul.f32.gmra.mxu0 %v1999
      %v2044 = vpop.f32.mrf.mxu0
      %v2045 = vadd.f32 0.0, %v2044
      %2046 = vdwg.mxu0
      %v2047 = vadd.f32 %v1956, %v2019
      %v2048 = vadd.f32 %v1957, %v2042
      %v2049 = vadd.f32 %v1958, %v2022
      %v2050 = vadd.f32 %v1959, %v2045
      %2051 = vrot.lane.b32.xlu0 %v252, 98
      %v2052 = vpop.permute.xlu0 %2051
      %2053 = vrot.lane.b32.xlu0 %v254, 98
      %v2054 = vpop.permute.xlu0 %2053
      %2055 = vrot.lane.b32.xlu0 %v256, 98
      %v2056 = vpop.permute.xlu0 %2055
      %2057 = vrot.lane.b32.xlu0 %v253, 98
      %v2058 = vpop.permute.xlu0 %2057
      %2059 = vrot.lane.b32.xlu0 %v255, 98
      %v2060 = vpop.permute.xlu0 %2059
      %2061 = vrot.lane.b32.xlu0 %v257, 98
      %v2062 = vpop.permute.xlu0 %2061
      %vm2063 = vcmp.lt.s32.totalorder %v275, 98
      %v2064 = vsel %vm2063, %v2052, %v2058
      %v2065 = vsel %vm2063, %v2054, %v2060
      %v2066 = vsel %vm2063, %v2056, %v2062
      %v2067 = vsel %vm2063, %v2058, %v2052
      %v2068 = vsel %vm2063, %v2060, %v2054
      %v2069 = vsel %vm2063, %v2062, %v2056
      %s2070 = scalar_lea.vmem %s3, 36
      %v2071 = vld [vmem:[%s2070] ss:$8 sm:$0x3]
      %v2073 = vperm.slane %v2071, 0
      %v2074 = vperm.slane %v2071, 1
      %v2077 = vmul.f32 %v2064, %v2073
      %v2078 = vmul.f32 %v2067, %v2074
      %v2079 = vmul.f32 %v2065, %v2073
      %v2080 = vmul.f32 %v2068, %v2074
      %v2081 = vmul.f32 %v2066, %v2073
      %v2082 = vmul.f32 %v2069, %v2074
      %s2083 = scalar_lea.vmem %s1, 320
      %v2084 = vld [vmem:[%s2083] sm:$0xff]
      %v2085 = vld [vmem:[%s2083 + $0x8] sm:$0xff]
      %v2087 = vsel %vm297, %v2084, 0
      %v2090 = vsel %vm297, %v2085, 0
      %2092 = vmatpush.msra.mxu0 0.0
      %2093 = vmatpush.msra.mxu0 0.0
      %2094 = vmatpush.msra.mxu0 0.0
      %2095 = vmatpush.msra.mxu0 0.0
      %2096 = vmatpush.msra.mxu0 0.0
      %2097 = vmatpush.msra.mxu0 0.0
      %2098 = vmatpush.msra.mxu0 0.0
      %2099 = vmatpush.msra.mxu0 0.0
      %2100 = vmatpush.msra.mxu0 0.0
      %2101 = vmatpush.msra.mxu0 0.0
      %2102 = vmatpush.msra.mxu0 0.0
      %2103 = vmatpush.msra.mxu0 0.0
      %2104 = vmatpush.msra.mxu0 0.0
      %2105 = vmatpush.msra.mxu0 %v2081
      %2106 = vmatpush.msra.mxu0 %v2079
      %2107 = vmatpush.msra.mxu0 %v2077
      %2108 = vmatmul.f32.gmra.mxu0 %v2087
      %v2109 = vpop.f32.mrf.mxu0
      %v2110 = vadd.f32 0.0, %v2109
      %2111 = vmatmul.f32.gmra.mxu0 %v2090
      %v2112 = vpop.f32.mrf.mxu0
      %v2113 = vadd.f32 0.0, %v2112
      %2114 = vdwg.mxu0
      %2115 = vmatpush.msra.mxu0 0.0
      %2116 = vmatpush.msra.mxu0 0.0
      %2117 = vmatpush.msra.mxu0 0.0
      %2118 = vmatpush.msra.mxu0 0.0
      %2119 = vmatpush.msra.mxu0 0.0
      %2120 = vmatpush.msra.mxu0 0.0
      %2121 = vmatpush.msra.mxu0 0.0
      %2122 = vmatpush.msra.mxu0 0.0
      %2123 = vmatpush.msra.mxu0 0.0
      %2124 = vmatpush.msra.mxu0 0.0
      %2125 = vmatpush.msra.mxu0 0.0
      %2126 = vmatpush.msra.mxu0 0.0
      %2127 = vmatpush.msra.mxu0 0.0
      %2128 = vmatpush.msra.mxu0 %v2082
      %2129 = vmatpush.msra.mxu0 %v2080
      %2130 = vmatpush.msra.mxu0 %v2078
      %2131 = vmatmul.f32.gmra.mxu0 %v2087
      %v2132 = vpop.f32.mrf.mxu0
      %v2133 = vadd.f32 0.0, %v2132
      %2134 = vmatmul.f32.gmra.mxu0 %v2090
      %v2135 = vpop.f32.mrf.mxu0
      %v2136 = vadd.f32 0.0, %v2135
      %2137 = vdwg.mxu0
      %v2138 = vadd.f32 %v2047, %v2110
      %v2139 = vadd.f32 %v2048, %v2133
      %v2140 = vadd.f32 %v2049, %v2113
      %v2141 = vadd.f32 %v2050, %v2136
      %2142 = vrot.lane.b32.xlu0 %v252, 97
      %v2143 = vpop.permute.xlu0 %2142
      %2144 = vrot.lane.b32.xlu0 %v254, 97
      %v2145 = vpop.permute.xlu0 %2144
      %2146 = vrot.lane.b32.xlu0 %v256, 97
      %v2147 = vpop.permute.xlu0 %2146
      %2148 = vrot.lane.b32.xlu0 %v253, 97
      %v2149 = vpop.permute.xlu0 %2148
      %2150 = vrot.lane.b32.xlu0 %v255, 97
      %v2151 = vpop.permute.xlu0 %2150
      %2152 = vrot.lane.b32.xlu0 %v257, 97
      %v2153 = vpop.permute.xlu0 %2152
      %vm2154 = vcmp.lt.s32.totalorder %v275, 97
      %v2155 = vsel %vm2154, %v2143, %v2149
      %v2156 = vsel %vm2154, %v2145, %v2151
      %v2157 = vsel %vm2154, %v2147, %v2153
      %v2158 = vsel %vm2154, %v2149, %v2143
      %v2159 = vsel %vm2154, %v2151, %v2145
      %v2160 = vsel %vm2154, %v2153, %v2147
      %s2161 = scalar_lea.vmem %s3, 37
      %v2162 = vld [vmem:[%s2161] ss:$8 sm:$0x3]
      %v2164 = vperm.slane %v2162, 0
      %v2165 = vperm.slane %v2162, 1
      %v2168 = vmul.f32 %v2155, %v2164
      %v2169 = vmul.f32 %v2158, %v2165
      %v2170 = vmul.f32 %v2156, %v2164
      %v2171 = vmul.f32 %v2159, %v2165
      %v2172 = vmul.f32 %v2157, %v2164
      %v2173 = vmul.f32 %v2160, %v2165
      %s2174 = scalar_lea.vmem %s1, 336
      %v2175 = vld [vmem:[%s2174] sm:$0xff]
      %v2176 = vld [vmem:[%s2174 + $0x8] sm:$0xff]
      %v2178 = vsel %vm297, %v2175, 0
      %v2181 = vsel %vm297, %v2176, 0
      %2183 = vmatpush.msra.mxu0 0.0
      %2184 = vmatpush.msra.mxu0 0.0
      %2185 = vmatpush.msra.mxu0 0.0
      %2186 = vmatpush.msra.mxu0 0.0
      %2187 = vmatpush.msra.mxu0 0.0
      %2188 = vmatpush.msra.mxu0 0.0
      %2189 = vmatpush.msra.mxu0 0.0
      %2190 = vmatpush.msra.mxu0 0.0
      %2191 = vmatpush.msra.mxu0 0.0
      %2192 = vmatpush.msra.mxu0 0.0
      %2193 = vmatpush.msra.mxu0 0.0
      %2194 = vmatpush.msra.mxu0 0.0
      %2195 = vmatpush.msra.mxu0 0.0
      %2196 = vmatpush.msra.mxu0 %v2172
      %2197 = vmatpush.msra.mxu0 %v2170
      %2198 = vmatpush.msra.mxu0 %v2168
      %2199 = vmatmul.f32.gmra.mxu0 %v2178
      %v2200 = vpop.f32.mrf.mxu0
      %v2201 = vadd.f32 0.0, %v2200
      %2202 = vmatmul.f32.gmra.mxu0 %v2181
      %v2203 = vpop.f32.mrf.mxu0
      %v2204 = vadd.f32 0.0, %v2203
      %2205 = vdwg.mxu0
      %2206 = vmatpush.msra.mxu0 0.0
      %2207 = vmatpush.msra.mxu0 0.0
      %2208 = vmatpush.msra.mxu0 0.0
      %2209 = vmatpush.msra.mxu0 0.0
      %2210 = vmatpush.msra.mxu0 0.0
      %2211 = vmatpush.msra.mxu0 0.0
      %2212 = vmatpush.msra.mxu0 0.0
      %2213 = vmatpush.msra.mxu0 0.0
      %2214 = vmatpush.msra.mxu0 0.0
      %2215 = vmatpush.msra.mxu0 0.0
      %2216 = vmatpush.msra.mxu0 0.0
      %2217 = vmatpush.msra.mxu0 0.0
      %2218 = vmatpush.msra.mxu0 0.0
      %2219 = vmatpush.msra.mxu0 %v2173
      %2220 = vmatpush.msra.mxu0 %v2171
      %2221 = vmatpush.msra.mxu0 %v2169
      %2222 = vmatmul.f32.gmra.mxu0 %v2178
      %v2223 = vpop.f32.mrf.mxu0
      %v2224 = vadd.f32 0.0, %v2223
      %2225 = vmatmul.f32.gmra.mxu0 %v2181
      %v2226 = vpop.f32.mrf.mxu0
      %v2227 = vadd.f32 0.0, %v2226
      %2228 = vdwg.mxu0
      %v2229 = vadd.f32 %v2138, %v2201
      %v2230 = vadd.f32 %v2139, %v2224
      %v2231 = vadd.f32 %v2140, %v2204
      %v2232 = vadd.f32 %v2141, %v2227
      %2233 = vrot.lane.b32.xlu0 %v252, 96
      %v2234 = vpop.permute.xlu0 %2233
      %2235 = vrot.lane.b32.xlu0 %v254, 96
      %v2236 = vpop.permute.xlu0 %2235
      %2237 = vrot.lane.b32.xlu0 %v256, 96
      %v2238 = vpop.permute.xlu0 %2237
      %2239 = vrot.lane.b32.xlu0 %v253, 96
      %v2240 = vpop.permute.xlu0 %2239
      %2241 = vrot.lane.b32.xlu0 %v255, 96
      %v2242 = vpop.permute.xlu0 %2241
      %2243 = vrot.lane.b32.xlu0 %v257, 96
      %v2244 = vpop.permute.xlu0 %2243
      %vm2245 = vcmp.lt.s32.totalorder %v275, 96
      %v2246 = vsel %vm2245, %v2234, %v2240
      %v2247 = vsel %vm2245, %v2236, %v2242
      %v2248 = vsel %vm2245, %v2238, %v2244
      %v2249 = vsel %vm2245, %v2240, %v2234
      %v2250 = vsel %vm2245, %v2242, %v2236
      %v2251 = vsel %vm2245, %v2244, %v2238
      %s2252 = scalar_lea.vmem %s3, 38
      %v2253 = vld [vmem:[%s2252] ss:$8 sm:$0x3]
      %v2255 = vperm.slane %v2253, 0
      %v2256 = vperm.slane %v2253, 1
      %v2259 = vmul.f32 %v2246, %v2255
      %v2260 = vmul.f32 %v2249, %v2256
      %v2261 = vmul.f32 %v2247, %v2255
      %v2262 = vmul.f32 %v2250, %v2256
      %v2263 = vmul.f32 %v2248, %v2255
      %v2264 = vmul.f32 %v2251, %v2256
      %s2265 = scalar_lea.vmem %s1, 352
      %v2266 = vld [vmem:[%s2265] sm:$0xff]
      %v2267 = vld [vmem:[%s2265 + $0x8] sm:$0xff]
      %v2269 = vsel %vm297, %v2266, 0
      %v2272 = vsel %vm297, %v2267, 0
      %2274 = vmatpush.msra.mxu0 0.0
      %2275 = vmatpush.msra.mxu0 0.0
      %2276 = vmatpush.msra.mxu0 0.0
      %2277 = vmatpush.msra.mxu0 0.0
      %2278 = vmatpush.msra.mxu0 0.0
      %2279 = vmatpush.msra.mxu0 0.0
      %2280 = vmatpush.msra.mxu0 0.0
      %2281 = vmatpush.msra.mxu0 0.0
      %2282 = vmatpush.msra.mxu0 0.0
      %2283 = vmatpush.msra.mxu0 0.0
      %2284 = vmatpush.msra.mxu0 0.0
      %2285 = vmatpush.msra.mxu0 0.0
      %2286 = vmatpush.msra.mxu0 0.0
      %2287 = vmatpush.msra.mxu0 %v2263
      %2288 = vmatpush.msra.mxu0 %v2261
      %2289 = vmatpush.msra.mxu0 %v2259
      %2290 = vmatmul.f32.gmra.mxu0 %v2269
      %v2291 = vpop.f32.mrf.mxu0
      %v2292 = vadd.f32 0.0, %v2291
      %2293 = vmatmul.f32.gmra.mxu0 %v2272
      %v2294 = vpop.f32.mrf.mxu0
      %v2295 = vadd.f32 0.0, %v2294
      %2296 = vdwg.mxu0
      %2297 = vmatpush.msra.mxu0 0.0
      %2298 = vmatpush.msra.mxu0 0.0
      %2299 = vmatpush.msra.mxu0 0.0
      %2300 = vmatpush.msra.mxu0 0.0
      %2301 = vmatpush.msra.mxu0 0.0
      %2302 = vmatpush.msra.mxu0 0.0
      %2303 = vmatpush.msra.mxu0 0.0
      %2304 = vmatpush.msra.mxu0 0.0
      %2305 = vmatpush.msra.mxu0 0.0
      %2306 = vmatpush.msra.mxu0 0.0
      %2307 = vmatpush.msra.mxu0 0.0
      %2308 = vmatpush.msra.mxu0 0.0
      %2309 = vmatpush.msra.mxu0 0.0
      %2310 = vmatpush.msra.mxu0 %v2264
      %2311 = vmatpush.msra.mxu0 %v2262
      %2312 = vmatpush.msra.mxu0 %v2260
      %2313 = vmatmul.f32.gmra.mxu0 %v2269
      %v2314 = vpop.f32.mrf.mxu0
      %v2315 = vadd.f32 0.0, %v2314
      %2316 = vmatmul.f32.gmra.mxu0 %v2272
      %v2317 = vpop.f32.mrf.mxu0
      %v2318 = vadd.f32 0.0, %v2317
      %2319 = vdwg.mxu0
      %v2320 = vadd.f32 %v2229, %v2292
      %v2321 = vadd.f32 %v2230, %v2315
      %v2322 = vadd.f32 %v2231, %v2295
      %v2323 = vadd.f32 %v2232, %v2318
      %2324 = vrot.lane.b32.xlu0 %v252, 95
      %v2325 = vpop.permute.xlu0 %2324
      %2326 = vrot.lane.b32.xlu0 %v254, 95
      %v2327 = vpop.permute.xlu0 %2326
      %2328 = vrot.lane.b32.xlu0 %v256, 95
      %v2329 = vpop.permute.xlu0 %2328
      %2330 = vrot.lane.b32.xlu0 %v253, 95
      %v2331 = vpop.permute.xlu0 %2330
      %2332 = vrot.lane.b32.xlu0 %v255, 95
      %v2333 = vpop.permute.xlu0 %2332
      %2334 = vrot.lane.b32.xlu0 %v257, 95
      %v2335 = vpop.permute.xlu0 %2334
      %vm2336 = vcmp.lt.s32.totalorder %v275, 95
      %v2337 = vsel %vm2336, %v2325, %v2331
      %v2338 = vsel %vm2336, %v2327, %v2333
      %v2339 = vsel %vm2336, %v2329, %v2335
      %v2340 = vsel %vm2336, %v2331, %v2325
      %v2341 = vsel %vm2336, %v2333, %v2327
      %v2342 = vsel %vm2336, %v2335, %v2329
      %s2343 = scalar_lea.vmem %s3, 39
      %v2344 = vld [vmem:[%s2343] ss:$8 sm:$0x3]
      %v2346 = vperm.slane %v2344, 0
      %v2347 = vperm.slane %v2344, 1
      %v2350 = vmul.f32 %v2337, %v2346
      %v2351 = vmul.f32 %v2340, %v2347
      %v2352 = vmul.f32 %v2338, %v2346
      %v2353 = vmul.f32 %v2341, %v2347
      %v2354 = vmul.f32 %v2339, %v2346
      %v2355 = vmul.f32 %v2342, %v2347
      %s2356 = scalar_lea.vmem %s1, 368
      %v2357 = vld [vmem:[%s2356] sm:$0xff]
      %v2358 = vld [vmem:[%s2356 + $0x8] sm:$0xff]
      %v2360 = vsel %vm297, %v2357, 0
      %v2363 = vsel %vm297, %v2358, 0
      %2365 = vmatpush.msra.mxu0 0.0
      %2366 = vmatpush.msra.mxu0 0.0
      %2367 = vmatpush.msra.mxu0 0.0
      %2368 = vmatpush.msra.mxu0 0.0
      %2369 = vmatpush.msra.mxu0 0.0
      %2370 = vmatpush.msra.mxu0 0.0
      %2371 = vmatpush.msra.mxu0 0.0
      %2372 = vmatpush.msra.mxu0 0.0
      %2373 = vmatpush.msra.mxu0 0.0
      %2374 = vmatpush.msra.mxu0 0.0
      %2375 = vmatpush.msra.mxu0 0.0
      %2376 = vmatpush.msra.mxu0 0.0
      %2377 = vmatpush.msra.mxu0 0.0
      %2378 = vmatpush.msra.mxu0 %v2354
      %2379 = vmatpush.msra.mxu0 %v2352
      %2380 = vmatpush.msra.mxu0 %v2350
      %2381 = vmatmul.f32.gmra.mxu0 %v2360
      %v2382 = vpop.f32.mrf.mxu0
      %v2383 = vadd.f32 0.0, %v2382
      %2384 = vmatmul.f32.gmra.mxu0 %v2363
      %v2385 = vpop.f32.mrf.mxu0
      %v2386 = vadd.f32 0.0, %v2385
      %2387 = vdwg.mxu0
      %2388 = vmatpush.msra.mxu0 0.0
      %2389 = vmatpush.msra.mxu0 0.0
      %2390 = vmatpush.msra.mxu0 0.0
      %2391 = vmatpush.msra.mxu0 0.0
      %2392 = vmatpush.msra.mxu0 0.0
      %2393 = vmatpush.msra.mxu0 0.0
      %2394 = vmatpush.msra.mxu0 0.0
      %2395 = vmatpush.msra.mxu0 0.0
      %2396 = vmatpush.msra.mxu0 0.0
      %2397 = vmatpush.msra.mxu0 0.0
      %2398 = vmatpush.msra.mxu0 0.0
      %2399 = vmatpush.msra.mxu0 0.0
      %2400 = vmatpush.msra.mxu0 0.0
      %2401 = vmatpush.msra.mxu0 %v2355
      %2402 = vmatpush.msra.mxu0 %v2353
      %2403 = vmatpush.msra.mxu0 %v2351
      %2404 = vmatmul.f32.gmra.mxu0 %v2360
      %v2405 = vpop.f32.mrf.mxu0
      %v2406 = vadd.f32 0.0, %v2405
      %2407 = vmatmul.f32.gmra.mxu0 %v2363
      %v2408 = vpop.f32.mrf.mxu0
      %v2409 = vadd.f32 0.0, %v2408
      %2410 = vdwg.mxu0
      %v2411 = vadd.f32 %v2320, %v2383
      %v2412 = vadd.f32 %v2321, %v2406
      %v2413 = vadd.f32 %v2322, %v2386
      %v2414 = vadd.f32 %v2323, %v2409
      %2415 = vrot.lane.b32.xlu0 %v252, 94
      %v2416 = vpop.permute.xlu0 %2415
      %2417 = vrot.lane.b32.xlu0 %v254, 94
      %v2418 = vpop.permute.xlu0 %2417
      %2419 = vrot.lane.b32.xlu0 %v256, 94
      %v2420 = vpop.permute.xlu0 %2419
      %2421 = vrot.lane.b32.xlu0 %v253, 94
      %v2422 = vpop.permute.xlu0 %2421
      %2423 = vrot.lane.b32.xlu0 %v255, 94
      %v2424 = vpop.permute.xlu0 %2423
      %2425 = vrot.lane.b32.xlu0 %v257, 94
      %v2426 = vpop.permute.xlu0 %2425
      %vm2427 = vcmp.lt.s32.totalorder %v275, 94
      %v2428 = vsel %vm2427, %v2416, %v2422
      %v2429 = vsel %vm2427, %v2418, %v2424
      %v2430 = vsel %vm2427, %v2420, %v2426
      %v2431 = vsel %vm2427, %v2422, %v2416
      %v2432 = vsel %vm2427, %v2424, %v2418
      %v2433 = vsel %vm2427, %v2426, %v2420
      %s2434 = scalar_lea.vmem %s3, 48
      %v2435 = vld [vmem:[%s2434] ss:$8 sm:$0x3]
      %v2437 = vperm.slane %v2435, 0
      %v2438 = vperm.slane %v2435, 1
      %v2441 = vmul.f32 %v2428, %v2437
      %v2442 = vmul.f32 %v2431, %v2438
      %v2443 = vmul.f32 %v2429, %v2437
      %v2444 = vmul.f32 %v2432, %v2438
      %v2445 = vmul.f32 %v2430, %v2437
      %v2446 = vmul.f32 %v2433, %v2438
      %s2447 = scalar_lea.vmem %s1, 384
      %v2448 = vld [vmem:[%s2447] sm:$0xff]
      %v2449 = vld [vmem:[%s2447 + $0x8] sm:$0xff]
      %v2451 = vsel %vm297, %v2448, 0
      %v2454 = vsel %vm297, %v2449, 0
      %2456 = vmatpush.msra.mxu0 0.0
      %2457 = vmatpush.msra.mxu0 0.0
      %2458 = vmatpush.msra.mxu0 0.0
      %2459 = vmatpush.msra.mxu0 0.0
      %2460 = vmatpush.msra.mxu0 0.0
      %2461 = vmatpush.msra.mxu0 0.0
      %2462 = vmatpush.msra.mxu0 0.0
      %2463 = vmatpush.msra.mxu0 0.0
      %2464 = vmatpush.msra.mxu0 0.0
      %2465 = vmatpush.msra.mxu0 0.0
      %2466 = vmatpush.msra.mxu0 0.0
      %2467 = vmatpush.msra.mxu0 0.0
      %2468 = vmatpush.msra.mxu0 0.0
      %2469 = vmatpush.msra.mxu0 %v2445
      %2470 = vmatpush.msra.mxu0 %v2443
      %2471 = vmatpush.msra.mxu0 %v2441
      %2472 = vmatmul.f32.gmra.mxu0 %v2451
      %v2473 = vpop.f32.mrf.mxu0
      %v2474 = vadd.f32 0.0, %v2473
      %2475 = vmatmul.f32.gmra.mxu0 %v2454
      %v2476 = vpop.f32.mrf.mxu0
      %v2477 = vadd.f32 0.0, %v2476
      %2478 = vdwg.mxu0
      %2479 = vmatpush.msra.mxu0 0.0
      %2480 = vmatpush.msra.mxu0 0.0
      %2481 = vmatpush.msra.mxu0 0.0
      %2482 = vmatpush.msra.mxu0 0.0
      %2483 = vmatpush.msra.mxu0 0.0
      %2484 = vmatpush.msra.mxu0 0.0
      %2485 = vmatpush.msra.mxu0 0.0
      %2486 = vmatpush.msra.mxu0 0.0
      %2487 = vmatpush.msra.mxu0 0.0
      %2488 = vmatpush.msra.mxu0 0.0
      %2489 = vmatpush.msra.mxu0 0.0
      %2490 = vmatpush.msra.mxu0 0.0
      %2491 = vmatpush.msra.mxu0 0.0
      %2492 = vmatpush.msra.mxu0 %v2446
      %2493 = vmatpush.msra.mxu0 %v2444
      %2494 = vmatpush.msra.mxu0 %v2442
      %2495 = vmatmul.f32.gmra.mxu0 %v2451
      %v2496 = vpop.f32.mrf.mxu0
      %v2497 = vadd.f32 0.0, %v2496
      %2498 = vmatmul.f32.gmra.mxu0 %v2454
      %v2499 = vpop.f32.mrf.mxu0
      %v2500 = vadd.f32 0.0, %v2499
      %2501 = vdwg.mxu0
      %v2502 = vadd.f32 %v2411, %v2474
      %v2503 = vadd.f32 %v2412, %v2497
      %v2504 = vadd.f32 %v2413, %v2477
      %v2505 = vadd.f32 %v2414, %v2500
      %vm2506 = vcmp.ge.f32.partialorder %v2502, 0.0
      %vm2507 = vcmp.ge.f32.partialorder %v2503, 0.0
      %vm2508 = vcmp.ge.f32.partialorder %v2504, 0.0
      %vm2509 = vcmp.ge.f32.partialorder %v2505, 0.0
      %v2510 = vmul.f32 %v2502, 0.01
      %v2511 = vmul.f32 %v2503, 0.01
      %v2512 = vmul.f32 %v2504, 0.01
      %v2513 = vmul.f32 %v2505, 0.01
      %v2514 = vsel %vm2506, %v2502, %v2510
      %v2515 = vsel %vm2507, %v2503, %v2511
      %v2516 = vsel %vm2508, %v2504, %v2512
      %v2517 = vsel %vm2509, %v2505, %v2513
      %v2518 = vld [vmem:[%s5] sm:$0xff]
      %v2519 = vld [vmem:[%s5 + $0x8] sm:$0xff]
      %2520 = vrot.lane.b32.xlu0 %v2514, 34
      %v2521 = vpop.permute.xlu0 %2520
      %2522 = vrot.lane.b32.xlu0 %v2516, 34
      %v2523 = vpop.permute.xlu0 %2522
      %2524 = vrot.lane.b32.xlu0 %v2515, 34
      %v2525 = vpop.permute.xlu0 %2524
      %2526 = vrot.lane.b32.xlu0 %v2517, 34
      %v2527 = vpop.permute.xlu0 %2526
      %v2528 = vsel %vm276, %v2521, %v2525
      %v2529 = vsel %vm276, %v2523, %v2527
      %v2530 = vsel %vm276, %v2525, %v2521
      %v2531 = vsel %vm276, %v2527, %v2523
      %v2532 = vmul.f32 %v2530, %v285
      %v2533 = vmul.f32 %v2528, %v286
      %v2534 = vmul.f32 %v2531, %v285
      %v2535 = vmul.f32 %v2529, %v286
      %v2536 = vld [vmem:[%s2] sm:$0xff]
      %vm2537 = vcmask 130048
      %v2539 = vsel %vm2537, %v2536, 0
      %2541 = vmatpush.msra.mxu0 0.0
      %2542 = vmatpush.msra.mxu0 0.0
      %2543 = vmatpush.msra.mxu0 0.0
      %2544 = vmatpush.msra.mxu0 0.0
      %2545 = vmatpush.msra.mxu0 0.0
      %2546 = vmatpush.msra.mxu0 0.0
      %2547 = vmatpush.msra.mxu0 0.0
      %2548 = vmatpush.msra.mxu0 0.0
      %2549 = vmatpush.msra.mxu0 0.0
      %2550 = vmatpush.msra.mxu0 0.0
      %2551 = vmatpush.msra.mxu0 0.0
      %2552 = vmatpush.msra.mxu0 0.0
      %2553 = vmatpush.msra.mxu0 0.0
      %2554 = vmatpush.msra.mxu0 0.0
      %2555 = vmatpush.msra.mxu0 %v2534
      %2556 = vmatpush.msra.mxu0 %v2532
      %2557 = vmatmul.f32.gmra.mxu0 %v2539
      %v2558 = vpop.f32.mrf.mxu0
      %v2559 = vadd.f32 0.0, %v2558
      %2560 = vdwg.mxu0
      %2561 = vmatpush.msra.mxu0 0.0
      %2562 = vmatpush.msra.mxu0 0.0
      %2563 = vmatpush.msra.mxu0 0.0
      %2564 = vmatpush.msra.mxu0 0.0
      %2565 = vmatpush.msra.mxu0 0.0
      %2566 = vmatpush.msra.mxu0 0.0
      %2567 = vmatpush.msra.mxu0 0.0
      %2568 = vmatpush.msra.mxu0 0.0
      %2569 = vmatpush.msra.mxu0 0.0
      %2570 = vmatpush.msra.mxu0 0.0
      %2571 = vmatpush.msra.mxu0 0.0
      %2572 = vmatpush.msra.mxu0 0.0
      %2573 = vmatpush.msra.mxu0 0.0
      %2574 = vmatpush.msra.mxu0 0.0
      %2575 = vmatpush.msra.mxu0 %v2535
      %2576 = vmatpush.msra.mxu0 %v2533
      %2577 = vmatmul.f32.gmra.mxu0 %v2539
      %v2578 = vpop.f32.mrf.mxu0
      %v2579 = vadd.f32 0.0, %v2578
      %2580 = vdwg.mxu0
      %v2581 = vadd.f32 %v2518, %v2559
      %v2582 = vadd.f32 %v2519, %v2579
      %2583 = vrot.lane.b32.xlu0 %v2514, 33
      %v2584 = vpop.permute.xlu0 %2583
      %2585 = vrot.lane.b32.xlu0 %v2516, 33
      %v2586 = vpop.permute.xlu0 %2585
      %2587 = vrot.lane.b32.xlu0 %v2515, 33
      %v2588 = vpop.permute.xlu0 %2587
      %2589 = vrot.lane.b32.xlu0 %v2517, 33
      %v2590 = vpop.permute.xlu0 %2589
      %v2591 = vsel %vm366, %v2584, %v2588
      %v2592 = vsel %vm366, %v2586, %v2590
      %v2593 = vsel %vm366, %v2588, %v2584
      %v2594 = vsel %vm366, %v2590, %v2586
      %v2595 = vmul.f32 %v2593, %v376
      %v2596 = vmul.f32 %v2591, %v377
      %v2597 = vmul.f32 %v2594, %v376
      %v2598 = vmul.f32 %v2592, %v377
      %s2599 = scalar_lea.vmem %s2, 8
      %v2600 = vld [vmem:[%s2599] sm:$0xff]
      %v2602 = vsel %vm2537, %v2600, 0
      %2604 = vmatpush.msra.mxu0 0.0
      %2605 = vmatpush.msra.mxu0 0.0
      %2606 = vmatpush.msra.mxu0 0.0
      %2607 = vmatpush.msra.mxu0 0.0
      %2608 = vmatpush.msra.mxu0 0.0
      %2609 = vmatpush.msra.mxu0 0.0
      %2610 = vmatpush.msra.mxu0 0.0
      %2611 = vmatpush.msra.mxu0 0.0
      %2612 = vmatpush.msra.mxu0 0.0
      %2613 = vmatpush.msra.mxu0 0.0
      %2614 = vmatpush.msra.mxu0 0.0
      %2615 = vmatpush.msra.mxu0 0.0
      %2616 = vmatpush.msra.mxu0 0.0
      %2617 = vmatpush.msra.mxu0 0.0
      %2618 = vmatpush.msra.mxu0 %v2597
      %2619 = vmatpush.msra.mxu0 %v2595
      %2620 = vmatmul.f32.gmra.mxu0 %v2602
      %v2621 = vpop.f32.mrf.mxu0
      %v2622 = vadd.f32 0.0, %v2621
      %2623 = vdwg.mxu0
      %2624 = vmatpush.msra.mxu0 0.0
      %2625 = vmatpush.msra.mxu0 0.0
      %2626 = vmatpush.msra.mxu0 0.0
      %2627 = vmatpush.msra.mxu0 0.0
      %2628 = vmatpush.msra.mxu0 0.0
      %2629 = vmatpush.msra.mxu0 0.0
      %2630 = vmatpush.msra.mxu0 0.0
      %2631 = vmatpush.msra.mxu0 0.0
      %2632 = vmatpush.msra.mxu0 0.0
      %2633 = vmatpush.msra.mxu0 0.0
      %2634 = vmatpush.msra.mxu0 0.0
      %2635 = vmatpush.msra.mxu0 0.0
      %2636 = vmatpush.msra.mxu0 0.0
      %2637 = vmatpush.msra.mxu0 0.0
      %2638 = vmatpush.msra.mxu0 %v2598
      %2639 = vmatpush.msra.mxu0 %v2596
      %2640 = vmatmul.f32.gmra.mxu0 %v2602
      %v2641 = vpop.f32.mrf.mxu0
      %v2642 = vadd.f32 0.0, %v2641
      %2643 = vdwg.mxu0
      %v2644 = vadd.f32 %v2581, %v2622
      %v2645 = vadd.f32 %v2582, %v2642
      %2646 = vrot.lane.b32.xlu0 %v2514, 32
      %v2647 = vpop.permute.xlu0 %2646
      %2648 = vrot.lane.b32.xlu0 %v2516, 32
      %v2649 = vpop.permute.xlu0 %2648
      %2650 = vrot.lane.b32.xlu0 %v2515, 32
      %v2651 = vpop.permute.xlu0 %2650
      %2652 = vrot.lane.b32.xlu0 %v2517, 32
      %v2653 = vpop.permute.xlu0 %2652
      %v2654 = vsel %vm457, %v2647, %v2651
      %v2655 = vsel %vm457, %v2649, %v2653
      %v2656 = vsel %vm457, %v2651, %v2647
      %v2657 = vsel %vm457, %v2653, %v2649
      %v2658 = vmul.f32 %v2656, %v467
      %v2659 = vmul.f32 %v2654, %v468
      %v2660 = vmul.f32 %v2657, %v467
      %v2661 = vmul.f32 %v2655, %v468
      %s2662 = scalar_lea.vmem %s2, 16
      %v2663 = vld [vmem:[%s2662] sm:$0xff]
      %v2665 = vsel %vm2537, %v2663, 0
      %2667 = vmatpush.msra.mxu0 0.0
      %2668 = vmatpush.msra.mxu0 0.0
      %2669 = vmatpush.msra.mxu0 0.0
      %2670 = vmatpush.msra.mxu0 0.0
      %2671 = vmatpush.msra.mxu0 0.0
      %2672 = vmatpush.msra.mxu0 0.0
      %2673 = vmatpush.msra.mxu0 0.0
      %2674 = vmatpush.msra.mxu0 0.0
      %2675 = vmatpush.msra.mxu0 0.0
      %2676 = vmatpush.msra.mxu0 0.0
      %2677 = vmatpush.msra.mxu0 0.0
      %2678 = vmatpush.msra.mxu0 0.0
      %2679 = vmatpush.msra.mxu0 0.0
      %2680 = vmatpush.msra.mxu0 0.0
      %2681 = vmatpush.msra.mxu0 %v2660
      %2682 = vmatpush.msra.mxu0 %v2658
      %2683 = vmatmul.f32.gmra.mxu0 %v2665
      %v2684 = vpop.f32.mrf.mxu0
      %v2685 = vadd.f32 0.0, %v2684
      %2686 = vdwg.mxu0
      %2687 = vmatpush.msra.mxu0 0.0
      %2688 = vmatpush.msra.mxu0 0.0
      %2689 = vmatpush.msra.mxu0 0.0
      %2690 = vmatpush.msra.mxu0 0.0
      %2691 = vmatpush.msra.mxu0 0.0
      %2692 = vmatpush.msra.mxu0 0.0
      %2693 = vmatpush.msra.mxu0 0.0
      %2694 = vmatpush.msra.mxu0 0.0
      %2695 = vmatpush.msra.mxu0 0.0
      %2696 = vmatpush.msra.mxu0 0.0
      %2697 = vmatpush.msra.mxu0 0.0
      %2698 = vmatpush.msra.mxu0 0.0
      %2699 = vmatpush.msra.mxu0 0.0
      %2700 = vmatpush.msra.mxu0 0.0
      %2701 = vmatpush.msra.mxu0 %v2661
      %2702 = vmatpush.msra.mxu0 %v2659
      %2703 = vmatmul.f32.gmra.mxu0 %v2665
      %v2704 = vpop.f32.mrf.mxu0
      %v2705 = vadd.f32 0.0, %v2704
      %2706 = vdwg.mxu0
      %v2707 = vadd.f32 %v2644, %v2685
      %v2708 = vadd.f32 %v2645, %v2705
      %2709 = vrot.lane.b32.xlu0 %v2514, 31
      %v2710 = vpop.permute.xlu0 %2709
      %2711 = vrot.lane.b32.xlu0 %v2516, 31
      %v2712 = vpop.permute.xlu0 %2711
      %2713 = vrot.lane.b32.xlu0 %v2515, 31
      %v2714 = vpop.permute.xlu0 %2713
      %2715 = vrot.lane.b32.xlu0 %v2517, 31
      %v2716 = vpop.permute.xlu0 %2715
      %v2717 = vsel %vm548, %v2710, %v2714
      %v2718 = vsel %vm548, %v2712, %v2716
      %v2719 = vsel %vm548, %v2714, %v2710
      %v2720 = vsel %vm548, %v2716, %v2712
      %v2721 = vmul.f32 %v2719, %v558
      %v2722 = vmul.f32 %v2717, %v559
      %v2723 = vmul.f32 %v2720, %v558
      %v2724 = vmul.f32 %v2718, %v559
      %s2725 = scalar_lea.vmem %s2, 24
      %v2726 = vld [vmem:[%s2725] sm:$0xff]
      %v2728 = vsel %vm2537, %v2726, 0
      %2730 = vmatpush.msra.mxu0 0.0
      %2731 = vmatpush.msra.mxu0 0.0
      %2732 = vmatpush.msra.mxu0 0.0
      %2733 = vmatpush.msra.mxu0 0.0
      %2734 = vmatpush.msra.mxu0 0.0
      %2735 = vmatpush.msra.mxu0 0.0
      %2736 = vmatpush.msra.mxu0 0.0
      %2737 = vmatpush.msra.mxu0 0.0
      %2738 = vmatpush.msra.mxu0 0.0
      %2739 = vmatpush.msra.mxu0 0.0
      %2740 = vmatpush.msra.mxu0 0.0
      %2741 = vmatpush.msra.mxu0 0.0
      %2742 = vmatpush.msra.mxu0 0.0
      %2743 = vmatpush.msra.mxu0 0.0
      %2744 = vmatpush.msra.mxu0 %v2723
      %2745 = vmatpush.msra.mxu0 %v2721
      %2746 = vmatmul.f32.gmra.mxu0 %v2728
      %v2747 = vpop.f32.mrf.mxu0
      %v2748 = vadd.f32 0.0, %v2747
      %2749 = vdwg.mxu0
      %2750 = vmatpush.msra.mxu0 0.0
      %2751 = vmatpush.msra.mxu0 0.0
      %2752 = vmatpush.msra.mxu0 0.0
      %2753 = vmatpush.msra.mxu0 0.0
      %2754 = vmatpush.msra.mxu0 0.0
      %2755 = vmatpush.msra.mxu0 0.0
      %2756 = vmatpush.msra.mxu0 0.0
      %2757 = vmatpush.msra.mxu0 0.0
      %2758 = vmatpush.msra.mxu0 0.0
      %2759 = vmatpush.msra.mxu0 0.0
      %2760 = vmatpush.msra.mxu0 0.0
      %2761 = vmatpush.msra.mxu0 0.0
      %2762 = vmatpush.msra.mxu0 0.0
      %2763 = vmatpush.msra.mxu0 0.0
      %2764 = vmatpush.msra.mxu0 %v2724
      %2765 = vmatpush.msra.mxu0 %v2722
      %2766 = vmatmul.f32.gmra.mxu0 %v2728
      %v2767 = vpop.f32.mrf.mxu0
      %v2768 = vadd.f32 0.0, %v2767
      %2769 = vdwg.mxu0
      %v2770 = vadd.f32 %v2707, %v2748
      %v2771 = vadd.f32 %v2708, %v2768
      %2772 = vrot.lane.b32.xlu0 %v2514, 30
      %v2773 = vpop.permute.xlu0 %2772
      %2774 = vrot.lane.b32.xlu0 %v2516, 30
      %v2775 = vpop.permute.xlu0 %2774
      %2776 = vrot.lane.b32.xlu0 %v2515, 30
      %v2777 = vpop.permute.xlu0 %2776
      %2778 = vrot.lane.b32.xlu0 %v2517, 30
      %v2779 = vpop.permute.xlu0 %2778
      %v2780 = vsel %vm639, %v2773, %v2777
      %v2781 = vsel %vm639, %v2775, %v2779
      %v2782 = vsel %vm639, %v2777, %v2773
      %v2783 = vsel %vm639, %v2779, %v2775
      %v2784 = vmul.f32 %v2782, %v649
      %v2785 = vmul.f32 %v2780, %v650
      %v2786 = vmul.f32 %v2783, %v649
      %v2787 = vmul.f32 %v2781, %v650
      %s2788 = scalar_lea.vmem %s2, 32
      %v2789 = vld [vmem:[%s2788] sm:$0xff]
      %v2791 = vsel %vm2537, %v2789, 0
      %2793 = vmatpush.msra.mxu0 0.0
      %2794 = vmatpush.msra.mxu0 0.0
      %2795 = vmatpush.msra.mxu0 0.0
      %2796 = vmatpush.msra.mxu0 0.0
      %2797 = vmatpush.msra.mxu0 0.0
      %2798 = vmatpush.msra.mxu0 0.0
      %2799 = vmatpush.msra.mxu0 0.0
      %2800 = vmatpush.msra.mxu0 0.0
      %2801 = vmatpush.msra.mxu0 0.0
      %2802 = vmatpush.msra.mxu0 0.0
      %2803 = vmatpush.msra.mxu0 0.0
      %2804 = vmatpush.msra.mxu0 0.0
      %2805 = vmatpush.msra.mxu0 0.0
      %2806 = vmatpush.msra.mxu0 0.0
      %2807 = vmatpush.msra.mxu0 %v2786
      %2808 = vmatpush.msra.mxu0 %v2784
      %2809 = vmatmul.f32.gmra.mxu0 %v2791
      %v2810 = vpop.f32.mrf.mxu0
      %v2811 = vadd.f32 0.0, %v2810
      %2812 = vdwg.mxu0
      %2813 = vmatpush.msra.mxu0 0.0
      %2814 = vmatpush.msra.mxu0 0.0
      %2815 = vmatpush.msra.mxu0 0.0
      %2816 = vmatpush.msra.mxu0 0.0
      %2817 = vmatpush.msra.mxu0 0.0
      %2818 = vmatpush.msra.mxu0 0.0
      %2819 = vmatpush.msra.mxu0 0.0
      %2820 = vmatpush.msra.mxu0 0.0
      %2821 = vmatpush.msra.mxu0 0.0
      %2822 = vmatpush.msra.mxu0 0.0
      %2823 = vmatpush.msra.mxu0 0.0
      %2824 = vmatpush.msra.mxu0 0.0
      %2825 = vmatpush.msra.mxu0 0.0
      %2826 = vmatpush.msra.mxu0 0.0
      %2827 = vmatpush.msra.mxu0 %v2787
      %2828 = vmatpush.msra.mxu0 %v2785
      %2829 = vmatmul.f32.gmra.mxu0 %v2791
      %v2830 = vpop.f32.mrf.mxu0
      %v2831 = vadd.f32 0.0, %v2830
      %2832 = vdwg.mxu0
      %v2833 = vadd.f32 %v2770, %v2811
      %v2834 = vadd.f32 %v2771, %v2831
      %2835 = vrot.lane.b32.xlu0 %v2514, 18
      %v2836 = vpop.permute.xlu0 %2835
      %2837 = vrot.lane.b32.xlu0 %v2516, 18
      %v2838 = vpop.permute.xlu0 %2837
      %2839 = vrot.lane.b32.xlu0 %v2515, 18
      %v2840 = vpop.permute.xlu0 %2839
      %2841 = vrot.lane.b32.xlu0 %v2517, 18
      %v2842 = vpop.permute.xlu0 %2841
      %v2843 = vsel %vm730, %v2836, %v2840
      %v2844 = vsel %vm730, %v2838, %v2842
      %v2845 = vsel %vm730, %v2840, %v2836
      %v2846 = vsel %vm730, %v2842, %v2838
      %v2847 = vmul.f32 %v2845, %v740
      %v2848 = vmul.f32 %v2843, %v741
      %v2849 = vmul.f32 %v2846, %v740
      %v2850 = vmul.f32 %v2844, %v741
      %s2851 = scalar_lea.vmem %s2, 40
      %v2852 = vld [vmem:[%s2851] sm:$0xff]
      %v2854 = vsel %vm2537, %v2852, 0
      %2856 = vmatpush.msra.mxu0 0.0
      %2857 = vmatpush.msra.mxu0 0.0
      %2858 = vmatpush.msra.mxu0 0.0
      %2859 = vmatpush.msra.mxu0 0.0
      %2860 = vmatpush.msra.mxu0 0.0
      %2861 = vmatpush.msra.mxu0 0.0
      %2862 = vmatpush.msra.mxu0 0.0
      %2863 = vmatpush.msra.mxu0 0.0
      %2864 = vmatpush.msra.mxu0 0.0
      %2865 = vmatpush.msra.mxu0 0.0
      %2866 = vmatpush.msra.mxu0 0.0
      %2867 = vmatpush.msra.mxu0 0.0
      %2868 = vmatpush.msra.mxu0 0.0
      %2869 = vmatpush.msra.mxu0 0.0
      %2870 = vmatpush.msra.mxu0 %v2849
      %2871 = vmatpush.msra.mxu0 %v2847
      %2872 = vmatmul.f32.gmra.mxu0 %v2854
      %v2873 = vpop.f32.mrf.mxu0
      %v2874 = vadd.f32 0.0, %v2873
      %2875 = vdwg.mxu0
      %2876 = vmatpush.msra.mxu0 0.0
      %2877 = vmatpush.msra.mxu0 0.0
      %2878 = vmatpush.msra.mxu0 0.0
      %2879 = vmatpush.msra.mxu0 0.0
      %2880 = vmatpush.msra.mxu0 0.0
      %2881 = vmatpush.msra.mxu0 0.0
      %2882 = vmatpush.msra.mxu0 0.0
      %2883 = vmatpush.msra.mxu0 0.0
      %2884 = vmatpush.msra.mxu0 0.0
      %2885 = vmatpush.msra.mxu0 0.0
      %2886 = vmatpush.msra.mxu0 0.0
      %2887 = vmatpush.msra.mxu0 0.0
      %2888 = vmatpush.msra.mxu0 0.0
      %2889 = vmatpush.msra.mxu0 0.0
      %2890 = vmatpush.msra.mxu0 %v2850
      %2891 = vmatpush.msra.mxu0 %v2848
      %2892 = vmatmul.f32.gmra.mxu0 %v2854
      %v2893 = vpop.f32.mrf.mxu0
      %v2894 = vadd.f32 0.0, %v2893
      %2895 = vdwg.mxu0
      %v2896 = vadd.f32 %v2833, %v2874
      %v2897 = vadd.f32 %v2834, %v2894
      %2898 = vrot.lane.b32.xlu0 %v2514, 17
      %v2899 = vpop.permute.xlu0 %2898
      %2900 = vrot.lane.b32.xlu0 %v2516, 17
      %v2901 = vpop.permute.xlu0 %2900
      %2902 = vrot.lane.b32.xlu0 %v2515, 17
      %v2903 = vpop.permute.xlu0 %2902
      %2904 = vrot.lane.b32.xlu0 %v2517, 17
      %v2905 = vpop.permute.xlu0 %2904
      %v2906 = vsel %vm821, %v2899, %v2903
      %v2907 = vsel %vm821, %v2901, %v2905
      %v2908 = vsel %vm821, %v2903, %v2899
      %v2909 = vsel %vm821, %v2905, %v2901
      %v2910 = vmul.f32 %v2908, %v831
      %v2911 = vmul.f32 %v2906, %v832
      %v2912 = vmul.f32 %v2909, %v831
      %v2913 = vmul.f32 %v2907, %v832
      %s2914 = scalar_lea.vmem %s2, 48
      %v2915 = vld [vmem:[%s2914] sm:$0xff]
      %v2917 = vsel %vm2537, %v2915, 0
      %2919 = vmatpush.msra.mxu0 0.0
      %2920 = vmatpush.msra.mxu0 0.0
      %2921 = vmatpush.msra.mxu0 0.0
      %2922 = vmatpush.msra.mxu0 0.0
      %2923 = vmatpush.msra.mxu0 0.0
      %2924 = vmatpush.msra.mxu0 0.0
      %2925 = vmatpush.msra.mxu0 0.0
      %2926 = vmatpush.msra.mxu0 0.0
      %2927 = vmatpush.msra.mxu0 0.0
      %2928 = vmatpush.msra.mxu0 0.0
      %2929 = vmatpush.msra.mxu0 0.0
      %2930 = vmatpush.msra.mxu0 0.0
      %2931 = vmatpush.msra.mxu0 0.0
      %2932 = vmatpush.msra.mxu0 0.0
      %2933 = vmatpush.msra.mxu0 %v2912
      %2934 = vmatpush.msra.mxu0 %v2910
      %2935 = vmatmul.f32.gmra.mxu0 %v2917
      %v2936 = vpop.f32.mrf.mxu0
      %v2937 = vadd.f32 0.0, %v2936
      %2938 = vdwg.mxu0
      %2939 = vmatpush.msra.mxu0 0.0
      %2940 = vmatpush.msra.mxu0 0.0
      %2941 = vmatpush.msra.mxu0 0.0
      %2942 = vmatpush.msra.mxu0 0.0
      %2943 = vmatpush.msra.mxu0 0.0
      %2944 = vmatpush.msra.mxu0 0.0
      %2945 = vmatpush.msra.mxu0 0.0
      %2946 = vmatpush.msra.mxu0 0.0
      %2947 = vmatpush.msra.mxu0 0.0
      %2948 = vmatpush.msra.mxu0 0.0
      %2949 = vmatpush.msra.mxu0 0.0
      %2950 = vmatpush.msra.mxu0 0.0
      %2951 = vmatpush.msra.mxu0 0.0
      %2952 = vmatpush.msra.mxu0 0.0
      %2953 = vmatpush.msra.mxu0 %v2913
      %2954 = vmatpush.msra.mxu0 %v2911
      %2955 = vmatmul.f32.gmra.mxu0 %v2917
      %v2956 = vpop.f32.mrf.mxu0
      %v2957 = vadd.f32 0.0, %v2956
      %2958 = vdwg.mxu0
      %v2959 = vadd.f32 %v2896, %v2937
      %v2960 = vadd.f32 %v2897, %v2957
      %2961 = vrot.lane.b32.xlu0 %v2514, 16
      %v2962 = vpop.permute.xlu0 %2961
      %2963 = vrot.lane.b32.xlu0 %v2516, 16
      %v2964 = vpop.permute.xlu0 %2963
      %2965 = vrot.lane.b32.xlu0 %v2515, 16
      %v2966 = vpop.permute.xlu0 %2965
      %2967 = vrot.lane.b32.xlu0 %v2517, 16
      %v2968 = vpop.permute.xlu0 %2967
      %v2969 = vsel %vm912, %v2962, %v2966
      %v2970 = vsel %vm912, %v2964, %v2968
      %v2971 = vsel %vm912, %v2966, %v2962
      %v2972 = vsel %vm912, %v2968, %v2964
      %v2973 = vmul.f32 %v2971, %v922
      %v2974 = vmul.f32 %v2969, %v923
      %v2975 = vmul.f32 %v2972, %v922
      %v2976 = vmul.f32 %v2970, %v923
      %s2977 = scalar_lea.vmem %s2, 56
      %v2978 = vld [vmem:[%s2977] sm:$0xff]
      %v2980 = vsel %vm2537, %v2978, 0
      %2982 = vmatpush.msra.mxu0 0.0
      %2983 = vmatpush.msra.mxu0 0.0
      %2984 = vmatpush.msra.mxu0 0.0
      %2985 = vmatpush.msra.mxu0 0.0
      %2986 = vmatpush.msra.mxu0 0.0
      %2987 = vmatpush.msra.mxu0 0.0
      %2988 = vmatpush.msra.mxu0 0.0
      %2989 = vmatpush.msra.mxu0 0.0
      %2990 = vmatpush.msra.mxu0 0.0
      %2991 = vmatpush.msra.mxu0 0.0
      %2992 = vmatpush.msra.mxu0 0.0
      %2993 = vmatpush.msra.mxu0 0.0
      %2994 = vmatpush.msra.mxu0 0.0
      %2995 = vmatpush.msra.mxu0 0.0
      %2996 = vmatpush.msra.mxu0 %v2975
      %2997 = vmatpush.msra.mxu0 %v2973
      %2998 = vmatmul.f32.gmra.mxu0 %v2980
      %v2999 = vpop.f32.mrf.mxu0
      %v3000 = vadd.f32 0.0, %v2999
      %3001 = vdwg.mxu0
      %3002 = vmatpush.msra.mxu0 0.0
      %3003 = vmatpush.msra.mxu0 0.0
      %3004 = vmatpush.msra.mxu0 0.0
      %3005 = vmatpush.msra.mxu0 0.0
      %3006 = vmatpush.msra.mxu0 0.0
      %3007 = vmatpush.msra.mxu0 0.0
      %3008 = vmatpush.msra.mxu0 0.0
      %3009 = vmatpush.msra.mxu0 0.0
      %3010 = vmatpush.msra.mxu0 0.0
      %3011 = vmatpush.msra.mxu0 0.0
      %3012 = vmatpush.msra.mxu0 0.0
      %3013 = vmatpush.msra.mxu0 0.0
      %3014 = vmatpush.msra.mxu0 0.0
      %3015 = vmatpush.msra.mxu0 0.0
      %3016 = vmatpush.msra.mxu0 %v2976
      %3017 = vmatpush.msra.mxu0 %v2974
      %3018 = vmatmul.f32.gmra.mxu0 %v2980
      %v3019 = vpop.f32.mrf.mxu0
      %v3020 = vadd.f32 0.0, %v3019
      %3021 = vdwg.mxu0
      %v3022 = vadd.f32 %v2959, %v3000
      %v3023 = vadd.f32 %v2960, %v3020
      %3024 = vrot.lane.b32.xlu0 %v2514, 15
      %v3025 = vpop.permute.xlu0 %3024
      %3026 = vrot.lane.b32.xlu0 %v2516, 15
      %v3027 = vpop.permute.xlu0 %3026
      %3028 = vrot.lane.b32.xlu0 %v2515, 15
      %v3029 = vpop.permute.xlu0 %3028
      %3030 = vrot.lane.b32.xlu0 %v2517, 15
      %v3031 = vpop.permute.xlu0 %3030
      %v3032 = vsel %vm1003, %v3025, %v3029
      %v3033 = vsel %vm1003, %v3027, %v3031
      %v3034 = vsel %vm1003, %v3029, %v3025
      %v3035 = vsel %vm1003, %v3031, %v3027
      %v3036 = vmul.f32 %v3034, %v1013
      %v3037 = vmul.f32 %v3032, %v1014
      %v3038 = vmul.f32 %v3035, %v1013
      %v3039 = vmul.f32 %v3033, %v1014
      %s3040 = scalar_lea.vmem %s2, 64
      %v3041 = vld [vmem:[%s3040] sm:$0xff]
      %v3043 = vsel %vm2537, %v3041, 0
      %3045 = vmatpush.msra.mxu0 0.0
      %3046 = vmatpush.msra.mxu0 0.0
      %3047 = vmatpush.msra.mxu0 0.0
      %3048 = vmatpush.msra.mxu0 0.0
      %3049 = vmatpush.msra.mxu0 0.0
      %3050 = vmatpush.msra.mxu0 0.0
      %3051 = vmatpush.msra.mxu0 0.0
      %3052 = vmatpush.msra.mxu0 0.0
      %3053 = vmatpush.msra.mxu0 0.0
      %3054 = vmatpush.msra.mxu0 0.0
      %3055 = vmatpush.msra.mxu0 0.0
      %3056 = vmatpush.msra.mxu0 0.0
      %3057 = vmatpush.msra.mxu0 0.0
      %3058 = vmatpush.msra.mxu0 0.0
      %3059 = vmatpush.msra.mxu0 %v3038
      %3060 = vmatpush.msra.mxu0 %v3036
      %3061 = vmatmul.f32.gmra.mxu0 %v3043
      %v3062 = vpop.f32.mrf.mxu0
      %v3063 = vadd.f32 0.0, %v3062
      %3064 = vdwg.mxu0
      %3065 = vmatpush.msra.mxu0 0.0
      %3066 = vmatpush.msra.mxu0 0.0
      %3067 = vmatpush.msra.mxu0 0.0
      %3068 = vmatpush.msra.mxu0 0.0
      %3069 = vmatpush.msra.mxu0 0.0
      %3070 = vmatpush.msra.mxu0 0.0
      %3071 = vmatpush.msra.mxu0 0.0
      %3072 = vmatpush.msra.mxu0 0.0
      %3073 = vmatpush.msra.mxu0 0.0
      %3074 = vmatpush.msra.mxu0 0.0
      %3075 = vmatpush.msra.mxu0 0.0
      %3076 = vmatpush.msra.mxu0 0.0
      %3077 = vmatpush.msra.mxu0 0.0
      %3078 = vmatpush.msra.mxu0 0.0
      %3079 = vmatpush.msra.mxu0 %v3039
      %3080 = vmatpush.msra.mxu0 %v3037
      %3081 = vmatmul.f32.gmra.mxu0 %v3043
      %v3082 = vpop.f32.mrf.mxu0
      %v3083 = vadd.f32 0.0, %v3082
      %3084 = vdwg.mxu0
      %v3085 = vadd.f32 %v3022, %v3063
      %v3086 = vadd.f32 %v3023, %v3083
      %3087 = vrot.lane.b32.xlu0 %v2514, 14
      %v3088 = vpop.permute.xlu0 %3087
      %3089 = vrot.lane.b32.xlu0 %v2516, 14
      %v3090 = vpop.permute.xlu0 %3089
      %3091 = vrot.lane.b32.xlu0 %v2515, 14
      %v3092 = vpop.permute.xlu0 %3091
      %3093 = vrot.lane.b32.xlu0 %v2517, 14
      %v3094 = vpop.permute.xlu0 %3093
      %v3095 = vsel %vm1094, %v3088, %v3092
      %v3096 = vsel %vm1094, %v3090, %v3094
      %v3097 = vsel %vm1094, %v3092, %v3088
      %v3098 = vsel %vm1094, %v3094, %v3090
      %v3099 = vmul.f32 %v3097, %v1104
      %v3100 = vmul.f32 %v3095, %v1105
      %v3101 = vmul.f32 %v3098, %v1104
      %v3102 = vmul.f32 %v3096, %v1105
      %s3103 = scalar_lea.vmem %s2, 72
      %v3104 = vld [vmem:[%s3103] sm:$0xff]
      %v3106 = vsel %vm2537, %v3104, 0
      %3108 = vmatpush.msra.mxu0 0.0
      %3109 = vmatpush.msra.mxu0 0.0
      %3110 = vmatpush.msra.mxu0 0.0
      %3111 = vmatpush.msra.mxu0 0.0
      %3112 = vmatpush.msra.mxu0 0.0
      %3113 = vmatpush.msra.mxu0 0.0
      %3114 = vmatpush.msra.mxu0 0.0
      %3115 = vmatpush.msra.mxu0 0.0
      %3116 = vmatpush.msra.mxu0 0.0
      %3117 = vmatpush.msra.mxu0 0.0
      %3118 = vmatpush.msra.mxu0 0.0
      %3119 = vmatpush.msra.mxu0 0.0
      %3120 = vmatpush.msra.mxu0 0.0
      %3121 = vmatpush.msra.mxu0 0.0
      %3122 = vmatpush.msra.mxu0 %v3101
      %3123 = vmatpush.msra.mxu0 %v3099
      %3124 = vmatmul.f32.gmra.mxu0 %v3106
      %v3125 = vpop.f32.mrf.mxu0
      %v3126 = vadd.f32 0.0, %v3125
      %3127 = vdwg.mxu0
      %3128 = vmatpush.msra.mxu0 0.0
      %3129 = vmatpush.msra.mxu0 0.0
      %3130 = vmatpush.msra.mxu0 0.0
      %3131 = vmatpush.msra.mxu0 0.0
      %3132 = vmatpush.msra.mxu0 0.0
      %3133 = vmatpush.msra.mxu0 0.0
      %3134 = vmatpush.msra.mxu0 0.0
      %3135 = vmatpush.msra.mxu0 0.0
      %3136 = vmatpush.msra.mxu0 0.0
      %3137 = vmatpush.msra.mxu0 0.0
      %3138 = vmatpush.msra.mxu0 0.0
      %3139 = vmatpush.msra.mxu0 0.0
      %3140 = vmatpush.msra.mxu0 0.0
      %3141 = vmatpush.msra.mxu0 0.0
      %3142 = vmatpush.msra.mxu0 %v3102
      %3143 = vmatpush.msra.mxu0 %v3100
      %3144 = vmatmul.f32.gmra.mxu0 %v3106
      %v3145 = vpop.f32.mrf.mxu0
      %v3146 = vadd.f32 0.0, %v3145
      %3147 = vdwg.mxu0
      %v3148 = vadd.f32 %v3085, %v3126
      %v3149 = vadd.f32 %v3086, %v3146
      %3150 = vrot.lane.b32.xlu0 %v2514, 2
      %v3151 = vpop.permute.xlu0 %3150
      %3152 = vrot.lane.b32.xlu0 %v2516, 2
      %v3153 = vpop.permute.xlu0 %3152
      %3154 = vrot.lane.b32.xlu0 %v2515, 2
      %v3155 = vpop.permute.xlu0 %3154
      %3156 = vrot.lane.b32.xlu0 %v2517, 2
      %v3157 = vpop.permute.xlu0 %3156
      %v3158 = vsel %vm1185, %v3151, %v3155
      %v3159 = vsel %vm1185, %v3153, %v3157
      %v3160 = vsel %vm1185, %v3155, %v3151
      %v3161 = vsel %vm1185, %v3157, %v3153
      %v3162 = vmul.f32 %v3160, %v1195
      %v3163 = vmul.f32 %v3158, %v1196
      %v3164 = vmul.f32 %v3161, %v1195
      %v3165 = vmul.f32 %v3159, %v1196
      %s3166 = scalar_lea.vmem %s2, 80
      %v3167 = vld [vmem:[%s3166] sm:$0xff]
      %v3169 = vsel %vm2537, %v3167, 0
      %3171 = vmatpush.msra.mxu0 0.0
      %3172 = vmatpush.msra.mxu0 0.0
      %3173 = vmatpush.msra.mxu0 0.0
      %3174 = vmatpush.msra.mxu0 0.0
      %3175 = vmatpush.msra.mxu0 0.0
      %3176 = vmatpush.msra.mxu0 0.0
      %3177 = vmatpush.msra.mxu0 0.0
      %3178 = vmatpush.msra.mxu0 0.0
      %3179 = vmatpush.msra.mxu0 0.0
      %3180 = vmatpush.msra.mxu0 0.0
      %3181 = vmatpush.msra.mxu0 0.0
      %3182 = vmatpush.msra.mxu0 0.0
      %3183 = vmatpush.msra.mxu0 0.0
      %3184 = vmatpush.msra.mxu0 0.0
      %3185 = vmatpush.msra.mxu0 %v3164
      %3186 = vmatpush.msra.mxu0 %v3162
      %3187 = vmatmul.f32.gmra.mxu0 %v3169
      %v3188 = vpop.f32.mrf.mxu0
      %v3189 = vadd.f32 0.0, %v3188
      %3190 = vdwg.mxu0
      %3191 = vmatpush.msra.mxu0 0.0
      %3192 = vmatpush.msra.mxu0 0.0
      %3193 = vmatpush.msra.mxu0 0.0
      %3194 = vmatpush.msra.mxu0 0.0
      %3195 = vmatpush.msra.mxu0 0.0
      %3196 = vmatpush.msra.mxu0 0.0
      %3197 = vmatpush.msra.mxu0 0.0
      %3198 = vmatpush.msra.mxu0 0.0
      %3199 = vmatpush.msra.mxu0 0.0
      %3200 = vmatpush.msra.mxu0 0.0
      %3201 = vmatpush.msra.mxu0 0.0
      %3202 = vmatpush.msra.mxu0 0.0
      %3203 = vmatpush.msra.mxu0 0.0
      %3204 = vmatpush.msra.mxu0 0.0
      %3205 = vmatpush.msra.mxu0 %v3165
      %3206 = vmatpush.msra.mxu0 %v3163
      %3207 = vmatmul.f32.gmra.mxu0 %v3169
      %v3208 = vpop.f32.mrf.mxu0
      %v3209 = vadd.f32 0.0, %v3208
      %3210 = vdwg.mxu0
      %v3211 = vadd.f32 %v3148, %v3189
      %v3212 = vadd.f32 %v3149, %v3209
      %3213 = vrot.lane.b32.xlu0 %v2514, 1
      %v3214 = vpop.permute.xlu0 %3213
      %3215 = vrot.lane.b32.xlu0 %v2516, 1
      %v3216 = vpop.permute.xlu0 %3215
      %3217 = vrot.lane.b32.xlu0 %v2515, 1
      %v3218 = vpop.permute.xlu0 %3217
      %3219 = vrot.lane.b32.xlu0 %v2517, 1
      %v3220 = vpop.permute.xlu0 %3219
      %v3221 = vsel %vm1276, %v3214, %v3218
      %v3222 = vsel %vm1276, %v3216, %v3220
      %v3223 = vsel %vm1276, %v3218, %v3214
      %v3224 = vsel %vm1276, %v3220, %v3216
      %v3225 = vmul.f32 %v3223, %v1286
      %v3226 = vmul.f32 %v3221, %v1287
      %v3227 = vmul.f32 %v3224, %v1286
      %v3228 = vmul.f32 %v3222, %v1287
      %s3229 = scalar_lea.vmem %s2, 88
      %v3230 = vld [vmem:[%s3229] sm:$0xff]
      %v3232 = vsel %vm2537, %v3230, 0
      %3234 = vmatpush.msra.mxu0 0.0
      %3235 = vmatpush.msra.mxu0 0.0
      %3236 = vmatpush.msra.mxu0 0.0
      %3237 = vmatpush.msra.mxu0 0.0
      %3238 = vmatpush.msra.mxu0 0.0
      %3239 = vmatpush.msra.mxu0 0.0
      %3240 = vmatpush.msra.mxu0 0.0
      %3241 = vmatpush.msra.mxu0 0.0
      %3242 = vmatpush.msra.mxu0 0.0
      %3243 = vmatpush.msra.mxu0 0.0
      %3244 = vmatpush.msra.mxu0 0.0
      %3245 = vmatpush.msra.mxu0 0.0
      %3246 = vmatpush.msra.mxu0 0.0
      %3247 = vmatpush.msra.mxu0 0.0
      %3248 = vmatpush.msra.mxu0 %v3227
      %3249 = vmatpush.msra.mxu0 %v3225
      %3250 = vmatmul.f32.gmra.mxu0 %v3232
      %v3251 = vpop.f32.mrf.mxu0
      %v3252 = vadd.f32 0.0, %v3251
      %3253 = vdwg.mxu0
      %3254 = vmatpush.msra.mxu0 0.0
      %3255 = vmatpush.msra.mxu0 0.0
      %3256 = vmatpush.msra.mxu0 0.0
      %3257 = vmatpush.msra.mxu0 0.0
      %3258 = vmatpush.msra.mxu0 0.0
      %3259 = vmatpush.msra.mxu0 0.0
      %3260 = vmatpush.msra.mxu0 0.0
      %3261 = vmatpush.msra.mxu0 0.0
      %3262 = vmatpush.msra.mxu0 0.0
      %3263 = vmatpush.msra.mxu0 0.0
      %3264 = vmatpush.msra.mxu0 0.0
      %3265 = vmatpush.msra.mxu0 0.0
      %3266 = vmatpush.msra.mxu0 0.0
      %3267 = vmatpush.msra.mxu0 0.0
      %3268 = vmatpush.msra.mxu0 %v3228
      %3269 = vmatpush.msra.mxu0 %v3226
      %3270 = vmatmul.f32.gmra.mxu0 %v3232
      %v3271 = vpop.f32.mrf.mxu0
      %v3272 = vadd.f32 0.0, %v3271
      %3273 = vdwg.mxu0
      %v3274 = vadd.f32 %v3211, %v3252
      %v3275 = vadd.f32 %v3212, %v3272
      %s3276 = scalar_lea.vmem %s2, 96
      %v3277 = vld [vmem:[%s3276] sm:$0xff]
      %v3279 = vsel %vm2537, %v3277, 0
      %3281 = vmatpush.msra.mxu0 0.0
      %3282 = vmatpush.msra.mxu0 0.0
      %3283 = vmatpush.msra.mxu0 0.0
      %3284 = vmatpush.msra.mxu0 0.0
      %3285 = vmatpush.msra.mxu0 0.0
      %3286 = vmatpush.msra.mxu0 0.0
      %3287 = vmatpush.msra.mxu0 0.0
      %3288 = vmatpush.msra.mxu0 0.0
      %3289 = vmatpush.msra.mxu0 0.0
      %3290 = vmatpush.msra.mxu0 0.0
      %3291 = vmatpush.msra.mxu0 0.0
      %3292 = vmatpush.msra.mxu0 0.0
      %3293 = vmatpush.msra.mxu0 0.0
      %3294 = vmatpush.msra.mxu0 0.0
      %3295 = vmatpush.msra.mxu0 %v2516
      %3296 = vmatpush.msra.mxu0 %v2514
      %3297 = vmatmul.f32.gmra.mxu0 %v3279
      %v3298 = vpop.f32.mrf.mxu0
      %v3299 = vadd.f32 0.0, %v3298
      %3300 = vdwg.mxu0
      %3301 = vmatpush.msra.mxu0 0.0
      %3302 = vmatpush.msra.mxu0 0.0
      %3303 = vmatpush.msra.mxu0 0.0
      %3304 = vmatpush.msra.mxu0 0.0
      %3305 = vmatpush.msra.mxu0 0.0
      %3306 = vmatpush.msra.mxu0 0.0
      %3307 = vmatpush.msra.mxu0 0.0
      %3308 = vmatpush.msra.mxu0 0.0
      %3309 = vmatpush.msra.mxu0 0.0
      %3310 = vmatpush.msra.mxu0 0.0
      %3311 = vmatpush.msra.mxu0 0.0
      %3312 = vmatpush.msra.mxu0 0.0
      %3313 = vmatpush.msra.mxu0 0.0
      %3314 = vmatpush.msra.mxu0 0.0
      %3315 = vmatpush.msra.mxu0 %v2517
      %3316 = vmatpush.msra.mxu0 %v2515
      %3317 = vmatmul.f32.gmra.mxu0 %v3279
      %v3318 = vpop.f32.mrf.mxu0
      %v3319 = vadd.f32 0.0, %v3318
      %3320 = vdwg.mxu0
      %v3321 = vadd.f32 %v3274, %v3299
      %v3322 = vadd.f32 %v3275, %v3319
      %3323 = vrot.lane.b32.xlu0 %v2514, 127
      %v3324 = vpop.permute.xlu0 %3323
      %3325 = vrot.lane.b32.xlu0 %v2516, 127
      %v3326 = vpop.permute.xlu0 %3325
      %3327 = vrot.lane.b32.xlu0 %v2515, 127
      %v3328 = vpop.permute.xlu0 %3327
      %3329 = vrot.lane.b32.xlu0 %v2517, 127
      %v3330 = vpop.permute.xlu0 %3329
      %v3331 = vsel %vm1426, %v3324, %v3328
      %v3332 = vsel %vm1426, %v3326, %v3330
      %v3333 = vsel %vm1426, %v3328, %v3324
      %v3334 = vsel %vm1426, %v3330, %v3326
      %v3335 = vmul.f32 %v3331, %v1436
      %v3336 = vmul.f32 %v3333, %v1437
      %v3337 = vmul.f32 %v3332, %v1436
      %v3338 = vmul.f32 %v3334, %v1437
      %s3339 = scalar_lea.vmem %s2, 104
      %v3340 = vld [vmem:[%s3339] sm:$0xff]
      %v3342 = vsel %vm2537, %v3340, 0
      %3344 = vmatpush.msra.mxu0 0.0
      %3345 = vmatpush.msra.mxu0 0.0
      %3346 = vmatpush.msra.mxu0 0.0
      %3347 = vmatpush.msra.mxu0 0.0
      %3348 = vmatpush.msra.mxu0 0.0
      %3349 = vmatpush.msra.mxu0 0.0
      %3350 = vmatpush.msra.mxu0 0.0
      %3351 = vmatpush.msra.mxu0 0.0
      %3352 = vmatpush.msra.mxu0 0.0
      %3353 = vmatpush.msra.mxu0 0.0
      %3354 = vmatpush.msra.mxu0 0.0
      %3355 = vmatpush.msra.mxu0 0.0
      %3356 = vmatpush.msra.mxu0 0.0
      %3357 = vmatpush.msra.mxu0 0.0
      %3358 = vmatpush.msra.mxu0 %v3337
      %3359 = vmatpush.msra.mxu0 %v3335
      %3360 = vmatmul.f32.gmra.mxu0 %v3342
      %v3361 = vpop.f32.mrf.mxu0
      %v3362 = vadd.f32 0.0, %v3361
      %3363 = vdwg.mxu0
      %3364 = vmatpush.msra.mxu0 0.0
      %3365 = vmatpush.msra.mxu0 0.0
      %3366 = vmatpush.msra.mxu0 0.0
      %3367 = vmatpush.msra.mxu0 0.0
      %3368 = vmatpush.msra.mxu0 0.0
      %3369 = vmatpush.msra.mxu0 0.0
      %3370 = vmatpush.msra.mxu0 0.0
      %3371 = vmatpush.msra.mxu0 0.0
      %3372 = vmatpush.msra.mxu0 0.0
      %3373 = vmatpush.msra.mxu0 0.0
      %3374 = vmatpush.msra.mxu0 0.0
      %3375 = vmatpush.msra.mxu0 0.0
      %3376 = vmatpush.msra.mxu0 0.0
      %3377 = vmatpush.msra.mxu0 0.0
      %3378 = vmatpush.msra.mxu0 %v3338
      %3379 = vmatpush.msra.mxu0 %v3336
      %3380 = vmatmul.f32.gmra.mxu0 %v3342
      %v3381 = vpop.f32.mrf.mxu0
      %v3382 = vadd.f32 0.0, %v3381
      %3383 = vdwg.mxu0
      %v3384 = vadd.f32 %v3321, %v3362
      %v3385 = vadd.f32 %v3322, %v3382
      %3386 = vrot.lane.b32.xlu0 %v2514, 126
      %v3387 = vpop.permute.xlu0 %3386
      %3388 = vrot.lane.b32.xlu0 %v2516, 126
      %v3389 = vpop.permute.xlu0 %3388
      %3390 = vrot.lane.b32.xlu0 %v2515, 126
      %v3391 = vpop.permute.xlu0 %3390
      %3392 = vrot.lane.b32.xlu0 %v2517, 126
      %v3393 = vpop.permute.xlu0 %3392
      %v3394 = vsel %vm1517, %v3387, %v3391
      %v3395 = vsel %vm1517, %v3389, %v3393
      %v3396 = vsel %vm1517, %v3391, %v3387
      %v3397 = vsel %vm1517, %v3393, %v3389
      %v3398 = vmul.f32 %v3394, %v1527
      %v3399 = vmul.f32 %v3396, %v1528
      %v3400 = vmul.f32 %v3395, %v1527
      %v3401 = vmul.f32 %v3397, %v1528
      %s3402 = scalar_lea.vmem %s2, 112
      %v3403 = vld [vmem:[%s3402] sm:$0xff]
      %v3405 = vsel %vm2537, %v3403, 0
      %3407 = vmatpush.msra.mxu0 0.0
      %3408 = vmatpush.msra.mxu0 0.0
      %3409 = vmatpush.msra.mxu0 0.0
      %3410 = vmatpush.msra.mxu0 0.0
      %3411 = vmatpush.msra.mxu0 0.0
      %3412 = vmatpush.msra.mxu0 0.0
      %3413 = vmatpush.msra.mxu0 0.0
      %3414 = vmatpush.msra.mxu0 0.0
      %3415 = vmatpush.msra.mxu0 0.0
      %3416 = vmatpush.msra.mxu0 0.0
      %3417 = vmatpush.msra.mxu0 0.0
      %3418 = vmatpush.msra.mxu0 0.0
      %3419 = vmatpush.msra.mxu0 0.0
      %3420 = vmatpush.msra.mxu0 0.0
      %3421 = vmatpush.msra.mxu0 %v3400
      %3422 = vmatpush.msra.mxu0 %v3398
      %3423 = vmatmul.f32.gmra.mxu0 %v3405
      %v3424 = vpop.f32.mrf.mxu0
      %v3425 = vadd.f32 0.0, %v3424
      %3426 = vdwg.mxu0
      %3427 = vmatpush.msra.mxu0 0.0
      %3428 = vmatpush.msra.mxu0 0.0
      %3429 = vmatpush.msra.mxu0 0.0
      %3430 = vmatpush.msra.mxu0 0.0
      %3431 = vmatpush.msra.mxu0 0.0
      %3432 = vmatpush.msra.mxu0 0.0
      %3433 = vmatpush.msra.mxu0 0.0
      %3434 = vmatpush.msra.mxu0 0.0
      %3435 = vmatpush.msra.mxu0 0.0
      %3436 = vmatpush.msra.mxu0 0.0
      %3437 = vmatpush.msra.mxu0 0.0
      %3438 = vmatpush.msra.mxu0 0.0
      %3439 = vmatpush.msra.mxu0 0.0
      %3440 = vmatpush.msra.mxu0 0.0
      %3441 = vmatpush.msra.mxu0 %v3401
      %3442 = vmatpush.msra.mxu0 %v3399
      %3443 = vmatmul.f32.gmra.mxu0 %v3405
      %v3444 = vpop.f32.mrf.mxu0
      %v3445 = vadd.f32 0.0, %v3444
      %3446 = vdwg.mxu0
      %v3447 = vadd.f32 %v3384, %v3425
      %v3448 = vadd.f32 %v3385, %v3445
      %3449 = vrot.lane.b32.xlu0 %v2514, 114
      %v3450 = vpop.permute.xlu0 %3449
      %3451 = vrot.lane.b32.xlu0 %v2516, 114
      %v3452 = vpop.permute.xlu0 %3451
      %3453 = vrot.lane.b32.xlu0 %v2515, 114
      %v3454 = vpop.permute.xlu0 %3453
      %3455 = vrot.lane.b32.xlu0 %v2517, 114
      %v3456 = vpop.permute.xlu0 %3455
      %v3457 = vsel %vm1608, %v3450, %v3454
      %v3458 = vsel %vm1608, %v3452, %v3456
      %v3459 = vsel %vm1608, %v3454, %v3450
      %v3460 = vsel %vm1608, %v3456, %v3452
      %v3461 = vmul.f32 %v3457, %v1618
      %v3462 = vmul.f32 %v3459, %v1619
      %v3463 = vmul.f32 %v3458, %v1618
      %v3464 = vmul.f32 %v3460, %v1619
      %s3465 = scalar_lea.vmem %s2, 120
      %v3466 = vld [vmem:[%s3465] sm:$0xff]
      %v3468 = vsel %vm2537, %v3466, 0
      %3470 = vmatpush.msra.mxu0 0.0
      %3471 = vmatpush.msra.mxu0 0.0
      %3472 = vmatpush.msra.mxu0 0.0
      %3473 = vmatpush.msra.mxu0 0.0
      %3474 = vmatpush.msra.mxu0 0.0
      %3475 = vmatpush.msra.mxu0 0.0
      %3476 = vmatpush.msra.mxu0 0.0
      %3477 = vmatpush.msra.mxu0 0.0
      %3478 = vmatpush.msra.mxu0 0.0
      %3479 = vmatpush.msra.mxu0 0.0
      %3480 = vmatpush.msra.mxu0 0.0
      %3481 = vmatpush.msra.mxu0 0.0
      %3482 = vmatpush.msra.mxu0 0.0
      %3483 = vmatpush.msra.mxu0 0.0
      %3484 = vmatpush.msra.mxu0 %v3463
      %3485 = vmatpush.msra.mxu0 %v3461
      %3486 = vmatmul.f32.gmra.mxu0 %v3468
      %v3487 = vpop.f32.mrf.mxu0
      %v3488 = vadd.f32 0.0, %v3487
      %3489 = vdwg.mxu0
      %3490 = vmatpush.msra.mxu0 0.0
      %3491 = vmatpush.msra.mxu0 0.0
      %3492 = vmatpush.msra.mxu0 0.0
      %3493 = vmatpush.msra.mxu0 0.0
      %3494 = vmatpush.msra.mxu0 0.0
      %3495 = vmatpush.msra.mxu0 0.0
      %3496 = vmatpush.msra.mxu0 0.0
      %3497 = vmatpush.msra.mxu0 0.0
      %3498 = vmatpush.msra.mxu0 0.0
      %3499 = vmatpush.msra.mxu0 0.0
      %3500 = vmatpush.msra.mxu0 0.0
      %3501 = vmatpush.msra.mxu0 0.0
      %3502 = vmatpush.msra.mxu0 0.0
      %3503 = vmatpush.msra.mxu0 0.0
      %3504 = vmatpush.msra.mxu0 %v3464
      %3505 = vmatpush.msra.mxu0 %v3462
      %3506 = vmatmul.f32.gmra.mxu0 %v3468
      %v3507 = vpop.f32.mrf.mxu0
      %v3508 = vadd.f32 0.0, %v3507
      %3509 = vdwg.mxu0
      %v3510 = vadd.f32 %v3447, %v3488
      %v3511 = vadd.f32 %v3448, %v3508
      %3512 = vrot.lane.b32.xlu0 %v2514, 113
      %v3513 = vpop.permute.xlu0 %3512
      %3514 = vrot.lane.b32.xlu0 %v2516, 113
      %v3515 = vpop.permute.xlu0 %3514
      %3516 = vrot.lane.b32.xlu0 %v2515, 113
      %v3517 = vpop.permute.xlu0 %3516
      %3518 = vrot.lane.b32.xlu0 %v2517, 113
      %v3519 = vpop.permute.xlu0 %3518
      %v3520 = vsel %vm1699, %v3513, %v3517
      %v3521 = vsel %vm1699, %v3515, %v3519
      %v3522 = vsel %vm1699, %v3517, %v3513
      %v3523 = vsel %vm1699, %v3519, %v3515
      %v3524 = vmul.f32 %v3520, %v1709
      %v3525 = vmul.f32 %v3522, %v1710
      %v3526 = vmul.f32 %v3521, %v1709
      %v3527 = vmul.f32 %v3523, %v1710
      %s3528 = scalar_lea.vmem %s2, 128
      %v3529 = vld [vmem:[%s3528] sm:$0xff]
      %v3531 = vsel %vm2537, %v3529, 0
      %3533 = vmatpush.msra.mxu0 0.0
      %3534 = vmatpush.msra.mxu0 0.0
      %3535 = vmatpush.msra.mxu0 0.0
      %3536 = vmatpush.msra.mxu0 0.0
      %3537 = vmatpush.msra.mxu0 0.0
      %3538 = vmatpush.msra.mxu0 0.0
      %3539 = vmatpush.msra.mxu0 0.0
      %3540 = vmatpush.msra.mxu0 0.0
      %3541 = vmatpush.msra.mxu0 0.0
      %3542 = vmatpush.msra.mxu0 0.0
      %3543 = vmatpush.msra.mxu0 0.0
      %3544 = vmatpush.msra.mxu0 0.0
      %3545 = vmatpush.msra.mxu0 0.0
      %3546 = vmatpush.msra.mxu0 0.0
      %3547 = vmatpush.msra.mxu0 %v3526
      %3548 = vmatpush.msra.mxu0 %v3524
      %3549 = vmatmul.f32.gmra.mxu0 %v3531
      %v3550 = vpop.f32.mrf.mxu0
      %v3551 = vadd.f32 0.0, %v3550
      %3552 = vdwg.mxu0
      %3553 = vmatpush.msra.mxu0 0.0
      %3554 = vmatpush.msra.mxu0 0.0
      %3555 = vmatpush.msra.mxu0 0.0
      %3556 = vmatpush.msra.mxu0 0.0
      %3557 = vmatpush.msra.mxu0 0.0
      %3558 = vmatpush.msra.mxu0 0.0
      %3559 = vmatpush.msra.mxu0 0.0
      %3560 = vmatpush.msra.mxu0 0.0
      %3561 = vmatpush.msra.mxu0 0.0
      %3562 = vmatpush.msra.mxu0 0.0
      %3563 = vmatpush.msra.mxu0 0.0
      %3564 = vmatpush.msra.mxu0 0.0
      %3565 = vmatpush.msra.mxu0 0.0
      %3566 = vmatpush.msra.mxu0 0.0
      %3567 = vmatpush.msra.mxu0 %v3527
      %3568 = vmatpush.msra.mxu0 %v3525
      %3569 = vmatmul.f32.gmra.mxu0 %v3531
      %v3570 = vpop.f32.mrf.mxu0
      %v3571 = vadd.f32 0.0, %v3570
      %3572 = vdwg.mxu0
      %v3573 = vadd.f32 %v3510, %v3551
      %v3574 = vadd.f32 %v3511, %v3571
      %3575 = vrot.lane.b32.xlu0 %v2514, 112
      %v3576 = vpop.permute.xlu0 %3575
      %3577 = vrot.lane.b32.xlu0 %v2516, 112
      %v3578 = vpop.permute.xlu0 %3577
      %3579 = vrot.lane.b32.xlu0 %v2515, 112
      %v3580 = vpop.permute.xlu0 %3579
      %3581 = vrot.lane.b32.xlu0 %v2517, 112
      %v3582 = vpop.permute.xlu0 %3581
      %v3583 = vsel %vm1790, %v3576, %v3580
      %v3584 = vsel %vm1790, %v3578, %v3582
      %v3585 = vsel %vm1790, %v3580, %v3576
      %v3586 = vsel %vm1790, %v3582, %v3578
      %v3587 = vmul.f32 %v3583, %v1800
      %v3588 = vmul.f32 %v3585, %v1801
      %v3589 = vmul.f32 %v3584, %v1800
      %v3590 = vmul.f32 %v3586, %v1801
      %s3591 = scalar_lea.vmem %s2, 136
      %v3592 = vld [vmem:[%s3591] sm:$0xff]
      %v3594 = vsel %vm2537, %v3592, 0
      %3596 = vmatpush.msra.mxu0 0.0
      %3597 = vmatpush.msra.mxu0 0.0
      %3598 = vmatpush.msra.mxu0 0.0
      %3599 = vmatpush.msra.mxu0 0.0
      %3600 = vmatpush.msra.mxu0 0.0
      %3601 = vmatpush.msra.mxu0 0.0
      %3602 = vmatpush.msra.mxu0 0.0
      %3603 = vmatpush.msra.mxu0 0.0
      %3604 = vmatpush.msra.mxu0 0.0
      %3605 = vmatpush.msra.mxu0 0.0
      %3606 = vmatpush.msra.mxu0 0.0
      %3607 = vmatpush.msra.mxu0 0.0
      %3608 = vmatpush.msra.mxu0 0.0
      %3609 = vmatpush.msra.mxu0 0.0
      %3610 = vmatpush.msra.mxu0 %v3589
      %3611 = vmatpush.msra.mxu0 %v3587
      %3612 = vmatmul.f32.gmra.mxu0 %v3594
      %v3613 = vpop.f32.mrf.mxu0
      %v3614 = vadd.f32 0.0, %v3613
      %3615 = vdwg.mxu0
      %3616 = vmatpush.msra.mxu0 0.0
      %3617 = vmatpush.msra.mxu0 0.0
      %3618 = vmatpush.msra.mxu0 0.0
      %3619 = vmatpush.msra.mxu0 0.0
      %3620 = vmatpush.msra.mxu0 0.0
      %3621 = vmatpush.msra.mxu0 0.0
      %3622 = vmatpush.msra.mxu0 0.0
      %3623 = vmatpush.msra.mxu0 0.0
      %3624 = vmatpush.msra.mxu0 0.0
      %3625 = vmatpush.msra.mxu0 0.0
      %3626 = vmatpush.msra.mxu0 0.0
      %3627 = vmatpush.msra.mxu0 0.0
      %3628 = vmatpush.msra.mxu0 0.0
      %3629 = vmatpush.msra.mxu0 0.0
      %3630 = vmatpush.msra.mxu0 %v3590
      %3631 = vmatpush.msra.mxu0 %v3588
      %3632 = vmatmul.f32.gmra.mxu0 %v3594
      %v3633 = vpop.f32.mrf.mxu0
      %v3634 = vadd.f32 0.0, %v3633
      %3635 = vdwg.mxu0
      %v3636 = vadd.f32 %v3573, %v3614
      %v3637 = vadd.f32 %v3574, %v3634
      %3638 = vrot.lane.b32.xlu0 %v2514, 111
      %v3639 = vpop.permute.xlu0 %3638
      %3640 = vrot.lane.b32.xlu0 %v2516, 111
      %v3641 = vpop.permute.xlu0 %3640
      %3642 = vrot.lane.b32.xlu0 %v2515, 111
      %v3643 = vpop.permute.xlu0 %3642
      %3644 = vrot.lane.b32.xlu0 %v2517, 111
      %v3645 = vpop.permute.xlu0 %3644
      %v3646 = vsel %vm1881, %v3639, %v3643
      %v3647 = vsel %vm1881, %v3641, %v3645
      %v3648 = vsel %vm1881, %v3643, %v3639
      %v3649 = vsel %vm1881, %v3645, %v3641
      %v3650 = vmul.f32 %v3646, %v1891
      %v3651 = vmul.f32 %v3648, %v1892
      %v3652 = vmul.f32 %v3647, %v1891
      %v3653 = vmul.f32 %v3649, %v1892
      %s3654 = scalar_lea.vmem %s2, 144
      %v3655 = vld [vmem:[%s3654] sm:$0xff]
      %v3657 = vsel %vm2537, %v3655, 0
      %3659 = vmatpush.msra.mxu0 0.0
      %3660 = vmatpush.msra.mxu0 0.0
      %3661 = vmatpush.msra.mxu0 0.0
      %3662 = vmatpush.msra.mxu0 0.0
      %3663 = vmatpush.msra.mxu0 0.0
      %3664 = vmatpush.msra.mxu0 0.0
      %3665 = vmatpush.msra.mxu0 0.0
      %3666 = vmatpush.msra.mxu0 0.0
      %3667 = vmatpush.msra.mxu0 0.0
      %3668 = vmatpush.msra.mxu0 0.0
      %3669 = vmatpush.msra.mxu0 0.0
      %3670 = vmatpush.msra.mxu0 0.0
      %3671 = vmatpush.msra.mxu0 0.0
      %3672 = vmatpush.msra.mxu0 0.0
      %3673 = vmatpush.msra.mxu0 %v3652
      %3674 = vmatpush.msra.mxu0 %v3650
      %3675 = vmatmul.f32.gmra.mxu0 %v3657
      %v3676 = vpop.f32.mrf.mxu0
      %v3677 = vadd.f32 0.0, %v3676
      %3678 = vdwg.mxu0
      %3679 = vmatpush.msra.mxu0 0.0
      %3680 = vmatpush.msra.mxu0 0.0
      %3681 = vmatpush.msra.mxu0 0.0
      %3682 = vmatpush.msra.mxu0 0.0
      %3683 = vmatpush.msra.mxu0 0.0
      %3684 = vmatpush.msra.mxu0 0.0
      %3685 = vmatpush.msra.mxu0 0.0
      %3686 = vmatpush.msra.mxu0 0.0
      %3687 = vmatpush.msra.mxu0 0.0
      %3688 = vmatpush.msra.mxu0 0.0
      %3689 = vmatpush.msra.mxu0 0.0
      %3690 = vmatpush.msra.mxu0 0.0
      %3691 = vmatpush.msra.mxu0 0.0
      %3692 = vmatpush.msra.mxu0 0.0
      %3693 = vmatpush.msra.mxu0 %v3653
      %3694 = vmatpush.msra.mxu0 %v3651
      %3695 = vmatmul.f32.gmra.mxu0 %v3657
      %v3696 = vpop.f32.mrf.mxu0
      %v3697 = vadd.f32 0.0, %v3696
      %3698 = vdwg.mxu0
      %v3699 = vadd.f32 %v3636, %v3677
      %v3700 = vadd.f32 %v3637, %v3697
      %3701 = vrot.lane.b32.xlu0 %v2514, 110
      %v3702 = vpop.permute.xlu0 %3701
      %3703 = vrot.lane.b32.xlu0 %v2516, 110
      %v3704 = vpop.permute.xlu0 %3703
      %3705 = vrot.lane.b32.xlu0 %v2515, 110
      %v3706 = vpop.permute.xlu0 %3705
      %3707 = vrot.lane.b32.xlu0 %v2517, 110
      %v3708 = vpop.permute.xlu0 %3707
      %v3709 = vsel %vm1972, %v3702, %v3706
      %v3710 = vsel %vm1972, %v3704, %v3708
      %v3711 = vsel %vm1972, %v3706, %v3702
      %v3712 = vsel %vm1972, %v3708, %v3704
      %v3713 = vmul.f32 %v3709, %v1982
      %v3714 = vmul.f32 %v3711, %v1983
      %v3715 = vmul.f32 %v3710, %v1982
      %v3716 = vmul.f32 %v3712, %v1983
      %s3717 = scalar_lea.vmem %s2, 152
      %v3718 = vld [vmem:[%s3717] sm:$0xff]
      %v3720 = vsel %vm2537, %v3718, 0
      %3722 = vmatpush.msra.mxu0 0.0
      %3723 = vmatpush.msra.mxu0 0.0
      %3724 = vmatpush.msra.mxu0 0.0
      %3725 = vmatpush.msra.mxu0 0.0
      %3726 = vmatpush.msra.mxu0 0.0
      %3727 = vmatpush.msra.mxu0 0.0
      %3728 = vmatpush.msra.mxu0 0.0
      %3729 = vmatpush.msra.mxu0 0.0
      %3730 = vmatpush.msra.mxu0 0.0
      %3731 = vmatpush.msra.mxu0 0.0
      %3732 = vmatpush.msra.mxu0 0.0
      %3733 = vmatpush.msra.mxu0 0.0
      %3734 = vmatpush.msra.mxu0 0.0
      %3735 = vmatpush.msra.mxu0 0.0
      %3736 = vmatpush.msra.mxu0 %v3715
      %3737 = vmatpush.msra.mxu0 %v3713
      %3738 = vmatmul.f32.gmra.mxu0 %v3720
      %v3739 = vpop.f32.mrf.mxu0
      %v3740 = vadd.f32 0.0, %v3739
      %3741 = vdwg.mxu0
      %3742 = vmatpush.msra.mxu0 0.0
      %3743 = vmatpush.msra.mxu0 0.0
      %3744 = vmatpush.msra.mxu0 0.0
      %3745 = vmatpush.msra.mxu0 0.0
      %3746 = vmatpush.msra.mxu0 0.0
      %3747 = vmatpush.msra.mxu0 0.0
      %3748 = vmatpush.msra.mxu0 0.0
      %3749 = vmatpush.msra.mxu0 0.0
      %3750 = vmatpush.msra.mxu0 0.0
      %3751 = vmatpush.msra.mxu0 0.0
      %3752 = vmatpush.msra.mxu0 0.0
      %3753 = vmatpush.msra.mxu0 0.0
      %3754 = vmatpush.msra.mxu0 0.0
      %3755 = vmatpush.msra.mxu0 0.0
      %3756 = vmatpush.msra.mxu0 %v3716
      %3757 = vmatpush.msra.mxu0 %v3714
      %3758 = vmatmul.f32.gmra.mxu0 %v3720
      %v3759 = vpop.f32.mrf.mxu0
      %v3760 = vadd.f32 0.0, %v3759
      %3761 = vdwg.mxu0
      %v3762 = vadd.f32 %v3699, %v3740
      %v3763 = vadd.f32 %v3700, %v3760
      %3764 = vrot.lane.b32.xlu0 %v2514, 98
      %v3765 = vpop.permute.xlu0 %3764
      %3766 = vrot.lane.b32.xlu0 %v2516, 98
      %v3767 = vpop.permute.xlu0 %3766
      %3768 = vrot.lane.b32.xlu0 %v2515, 98
      %v3769 = vpop.permute.xlu0 %3768
      %3770 = vrot.lane.b32.xlu0 %v2517, 98
      %v3771 = vpop.permute.xlu0 %3770
      %v3772 = vsel %vm2063, %v3765, %v3769
      %v3773 = vsel %vm2063, %v3767, %v3771
      %v3774 = vsel %vm2063, %v3769, %v3765
      %v3775 = vsel %vm2063, %v3771, %v3767
      %v3776 = vmul.f32 %v3772, %v2073
      %v3777 = vmul.f32 %v3774, %v2074
      %v3778 = vmul.f32 %v3773, %v2073
      %v3779 = vmul.f32 %v3775, %v2074
      %s3780 = scalar_lea.vmem %s2, 160
      %v3781 = vld [vmem:[%s3780] sm:$0xff]
      %v3783 = vsel %vm2537, %v3781, 0
      %3785 = vmatpush.msra.mxu0 0.0
      %3786 = vmatpush.msra.mxu0 0.0
      %3787 = vmatpush.msra.mxu0 0.0
      %3788 = vmatpush.msra.mxu0 0.0
      %3789 = vmatpush.msra.mxu0 0.0
      %3790 = vmatpush.msra.mxu0 0.0
      %3791 = vmatpush.msra.mxu0 0.0
      %3792 = vmatpush.msra.mxu0 0.0
      %3793 = vmatpush.msra.mxu0 0.0
      %3794 = vmatpush.msra.mxu0 0.0
      %3795 = vmatpush.msra.mxu0 0.0
      %3796 = vmatpush.msra.mxu0 0.0
      %3797 = vmatpush.msra.mxu0 0.0
      %3798 = vmatpush.msra.mxu0 0.0
      %3799 = vmatpush.msra.mxu0 %v3778
      %3800 = vmatpush.msra.mxu0 %v3776
      %3801 = vmatmul.f32.gmra.mxu0 %v3783
      %v3802 = vpop.f32.mrf.mxu0
      %v3803 = vadd.f32 0.0, %v3802
      %3804 = vdwg.mxu0
      %3805 = vmatpush.msra.mxu0 0.0
      %3806 = vmatpush.msra.mxu0 0.0
      %3807 = vmatpush.msra.mxu0 0.0
      %3808 = vmatpush.msra.mxu0 0.0
      %3809 = vmatpush.msra.mxu0 0.0
      %3810 = vmatpush.msra.mxu0 0.0
      %3811 = vmatpush.msra.mxu0 0.0
      %3812 = vmatpush.msra.mxu0 0.0
      %3813 = vmatpush.msra.mxu0 0.0
      %3814 = vmatpush.msra.mxu0 0.0
      %3815 = vmatpush.msra.mxu0 0.0
      %3816 = vmatpush.msra.mxu0 0.0
      %3817 = vmatpush.msra.mxu0 0.0
      %3818 = vmatpush.msra.mxu0 0.0
      %3819 = vmatpush.msra.mxu0 %v3779
      %3820 = vmatpush.msra.mxu0 %v3777
      %3821 = vmatmul.f32.gmra.mxu0 %v3783
      %v3822 = vpop.f32.mrf.mxu0
      %v3823 = vadd.f32 0.0, %v3822
      %3824 = vdwg.mxu0
      %v3825 = vadd.f32 %v3762, %v3803
      %v3826 = vadd.f32 %v3763, %v3823
      %3827 = vrot.lane.b32.xlu0 %v2514, 97
      %v3828 = vpop.permute.xlu0 %3827
      %3829 = vrot.lane.b32.xlu0 %v2516, 97
      %v3830 = vpop.permute.xlu0 %3829
      %3831 = vrot.lane.b32.xlu0 %v2515, 97
      %v3832 = vpop.permute.xlu0 %3831
      %3833 = vrot.lane.b32.xlu0 %v2517, 97
      %v3834 = vpop.permute.xlu0 %3833
      %v3835 = vsel %vm2154, %v3828, %v3832
      %v3836 = vsel %vm2154, %v3830, %v3834
      %v3837 = vsel %vm2154, %v3832, %v3828
      %v3838 = vsel %vm2154, %v3834, %v3830
      %v3839 = vmul.f32 %v3835, %v2164
      %v3840 = vmul.f32 %v3837, %v2165
      %v3841 = vmul.f32 %v3836, %v2164
      %v3842 = vmul.f32 %v3838, %v2165
      %s3843 = scalar_lea.vmem %s2, 168
      %v3844 = vld [vmem:[%s3843] sm:$0xff]
      %v3846 = vsel %vm2537, %v3844, 0
      %3848 = vmatpush.msra.mxu0 0.0
      %3849 = vmatpush.msra.mxu0 0.0
      %3850 = vmatpush.msra.mxu0 0.0
      %3851 = vmatpush.msra.mxu0 0.0
      %3852 = vmatpush.msra.mxu0 0.0
      %3853 = vmatpush.msra.mxu0 0.0
      %3854 = vmatpush.msra.mxu0 0.0
      %3855 = vmatpush.msra.mxu0 0.0
      %3856 = vmatpush.msra.mxu0 0.0
      %3857 = vmatpush.msra.mxu0 0.0
      %3858 = vmatpush.msra.mxu0 0.0
      %3859 = vmatpush.msra.mxu0 0.0
      %3860 = vmatpush.msra.mxu0 0.0
      %3861 = vmatpush.msra.mxu0 0.0
      %3862 = vmatpush.msra.mxu0 %v3841
      %3863 = vmatpush.msra.mxu0 %v3839
      %3864 = vmatmul.f32.gmra.mxu0 %v3846
      %v3865 = vpop.f32.mrf.mxu0
      %v3866 = vadd.f32 0.0, %v3865
      %3867 = vdwg.mxu0
      %3868 = vmatpush.msra.mxu0 0.0
      %3869 = vmatpush.msra.mxu0 0.0
      %3870 = vmatpush.msra.mxu0 0.0
      %3871 = vmatpush.msra.mxu0 0.0
      %3872 = vmatpush.msra.mxu0 0.0
      %3873 = vmatpush.msra.mxu0 0.0
      %3874 = vmatpush.msra.mxu0 0.0
      %3875 = vmatpush.msra.mxu0 0.0
      %3876 = vmatpush.msra.mxu0 0.0
      %3877 = vmatpush.msra.mxu0 0.0
      %3878 = vmatpush.msra.mxu0 0.0
      %3879 = vmatpush.msra.mxu0 0.0
      %3880 = vmatpush.msra.mxu0 0.0
      %3881 = vmatpush.msra.mxu0 0.0
      %3882 = vmatpush.msra.mxu0 %v3842
      %3883 = vmatpush.msra.mxu0 %v3840
      %3884 = vmatmul.f32.gmra.mxu0 %v3846
      %v3885 = vpop.f32.mrf.mxu0
      %v3886 = vadd.f32 0.0, %v3885
      %3887 = vdwg.mxu0
      %v3888 = vadd.f32 %v3825, %v3866
      %v3889 = vadd.f32 %v3826, %v3886
      %3890 = vrot.lane.b32.xlu0 %v2514, 96
      %v3891 = vpop.permute.xlu0 %3890
      %3892 = vrot.lane.b32.xlu0 %v2516, 96
      %v3893 = vpop.permute.xlu0 %3892
      %3894 = vrot.lane.b32.xlu0 %v2515, 96
      %v3895 = vpop.permute.xlu0 %3894
      %3896 = vrot.lane.b32.xlu0 %v2517, 96
      %v3897 = vpop.permute.xlu0 %3896
      %v3898 = vsel %vm2245, %v3891, %v3895
      %v3899 = vsel %vm2245, %v3893, %v3897
      %v3900 = vsel %vm2245, %v3895, %v3891
      %v3901 = vsel %vm2245, %v3897, %v3893
      %v3902 = vmul.f32 %v3898, %v2255
      %v3903 = vmul.f32 %v3900, %v2256
      %v3904 = vmul.f32 %v3899, %v2255
      %v3905 = vmul.f32 %v3901, %v2256
      %s3906 = scalar_lea.vmem %s2, 176
      %v3907 = vld [vmem:[%s3906] sm:$0xff]
      %v3909 = vsel %vm2537, %v3907, 0
      %3911 = vmatpush.msra.mxu0 0.0
      %3912 = vmatpush.msra.mxu0 0.0
      %3913 = vmatpush.msra.mxu0 0.0
      %3914 = vmatpush.msra.mxu0 0.0
      %3915 = vmatpush.msra.mxu0 0.0
      %3916 = vmatpush.msra.mxu0 0.0
      %3917 = vmatpush.msra.mxu0 0.0
      %3918 = vmatpush.msra.mxu0 0.0
      %3919 = vmatpush.msra.mxu0 0.0
      %3920 = vmatpush.msra.mxu0 0.0
      %3921 = vmatpush.msra.mxu0 0.0
      %3922 = vmatpush.msra.mxu0 0.0
      %3923 = vmatpush.msra.mxu0 0.0
      %3924 = vmatpush.msra.mxu0 0.0
      %3925 = vmatpush.msra.mxu0 %v3904
      %3926 = vmatpush.msra.mxu0 %v3902
      %3927 = vmatmul.f32.gmra.mxu0 %v3909
      %v3928 = vpop.f32.mrf.mxu0
      %v3929 = vadd.f32 0.0, %v3928
      %3930 = vdwg.mxu0
      %3931 = vmatpush.msra.mxu0 0.0
      %3932 = vmatpush.msra.mxu0 0.0
      %3933 = vmatpush.msra.mxu0 0.0
      %3934 = vmatpush.msra.mxu0 0.0
      %3935 = vmatpush.msra.mxu0 0.0
      %3936 = vmatpush.msra.mxu0 0.0
      %3937 = vmatpush.msra.mxu0 0.0
      %3938 = vmatpush.msra.mxu0 0.0
      %3939 = vmatpush.msra.mxu0 0.0
      %3940 = vmatpush.msra.mxu0 0.0
      %3941 = vmatpush.msra.mxu0 0.0
      %3942 = vmatpush.msra.mxu0 0.0
      %3943 = vmatpush.msra.mxu0 0.0
      %3944 = vmatpush.msra.mxu0 0.0
      %3945 = vmatpush.msra.mxu0 %v3905
      %3946 = vmatpush.msra.mxu0 %v3903
      %3947 = vmatmul.f32.gmra.mxu0 %v3909
      %v3948 = vpop.f32.mrf.mxu0
      %v3949 = vadd.f32 0.0, %v3948
      %3950 = vdwg.mxu0
      %v3951 = vadd.f32 %v3888, %v3929
      %v3952 = vadd.f32 %v3889, %v3949
      %3953 = vrot.lane.b32.xlu0 %v2514, 95
      %v3954 = vpop.permute.xlu0 %3953
      %3955 = vrot.lane.b32.xlu0 %v2516, 95
      %v3956 = vpop.permute.xlu0 %3955
      %3957 = vrot.lane.b32.xlu0 %v2515, 95
      %v3958 = vpop.permute.xlu0 %3957
      %3959 = vrot.lane.b32.xlu0 %v2517, 95
      %v3960 = vpop.permute.xlu0 %3959
      %v3961 = vsel %vm2336, %v3954, %v3958
      %v3962 = vsel %vm2336, %v3956, %v3960
      %v3963 = vsel %vm2336, %v3958, %v3954
      %v3964 = vsel %vm2336, %v3960, %v3956
      %v3965 = vmul.f32 %v3961, %v2346
      %v3966 = vmul.f32 %v3963, %v2347
      %v3967 = vmul.f32 %v3962, %v2346
      %v3968 = vmul.f32 %v3964, %v2347
      %s3969 = scalar_lea.vmem %s2, 184
      %v3970 = vld [vmem:[%s3969] sm:$0xff]
      %v3972 = vsel %vm2537, %v3970, 0
      %3974 = vmatpush.msra.mxu0 0.0
      %3975 = vmatpush.msra.mxu0 0.0
      %3976 = vmatpush.msra.mxu0 0.0
      %3977 = vmatpush.msra.mxu0 0.0
      %3978 = vmatpush.msra.mxu0 0.0
      %3979 = vmatpush.msra.mxu0 0.0
      %3980 = vmatpush.msra.mxu0 0.0
      %3981 = vmatpush.msra.mxu0 0.0
      %3982 = vmatpush.msra.mxu0 0.0
      %3983 = vmatpush.msra.mxu0 0.0
      %3984 = vmatpush.msra.mxu0 0.0
      %3985 = vmatpush.msra.mxu0 0.0
      %3986 = vmatpush.msra.mxu0 0.0
      %3987 = vmatpush.msra.mxu0 0.0
      %3988 = vmatpush.msra.mxu0 %v3967
      %3989 = vmatpush.msra.mxu0 %v3965
      %3990 = vmatmul.f32.gmra.mxu0 %v3972
      %v3991 = vpop.f32.mrf.mxu0
      %v3992 = vadd.f32 0.0, %v3991
      %3993 = vdwg.mxu0
      %3994 = vmatpush.msra.mxu0 0.0
      %3995 = vmatpush.msra.mxu0 0.0
      %3996 = vmatpush.msra.mxu0 0.0
      %3997 = vmatpush.msra.mxu0 0.0
      %3998 = vmatpush.msra.mxu0 0.0
      %3999 = vmatpush.msra.mxu0 0.0
      %4000 = vmatpush.msra.mxu0 0.0
      %4001 = vmatpush.msra.mxu0 0.0
      %4002 = vmatpush.msra.mxu0 0.0
      %4003 = vmatpush.msra.mxu0 0.0
      %4004 = vmatpush.msra.mxu0 0.0
      %4005 = vmatpush.msra.mxu0 0.0
      %4006 = vmatpush.msra.mxu0 0.0
      %4007 = vmatpush.msra.mxu0 0.0
      %4008 = vmatpush.msra.mxu0 %v3968
      %4009 = vmatpush.msra.mxu0 %v3966
      %4010 = vmatmul.f32.gmra.mxu0 %v3972
      %v4011 = vpop.f32.mrf.mxu0
      %v4012 = vadd.f32 0.0, %v4011
      %4013 = vdwg.mxu0
      %v4014 = vadd.f32 %v3951, %v3992
      %v4015 = vadd.f32 %v3952, %v4012
      %4016 = vrot.lane.b32.xlu0 %v2514, 94
      %v4017 = vpop.permute.xlu0 %4016
      %4018 = vrot.lane.b32.xlu0 %v2516, 94
      %v4019 = vpop.permute.xlu0 %4018
      %4020 = vrot.lane.b32.xlu0 %v2515, 94
      %v4021 = vpop.permute.xlu0 %4020
      %4022 = vrot.lane.b32.xlu0 %v2517, 94
      %v4023 = vpop.permute.xlu0 %4022
      %v4024 = vsel %vm2427, %v4017, %v4021
      %v4025 = vsel %vm2427, %v4019, %v4023
      %v4026 = vsel %vm2427, %v4021, %v4017
      %v4027 = vsel %vm2427, %v4023, %v4019
      %v4028 = vmul.f32 %v4024, %v2437
      %v4029 = vmul.f32 %v4026, %v2438
      %v4030 = vmul.f32 %v4025, %v2437
      %v4031 = vmul.f32 %v4027, %v2438
      %s4032 = scalar_lea.vmem %s2, 192
      %v4033 = vld [vmem:[%s4032] sm:$0xff]
      %v4035 = vsel %vm2537, %v4033, 0
      %4037 = vmatpush.msra.mxu0 0.0
      %4038 = vmatpush.msra.mxu0 0.0
      %4039 = vmatpush.msra.mxu0 0.0
      %4040 = vmatpush.msra.mxu0 0.0
      %4041 = vmatpush.msra.mxu0 0.0
      %4042 = vmatpush.msra.mxu0 0.0
      %4043 = vmatpush.msra.mxu0 0.0
      %4044 = vmatpush.msra.mxu0 0.0
      %4045 = vmatpush.msra.mxu0 0.0
      %4046 = vmatpush.msra.mxu0 0.0
      %4047 = vmatpush.msra.mxu0 0.0
      %4048 = vmatpush.msra.mxu0 0.0
      %4049 = vmatpush.msra.mxu0 0.0
      %4050 = vmatpush.msra.mxu0 0.0
      %4051 = vmatpush.msra.mxu0 %v4030
      %4052 = vmatpush.msra.mxu0 %v4028
      %4053 = vmatmul.f32.gmra.mxu0 %v4035
      %v4054 = vpop.f32.mrf.mxu0
      %v4055 = vadd.f32 0.0, %v4054
      %4056 = vdwg.mxu0
      %4057 = vmatpush.msra.mxu0 0.0
      %4058 = vmatpush.msra.mxu0 0.0
      %4059 = vmatpush.msra.mxu0 0.0
      %4060 = vmatpush.msra.mxu0 0.0
      %4061 = vmatpush.msra.mxu0 0.0
      %4062 = vmatpush.msra.mxu0 0.0
      %4063 = vmatpush.msra.mxu0 0.0
      %4064 = vmatpush.msra.mxu0 0.0
      %4065 = vmatpush.msra.mxu0 0.0
      %4066 = vmatpush.msra.mxu0 0.0
      %4067 = vmatpush.msra.mxu0 0.0
      %4068 = vmatpush.msra.mxu0 0.0
      %4069 = vmatpush.msra.mxu0 0.0
      %4070 = vmatpush.msra.mxu0 0.0
      %4071 = vmatpush.msra.mxu0 %v4031
      %4072 = vmatpush.msra.mxu0 %v4029
      %4073 = vmatmul.f32.gmra.mxu0 %v4035
      %v4074 = vpop.f32.mrf.mxu0
      %v4075 = vadd.f32 0.0, %v4074
      %4076 = vdwg.mxu0
      %v4077 = vadd.f32 %v4014, %v4055
      %v4078 = vadd.f32 %v4015, %v4075
      %4079 = vst [vmem:[%s251] sm:$0x3f] %v4077
      %4080 = vst [vmem:[%s251 + $0x8] sm:$0x3f] %v4078
      %p4081 = scmp.lt.s32.totalorder %s17, 1
      %s4082 = scalar_select %p4081, %s17, 1
      %s4083 = smul.addr %s4082, 2
      %s4084 = smul.addr %s4083, 8
      %s4085 = scalar_lea.vmem %s6, %s4084
      // Predicated region
      $region45: #{tpu_custom_call.1} parent=43 // pred_check
        %p4086 = pneg %p166
      $region46: #{tpu_custom_call.1} parent=43 // pred_check_branch
        %4088 = sbr.rel (%p4086) target = $region48
      $region47: #{tpu_custom_call.1} parent=43 // pred_region
        _
      $region48: #{tpu_custom_call.1} parent=43 // pred_fallthru
        _
    $region44: #{tpu_custom_call.1} parent=5 // pred_fallthru
      _
    %p4089 = scmp.le.s32.totalorder 2, %s12
    // Predicated region
    $region49: #{tpu_custom_call.1} parent=5 // pred_check
      %p4090 = pneg %p4089
    $region50: #{tpu_custom_call.1} parent=5 // pred_check_branch
      %4092 = sbr.rel (%p4090) target = $region52
    $region51: #{tpu_custom_call.1} parent=5 // pred_region
      %s4093 = ssub.s32 %s12, 2
      // Predicated region
      $region53: #{tpu_custom_call.1} parent=51 // pred_check
        %p4094 = pneg %p172
      $region54: #{tpu_custom_call.1} parent=51 // pred_check_branch
        %4096 = sbr.rel (%p4094) target = $region56
      $region55: #{tpu_custom_call.1} parent=51 // pred_region
        %p4097 = scmp.lt.s32.totalorder %s18, 1
        %s4098 = scalar_select %p4097, %s18, 1
        %s4099 = smul.addr %s4098, 2
        %s4100 = smul.addr %s4099, 8
        %s4101 = scalar_lea.vmem %s6, %s4100
      $region56: #{tpu_custom_call.1} parent=51 // pred_fallthru
        _
    $region52: #{tpu_custom_call.1} parent=5 // pred_fallthru
      _
  $region6: #{tpu_custom_call.1} parent=0 // loop_footer
    %s16 = sadd.s32 1, %s12
  $region7: #{tpu_custom_call.1} parent=0 // loop_footer_branch
    %11 = sbr.rel target = $region3
  $region8: #{tpu_custom_call.1} parent=0 // loop_exit
    _

</llo_original>
